<compile_context>
chip_gen: v7x
topology: tpu7x:2x2x1
jax: 0.10.0
libtpu: 0.0.40
codegen_flags: <defaults>
</compile_context>

<pallas_src>
import functools

import jax
import jax.numpy as jnp
from jax.experimental import pallas as pl
from jax.experimental.pallas import tpu as pltpu

NUM_LAYERS = 7
_HIDDEN = (1024, 768, 512, 512, 128, 64)
_LANE = 128
_SUBLANE = 8
_MAX_BATCH_TILE = 512   # max rows per batch tile
_SPLIT_ROWS = 256       # past this, force >=2 grid steps (v7x megacore)
_VMEM_LIMIT_BYTES = 48 * 1024 * 1024   # > v5e/v7x scoped defaults, < physical


def _round_up(x, m):
    return ((x + m - 1) // m) * m


def _cdiv(a, b):
    return (a + b - 1) // b


# ---------------------------------------------------------------------------
# Probe: does pipeline_mode=pl.Buffered(1) exist & lower on this install?
# ---------------------------------------------------------------------------
def _probe_buffered_one():
    try:
        mode = pl.Buffered(1)

        def _probe_kernel(x_ref, o_ref):
            o_ref[...] = x_ref[...] + 1.0

        f = pl.pallas_call(
            _probe_kernel,
            out_shape=jax.ShapeDtypeStruct((16, 128), jnp.float32),
            grid=(2,),
            in_specs=[pl.BlockSpec((8, 128), lambda i: (0, 0),
                                   pipeline_mode=mode)],
            out_specs=pl.BlockSpec((8, 128), lambda i: (i, 0)),
        )
        jax.block_until_ready(f(jnp.zeros((8, 128), jnp.float32)))
        return True
    except Exception:
        return False


_RESIDENT_KW = (
    {"pipeline_mode": pl.Buffered(1)} if _probe_buffered_one() else {}
)


# ---------------------------------------------------------------------------
# Fused kernel: x -> [Linear + PReLU (+Dropout=id)] x 6 -> Linear
# ---------------------------------------------------------------------------
def _mlp_fused_kernel(*refs):
    # refs = (x, w0, b0, w1, b1, ..., w6, b6, slopes, out)
    x_ref = refs[0]
    slopes_ref = refs[1 + 2 * NUM_LAYERS]          # (6,) f32 in SMEM
    o_ref = refs[2 + 2 * NUM_LAYERS]               # (B_tile, 128) f32

    h = x_ref[...]                                 # already bf16 from wrapper
    for i in range(NUM_LAYERS):                    # unrolled at trace time
        w_ref = refs[1 + 2 * i]                    # (K_pad, N_pad) bf16
        b_ref = refs[2 + 2 * i]                    # (1, N_pad)     f32
        y = jnp.dot(h, w_ref[...], preferred_element_type=jnp.float32)
        y = y + b_ref[...]                         # bias add in f32
        if i < NUM_LAYERS - 1:
            a = slopes_ref[i]                      # scalar PReLU slope (SMEM)
            y = jnp.where(y >= 0.0, y, a * y)
            # Dropout == identity at inference.
            h = y.astype(jnp.bfloat16)
        else:
            o_ref[...] = y                         # final Linear, f32, lane-dense


# ---------------------------------------------------------------------------
# Wrapper
# ---------------------------------------------------------------------------
def _flatten(weights, biases):
    flat = []
    for w, b in zip(weights, biases):
        flat.extend((w, b))
    return flat


@functools.partial(jax.jit, static_argnames=("out_features",))
def mlp_forward(x, weights, biases, slopes, *, out_features):
    B, D = x.shape
    d_in_pad = weights[0].shape[0]
    d_out_pad = weights[-1].shape[1]

    b_pad = _round_up(max(B, 1), _SUBLANE)
    if b_pad <= _SPLIT_ROWS:
        b_tile = b_pad                              # single tile, grid=1
    else:
        # >=2 grid steps so "parallel" actually shards across v7x's two TCs;
        # capped at _MAX_BATCH_TILE rows per tile.
        b_tile = min(_MAX_BATCH_TILE, _round_up(_cdiv(b_pad, 2), _SUBLANE))
    grid = _cdiv(b_pad, b_tile)

    # Zero-pad batch (sublanes) + input features (lanes); carry x in bf16.
    x_pad = jnp.zeros((b_pad, d_in_pad), jnp.bfloat16)
    x_pad = x_pad.at[:B, :D].set(x.astype(jnp.bfloat16))

    in_specs = [pl.BlockSpec((b_tile, d_in_pad), lambda i: (i, 0))]
    for w, b in zip(weights, biases):
        # Constant block index -> weights/biases stay VMEM-resident across
        # batch tiles; single-buffered (no useless second buffer) if supported.
        in_specs.append(pl.BlockSpec(w.shape, lambda i: (0, 0), **_RESIDENT_KW))
        in_specs.append(pl.BlockSpec(b.shape, lambda i: (0, 0), **_RESIDENT_KW))
    in_specs.append(pl.BlockSpec(memory_space=pltpu.MemorySpace.SMEM))  # slopes

    out_pad = pl.pallas_call(
        _mlp_fused_kernel,
        out_shape=jax.ShapeDtypeStruct((b_pad, d_out_pad), jnp.float32),
        grid=(grid,),
        in_specs=in_specs,
        out_specs=pl.BlockSpec((b_tile, d_out_pad), lambda i: (i, 0)),
        compiler_params=pltpu.CompilerParams(
            dimension_semantics=("parallel",),      # megacore sharding on v7x
            vmem_limit_bytes=_VMEM_LIMIT_BYTES),
    )(x_pad, *_flatten(weights, biases), slopes)

    return out_pad[:B, :out_features]


# ---------------------------------------------------------------------------
# Parameter construction (mirrors nn.Linear default init, PReLU slope 0.25),
# padded to 128-lane multiples; weights stored bf16 as (in, out).
# ---------------------------------------------------------------------------
def make_mlp_params(key, input_size, output_size):
    dims = [input_size, *_HIDDEN, output_size]
    pdims = [_round_up(d, _LANE) for d in dims]
    weights, biases, slopes = [], [], []
    for i in range(NUM_LAYERS):
        fan_in, fan_out = dims[i], dims[i + 1]
        key, kw, kb = jax.random.split(key, 3)
        bound = 1.0 / (fan_in ** 0.5)
        w = jax.random.uniform(kw, (fan_in, fan_out), jnp.float32, -bound, bound)
        b = jax.random.uniform(kb, (fan_out,), jnp.float32, -bound, bound)
        w_pad = jnp.zeros((pdims[i], pdims[i + 1]), jnp.float32)
        w_pad = w_pad.at[:fan_in, :fan_out].set(w)
        b_pad = jnp.zeros((1, pdims[i + 1]), jnp.float32).at[0, :fan_out].set(b)
        weights.append(w_pad.astype(jnp.bfloat16))
        biases.append(b_pad)                        # bias kept in f32
        if i < NUM_LAYERS - 1:
            slopes.append(0.25)                     # PReLU default slope
    return weights, biases, jnp.asarray(slopes, jnp.float32)


# Pure-JAX reference with identical numerics (bf16 inputs, f32 accumulate).
def mlp_reference(x, weights, biases, slopes, out_features):
    B, D = x.shape
    d_in_pad = weights[0].shape[0]
    h = jnp.zeros((B, d_in_pad), jnp.float32).at[:, :D].set(x).astype(jnp.bfloat16)
    y = None
    for i in range(NUM_LAYERS):
        y = jnp.dot(h, weights[i], preferred_element_type=jnp.float32) + biases[i]
        if i < NUM_LAYERS - 1:
            y = jnp.where(y >= 0.0, y, slopes[i] * y)
            h = y.astype(jnp.bfloat16)
    return y[:, :out_features]


# ---------------------------------------------------------------------------
if __name__ == "__main__":
    input_size = 32
    output_size = 10

    key = jax.random.PRNGKey(0)
    key, kx_small, kx_big = jax.random.split(key, 3)
    weights, biases, slopes = make_mlp_params(key, input_size, output_size)

    # --- Small serving-style batch: single (8,128) tile, grid=1 ------------
    x_small = jax.random.normal(kx_small, (4, input_size), jnp.float32)
    out_small = jax.block_until_ready(
        mlp_forward(x_small, weights, biases, slopes, out_features=output_size))
    assert out_small.shape == (4, output_size), out_small.shape
    assert out_small.dtype == jnp.float32
    assert bool(jnp.all(jnp.isfinite(out_small)))
    ref_small = mlp_reference(x_small, weights, biases, slopes, output_size)
    assert bool(jnp.allclose(out_small, ref_small, rtol=2e-2, atol=2e-2)), (
        float(jnp.max(jnp.abs(out_small - ref_small))))

    # --- Larger batch: exercises the cdiv multi-tile grid (grid=2, clamped
    # last block) and v7x megacore sharding --------------------------------
    x_big = jax.random.normal(kx_big, (517, input_size), jnp.float32)
    out_big = jax.block_until_ready(
        mlp_forward(x_big, weights, biases, slopes, out_features=output_size))
    assert out_big.shape == (517, output_size), out_big.shape
    assert bool(jnp.all(jnp.isfinite(out_big)))
    ref_big = mlp_reference(x_big, weights, biases, slopes, output_size)
    assert bool(jnp.allclose(out_big, ref_big, rtol=2e-2, atol=2e-2)), (
        float(jnp.max(jnp.abs(out_big - ref_big))))

    print("KERNEL_OK")
</pallas_src>

<mosaic_0001>
module attributes {stable_mosaic.version = 11 : i64} {
  func.func @_probe_kernel(%arg0: i32, %arg1: memref<8x128xf32, #tpu.memory_space<vmem>>, %arg2: memref<8x128xf32, #tpu.memory_space<vmem>>) attributes {dimension_semantics = [#tpu.dimension_semantics<arbitrary>], iteration_bounds = array<i64: 2>, scalar_prefetch = 0 : i64, scratch_operands = 0 : i64, tpu.core_type = #tpu.core_type<tc>, window_params = [{pipeline_mode = #tpu.pipeline_mode<synchronous>, transform_indices = @transform_0, window_bounds = array<i64: 8, 128>}, {transform_indices = @transform_1, window_bounds = array<i64: 8, 128>}]} {
    %c0 = arith.constant 0 : index
    %c0_0 = arith.constant 0 : index
    %0 = vector.load %arg1[%c0, %c0_0] : memref<8x128xf32, #tpu.memory_space<vmem>>, vector<8x128xf32>
    %cst = arith.constant 1.000000e+00 : f32
    %1 = vector.broadcast %cst : f32 to vector<8x128xf32>
    %2 = arith.addf %0, %1 : vector<8x128xf32>
    %c0_1 = arith.constant 0 : index
    %c0_2 = arith.constant 0 : index
    %3 = vector.load %arg2[%c0_1, %c0_2] : memref<8x128xf32, #tpu.memory_space<vmem>>, vector<8x128xf32>
    tpu.vector_store %arg2[%c0_1, %c0_2], %2 {strides = array<i32>} : memref<8x128xf32, #tpu.memory_space<vmem>>, vector<8x128xf32>,
    return
  }
  func.func @transform_0(%arg0: i32) -> (i32, i32) {
    %c0_i32 = arith.constant 0 : i32
    %c0_i32_0 = arith.constant 0 : i32
    %c0_i32_1 = arith.constant 0 : i32
    return %c0_i32, %c0_i32_0 : i32, i32
  }
  func.func @transform_1(%arg0: i32) -> (i32, i32) {
    %c0_i32 = arith.constant 0 : i32
    %c0_i32_0 = arith.constant 0 : i32
    return %arg0, %c0_i32 : i32, i32
  }
}

module attributes {stable_mosaic.version = 11 : i64} {
  func.func @_mlp_fused_kernel(%arg0: i32, %arg1: memref<8x128xbf16, #tpu.memory_space<vmem>>, %arg2: memref<128x1024xbf16, #tpu.memory_space<vmem>>, %arg3: memref<1x1024xf32, #tpu.memory_space<vmem>>, %arg4: memref<1024x768xbf16, #tpu.memory_space<vmem>>, %arg5: memref<1x768xf32, #tpu.memory_space<vmem>>, %arg6: memref<768x512xbf16, #tpu.memory_space<vmem>>, %arg7: memref<1x512xf32, #tpu.memory_space<vmem>>, %arg8: memref<512x512xbf16, #tpu.memory_space<vmem>>, %arg9: memref<1x512xf32, #tpu.memory_space<vmem>>, %arg10: memref<512x128xbf16, #tpu.memory_space<vmem>>, %arg11: memref<1x128xf32, #tpu.memory_space<vmem>>, %arg12: memref<128x128xbf16, #tpu.memory_space<vmem>>, %arg13: memref<1x128xf32, #tpu.memory_space<vmem>>, %arg14: memref<128x128xbf16, #tpu.memory_space<vmem>>, %arg15: memref<1x128xf32, #tpu.memory_space<vmem>>, %arg16: memref<6xf32, #tpu.memory_space<smem>>, %arg17: memref<8x128xf32, #tpu.memory_space<vmem>>) attributes {dimension_semantics = [#tpu.dimension_semantics<parallel>], iteration_bounds = array<i64: 1>, scalar_prefetch = 0 : i64, scratch_operands = 0 : i64, tpu.core_type = #tpu.core_type<tc>, window_params = [{transform_indices = @transform_0, window_bounds = array<i64: 8, 128>}, {pipeline_mode = #tpu.pipeline_mode<synchronous>, transform_indices = @transform_1, window_bounds = array<i64: 128, 1024>}, {pipeline_mode = #tpu.pipeline_mode<synchronous>, transform_indices = @transform_2, window_bounds = array<i64: 1, 1024>}, {pipeline_mode = #tpu.pipeline_mode<synchronous>, transform_indices = @transform_3, window_bounds = array<i64: 1024, 768>}, {pipeline_mode = #tpu.pipeline_mode<synchronous>, transform_indices = @transform_4, window_bounds = array<i64: 1, 768>}, {pipeline_mode = #tpu.pipeline_mode<synchronous>, transform_indices = @transform_5, window_bounds = array<i64: 768, 512>}, {pipeline_mode = #tpu.pipeline_mode<synchronous>, transform_indices = @transform_6, window_bounds = array<i64: 1, 512>}, {pipeline_mode = #tpu.pipeline_mode<synchronous>, transform_indices = @transform_7, window_bounds = array<i64: 512, 512>}, {pipeline_mode = #tpu.pipeline_mode<synchronous>, transform_indices = @transform_8, window_bounds = array<i64: 1, 512>}, {pipeline_mode = #tpu.pipeline_mode<synchronous>, transform_indices = @transform_9, window_bounds = array<i64: 512, 128>}, {pipeline_mode = #tpu.pipeline_mode<synchronous>, transform_indices = @transform_10, window_bounds = array<i64: 1, 128>}, {pipeline_mode = #tpu.pipeline_mode<synchronous>, transform_indices = @transform_11, window_bounds = array<i64: 128, 128>}, {pipeline_mode = #tpu.pipeline_mode<synchronous>, transform_indices = @transform_12, window_bounds = array<i64: 1, 128>}, {pipeline_mode = #tpu.pipeline_mode<synchronous>, transform_indices = @transform_13, window_bounds = array<i64: 128, 128>}, {pipeline_mode = #tpu.pipeline_mode<synchronous>, transform_indices = @transform_14, window_bounds = array<i64: 1, 128>}, {transform_indices = @transform_15, window_bounds = array<i64: 6>}, {transform_indices = @transform_16, window_bounds = array<i64: 8, 128>}]} {
    %c0 = arith.constant 0 : index
    %c0_0 = arith.constant 0 : index
    %0 = vector.load %arg1[%c0, %c0_0] : memref<8x128xbf16, #tpu.memory_space<vmem>>, vector<8x128xbf16>
    %c0_1 = arith.constant 0 : index
    %c0_2 = arith.constant 0 : index
    %1 = vector.load %arg2[%c0_1, %c0_2] : memref<128x1024xbf16, #tpu.memory_space<vmem>>, vector<128x1024xbf16>
    %cst = arith.constant dense<0.000000e+00> : vector<8x1024xf32>
    %2 = tpu.matmul %0, %1, %cst {dimension_numbers = #tpu.dot_dimension_numbers<[1], [0], [0], [1], [0, 0, 1, 1], [], []>} : vector<8x128xbf16>, vector<128x1024xbf16>, vector<8x1024xf32> -> vector<8x1024xf32>
    %c0_3 = arith.constant 0 : index
    %c0_4 = arith.constant 0 : index
    %3 = vector.load %arg3[%c0_3, %c0_4] : memref<1x1024xf32, #tpu.memory_space<vmem>>, vector<1x1024xf32>
    %4 = vector.broadcast %3 : vector<1x1024xf32> to vector<8x1024xf32>
    %5 = arith.addf %2, %4 : vector<8x1024xf32>
    %c0_5 = arith.constant 0 : index
    %6 = memref.load %arg16[%c0_5] : memref<6xf32, #tpu.memory_space<smem>>
    %cst_6 = arith.constant 0.000000e+00 : f32
    %7 = vector.broadcast %cst_6 : f32 to vector<8x1024xf32>
    %8 = arith.cmpf oge, %5, %7 : vector<8x1024xf32>
    %9 = vector.broadcast %6 : f32 to vector<8x1024xf32>
    %10 = arith.mulf %9, %5 : vector<8x1024xf32>
    %11 = arith.select %8, %5, %10 : vector<8x1024xi1>, vector<8x1024xf32>
    %12 = arith.truncf %11 : vector<8x1024xf32> to vector<8x1024xbf16>
    %c0_7 = arith.constant 0 : index
    %c0_8 = arith.constant 0 : index
    %13 = vector.load %arg4[%c0_7, %c0_8] : memref<1024x768xbf16, #tpu.memory_space<vmem>>, vector<1024x768xbf16>
    %cst_9 = arith.constant dense<0.000000e+00> : vector<8x768xf32>
    %14 = tpu.matmul %12, %13, %cst_9 {dimension_numbers = #tpu.dot_dimension_numbers<[1], [0], [0], [1], [0, 0, 1, 1], [], []>} : vector<8x1024xbf16>, vector<1024x768xbf16>, vector<8x768xf32> -> vector<8x768xf32>
    %c0_10 = arith.constant 0 : index
    %c0_11 = arith.constant 0 : index
    %15 = vector.load %arg5[%c0_10, %c0_11] : memref<1x768xf32, #tpu.memory_space<vmem>>, vector<1x768xf32>
    %16 = vector.broadcast %15 : vector<1x768xf32> to vector<8x768xf32>
    %17 = arith.addf %14, %16 : vector<8x768xf32>
    %c1 = arith.constant 1 : index
    %18 = memref.load %arg16[%c1] : memref<6xf32, #tpu.memory_space<smem>>
    %cst_12 = arith.constant 0.000000e+00 : f32
    %19 = vector.broadcast %cst_12 : f32 to vector<8x768xf32>
    %20 = arith.cmpf oge, %17, %19 : vector<8x768xf32>
    %21 = vector.broadcast %18 : f32 to vector<8x768xf32>
    %22 = arith.mulf %21, %17 : vector<8x768xf32>
    %23 = arith.select %20, %17, %22 : vector<8x768xi1>, vector<8x768xf32>
    %24 = arith.truncf %23 : vector<8x768xf32> to vector<8x768xbf16>
    %c0_13 = arith.constant 0 : index
    %c0_14 = arith.constant 0 : index
    %25 = vector.load %arg6[%c0_13, %c0_14] : memref<768x512xbf16, #tpu.memory_space<vmem>>, vector<768x512xbf16>
    %cst_15 = arith.constant dense<0.000000e+00> : vector<8x512xf32>
    %26 = tpu.matmul %24, %25, %cst_15 {dimension_numbers = #tpu.dot_dimension_numbers<[1], [0], [0], [1], [0, 0, 1, 1], [], []>} : vector<8x768xbf16>, vector<768x512xbf16>, vector<8x512xf32> -> vector<8x512xf32>
    %c0_16 = arith.constant 0 : index
    %c0_17 = arith.constant 0 : index
    %27 = vector.load %arg7[%c0_16, %c0_17] : memref<1x512xf32, #tpu.memory_space<vmem>>, vector<1x512xf32>
    %28 = vector.broadcast %27 : vector<1x512xf32> to vector<8x512xf32>
    %29 = arith.addf %26, %28 : vector<8x512xf32>
    %c2 = arith.constant 2 : index
    %30 = memref.load %arg16[%c2] : memref<6xf32, #tpu.memory_space<smem>>
    %cst_18 = arith.constant 0.000000e+00 : f32
    %31 = vector.broadcast %cst_18 : f32 to vector<8x512xf32>
    %32 = arith.cmpf oge, %29, %31 : vector<8x512xf32>
    %33 = vector.broadcast %30 : f32 to vector<8x512xf32>
    %34 = arith.mulf %33, %29 : vector<8x512xf32>
    %35 = arith.select %32, %29, %34 : vector<8x512xi1>, vector<8x512xf32>
    %36 = arith.truncf %35 : vector<8x512xf32> to vector<8x512xbf16>
    %c0_19 = arith.constant 0 : index
    %c0_20 = arith.constant 0 : index
    %37 = vector.load %arg8[%c0_19, %c0_20] : memref<512x512xbf16, #tpu.memory_space<vmem>>, vector<512x512xbf16>
    %cst_21 = arith.constant dense<0.000000e+00> : vector<8x512xf32>
    %38 = tpu.matmul %36, %37, %cst_21 {dimension_numbers = #tpu.dot_dimension_numbers<[1], [0], [0], [1], [0, 0, 1, 1], [], []>} : vector<8x512xbf16>, vector<512x512xbf16>, vector<8x512xf32> -> vector<8x512xf32>
    %c0_22 = arith.constant 0 : index
    %c0_23 = arith.constant 0 : index
    %39 = vector.load %arg9[%c0_22, %c0_23] : memref<1x512xf32, #tpu.memory_space<vmem>>, vector<1x512xf32>
    %40 = vector.broadcast %39 : vector<1x512xf32> to vector<8x512xf32>
    %41 = arith.addf %38, %40 : vector<8x512xf32>
    %c3 = arith.constant 3 : index
    %42 = memref.load %arg16[%c3] : memref<6xf32, #tpu.memory_space<smem>>
    %cst_24 = arith.constant 0.000000e+00 : f32
    %43 = vector.broadcast %cst_24 : f32 to vector<8x512xf32>
    %44 = arith.cmpf oge, %41, %43 : vector<8x512xf32>
    %45 = vector.broadcast %42 : f32 to vector<8x512xf32>
    %46 = arith.mulf %45, %41 : vector<8x512xf32>
    %47 = arith.select %44, %41, %46 : vector<8x512xi1>, vector<8x512xf32>
    %48 = arith.truncf %47 : vector<8x512xf32> to vector<8x512xbf16>
    %c0_25 = arith.constant 0 : index
    %c0_26 = arith.constant 0 : index
    %49 = vector.load %arg10[%c0_25, %c0_26] : memref<512x128xbf16, #tpu.memory_space<vmem>>, vector<512x128xbf16>
    %cst_27 = arith.constant dense<0.000000e+00> : vector<8x128xf32>
    %50 = tpu.matmul %48, %49, %cst_27 {dimension_numbers = #tpu.dot_dimension_numbers<[1], [0], [0], [1], [0, 0, 1, 1], [], []>} : vector<8x512xbf16>, vector<512x128xbf16>, vector<8x128xf32> -> vector<8x128xf32>
    %c0_28 = arith.constant 0 : index
    %c0_29 = arith.constant 0 : index
    %51 = vector.load %arg11[%c0_28, %c0_29] : memref<1x128xf32, #tpu.memory_space<vmem>>, vector<1x128xf32>
    %52 = vector.broadcast %51 : vector<1x128xf32> to vector<8x128xf32>
    %53 = arith.addf %50, %52 : vector<8x128xf32>
    %c4 = arith.constant 4 : index
    %54 = memref.load %arg16[%c4] : memref<6xf32, #tpu.memory_space<smem>>
    %cst_30 = arith.constant 0.000000e+00 : f32
    %55 = vector.broadcast %cst_30 : f32 to vector<8x128xf32>
    %56 = arith.cmpf oge, %53, %55 : vector<8x128xf32>
    %57 = vector.broadcast %54 : f32 to vector<8x128xf32>
    %58 = arith.mulf %57, %53 : vector<8x128xf32>
    %59 = arith.select %56, %53, %58 : vector<8x128xi1>, vector<8x128xf32>
    %60 = arith.truncf %59 : vector<8x128xf32> to vector<8x128xbf16>
    %c0_31 = arith.constant 0 : index
    %c0_32 = arith.constant 0 : index
    %61 = vector.load %arg12[%c0_31, %c0_32] : memref<128x128xbf16, #tpu.memory_space<vmem>>, vector<128x128xbf16>
    %cst_33 = arith.constant dense<0.000000e+00> : vector<8x128xf32>
    %62 = tpu.matmul %60, %61, %cst_33 {dimension_numbers = #tpu.dot_dimension_numbers<[1], [0], [0], [1], [0, 0, 1, 1], [], []>} : vector<8x128xbf16>, vector<128x128xbf16>, vector<8x128xf32> -> vector<8x128xf32>
    %c0_34 = arith.constant 0 : index
    %c0_35 = arith.constant 0 : index
    %63 = vector.load %arg13[%c0_34, %c0_35] : memref<1x128xf32, #tpu.memory_space<vmem>>, vector<1x128xf32>
    %64 = vector.broadcast %63 : vector<1x128xf32> to vector<8x128xf32>
    %65 = arith.addf %62, %64 : vector<8x128xf32>
    %c5 = arith.constant 5 : index
    %66 = memref.load %arg16[%c5] : memref<6xf32, #tpu.memory_space<smem>>
    %cst_36 = arith.constant 0.000000e+00 : f32
    %67 = vector.broadcast %cst_36 : f32 to vector<8x128xf32>
    %68 = arith.cmpf oge, %65, %67 : vector<8x128xf32>
    %69 = vector.broadcast %66 : f32 to vector<8x128xf32>
    %70 = arith.mulf %69, %65 : vector<8x128xf32>
    %71 = arith.select %68, %65, %70 : vector<8x128xi1>, vector<8x128xf32>
    %72 = arith.truncf %71 : vector<8x128xf32> to vector<8x128xbf16>
    %c0_37 = arith.constant 0 : index
    %c0_38 = arith.constant 0 : index
    %73 = vector.load %arg14[%c0_37, %c0_38] : memref<128x128xbf16, #tpu.memory_space<vmem>>, vector<128x128xbf16>
    %cst_39 = arith.constant dense<0.000000e+00> : vector<8x128xf32>
    %74 = tpu.matmul %72, %73, %cst_39 {dimension_numbers = #tpu.dot_dimension_numbers<[1], [0], [0], [1], [0, 0, 1, 1], [], []>} : vector<8x128xbf16>, vector<128x128xbf16>, vector<8x128xf32> -> vector<8x128xf32>
    %c0_40 = arith.constant 0 : index
    %c0_41 = arith.constant 0 : index
    %75 = vector.load %arg15[%c0_40, %c0_41] : memref<1x128xf32, #tpu.memory_space<vmem>>, vector<1x128xf32>
    %76 = vector.broadcast %75 : vector<1x128xf32> to vector<8x128xf32>
    %77 = arith.addf %74, %76 : vector<8x128xf32>
    %c0_42 = arith.constant 0 : index
    %c0_43 = arith.constant 0 : index
    %78 = vector.load %arg17[%c0_42, %c0_43] : memref<8x128xf32, #tpu.memory_space<vmem>>, vector<8x128xf32>
    tpu.vector_store %arg17[%c0_42, %c0_43], %77 {strides = array<i32>} : memref<8x128xf32, #tpu.memory_space<vmem>>, vector<8x128xf32>,
    return
  }
  func.func @transform_0(%arg0: i32) -> (i32, i32) {
    %c0_i32 = arith.constant 0 : i32
    %c0_i32_0 = arith.constant 0 : i32
    return %arg0, %c0_i32 : i32, i32
  }
  func.func @transform_1(%arg0: i32) -> (i32, i32) {
    %c0_i32 = arith.constant 0 : i32
    %c0_i32_0 = arith.constant 0 : i32
    %c0_i32_1 = arith.constant 0 : i32
    return %c0_i32, %c0_i32_0 : i32, i32
  }
  func.func @transform_2(%arg0: i32) -> (i32, i32) {
    %c0_i32 = arith.constant 0 : i32
    %c0_i32_0 = arith.constant 0 : i32
    %c0_i32_1 = arith.constant 0 : i32
    return %c0_i32, %c0_i32_0 : i32, i32
  }
  func.func @transform_3(%arg0: i32) -> (i32, i32) {
    %c0_i32 = arith.constant 0 : i32
    %c0_i32_0 = arith.constant 0 : i32
    %c0_i32_1 = arith.constant 0 : i32
    return %c0_i32, %c0_i32_0 : i32, i32
  }
  func.func @transform_4(%arg0: i32) -> (i32, i32) {
    %c0_i32 = arith.constant 0 : i32
    %c0_i32_0 = arith.constant 0 : i32
    %c0_i32_1 = arith.constant 0 : i32
    return %c0_i32, %c0_i32_0 : i32, i32
  }
  func.func @transform_5(%arg0: i32) -> (i32, i32) {
    %c0_i32 = arith.constant 0 : i32
    %c0_i32_0 = arith.constant 0 : i32
    %c0_i32_1 = arith.constant 0 : i32
    return %c0_i32, %c0_i32_0 : i32, i32
  }
  func.func @transform_6(%arg0: i32) -> (i32, i32) {
    %c0_i32 = arith.constant 0 : i32
    %c0_i32_0 = arith.constant 0 : i32
    %c0_i32_1 = arith.constant 0 : i32
    return %c0_i32, %c0_i32_0 : i32, i32
  }
  func.func @transform_7(%arg0: i32) -> (i32, i32) {
    %c0_i32 = arith.constant 0 : i32
    %c0_i32_0 = arith.constant 0 : i32
    %c0_i32_1 = arith.constant 0 : i32
    return %c0_i32, %c0_i32_0 : i32, i32
  }
  func.func @transform_8(%arg0: i32) -> (i32, i32) {
    %c0_i32 = arith.constant 0 : i32
    %c0_i32_0 = arith.constant 0 : i32
    %c0_i32_1 = arith.constant 0 : i32
    return %c0_i32, %c0_i32_0 : i32, i32
  }
  func.func @transform_9(%arg0: i32) -> (i32, i32) {
    %c0_i32 = arith.constant 0 : i32
    %c0_i32_0 = arith.constant 0 : i32
    %c0_i32_1 = arith.constant 0 : i32
    return %c0_i32, %c0_i32_0 : i32, i32
  }
  func.func @transform_10(%arg0: i32) -> (i32, i32) {
    %c0_i32 = arith.constant 0 : i32
    %c0_i32_0 = arith.constant 0 : i32
    %c0_i32_1 = arith.constant 0 : i32
    return %c0_i32, %c0_i32_0 : i32, i32
  }
  func.func @transform_11(%arg0: i32) -> (i32, i32) {
    %c0_i32 = arith.constant 0 : i32
    %c0_i32_0 = arith.constant 0 : i32
    %c0_i32_1 = arith.constant 0 : i32
    return %c0_i32, %c0_i32_0 : i32, i32
  }
  func.func @transform_12(%arg0: i32) -> (i32, i32) {
    %c0_i32 = arith.constant 0 : i32
    %c0_i32_0 = arith.constant 0 : i32
    %c0_i32_1 = arith.constant 0 : i32
    return %c0_i32, %c0_i32_0 : i32, i32
  }
  func.func @transform_13(%arg0: i32) -> (i32, i32) {
    %c0_i32 = arith.constant 0 : i32
    %c0_i32_0 = arith.constant 0 : i32
    %c0_i32_1 = arith.constant 0 : i32
    return %c0_i32, %c0_i32_0 : i32, i32
  }
  func.func @transform_14(%arg0: i32) -> (i32, i32) {
    %c0_i32 = arith.constant 0 : i32
    %c0_i32_0 = arith.constant 0 : i32
    %c0_i32_1 = arith.constant 0 : i32
    return %c0_i32, %c0_i32_0 : i32, i32
  }
  func.func @transform_15(%arg0: i32) -> i32 {
    %c0_i32 = arith.constant 0 : i32
    %c0_i32_0 = arith.constant 0 : i32
    return %c0_i32 : i32
  }
  func.func @transform_16(%arg0: i32) -> (i32, i32) {
    %c0_i32 = arith.constant 0 : i32
    %c0_i32_0 = arith.constant 0 : i32
    return %arg0, %c0_i32 : i32, i32
  }
}

</mosaic_0001>

<llo_original>
// kernel: tpu_custom_call.1
$region0: #{tpu_custom_call.1}
  #allocation0 [shape = 'u32[]', space=smem, size = 0x4, offset = 0x4, fixed_abs, tag = 'smem constant byte address 0x4 - core index']
  #allocation1 [shape = 'u32[144,128]{1,0:T(1,128)}', space=vmem, size = 0x12000, scoped, tag = 'internal scratch']
  %s0 = inlined_call_operand.hbm [shape: f32[8,128], index: 0, kind: input, shape index: {}]
  %s1 = inlined_call_operand.hbm [shape: f32[16,128], index: 1, kind: output, shape index: {}]
  %s2 = sld [smem:[#allocation0]]
  $region41: #{tpu_custom_call.1} parent=0
    _
  %s4 = ssub.s32 1, %s2
  %s5 = scalar_select 0, %s4, %s2
  $region1: #{tpu_custom_call.1} parent=0
    #allocation2 [shape = 'u8[4096]{0}', space=vmem, size = 0x1000, scoped, tag = 'input window, operand 0, single buffered']
    #allocation3 [shape = 's32[2]{0}', space=sflag, size = 0x8, scoped, tag = 'scoped memory for tpu_custom_call.1']
    #allocation4 [shape = 's32[2]{0}', space=sflag, size = 0x8, scoped, tag = 'scoped memory for tpu_custom_call.1']
    #allocation5 [shape = 'u8[8192]{0}', space=vmem, size = 0x2000, scoped, tag = 'output window, operand 0']
    %6 = vsyncpa [#allocation3], 0
    %7 = vsyncpa [#allocation4], 0
    %s8 = scalar_lea.sflag [#allocation4], 1
    %9 = vsyncpa %s8, 0
    loop: start=0, step=1, limit=4
    $region2: #{tpu_custom_call.1} parent=1 // loop_pre_header
      _
    $region3: #{tpu_custom_call.1} parent=1 // loop_header
      %s11 = sphi 0, %s15
      %p12 = scmp.ge.s32.totalorder %s11, 4
      %s19 = sphi 0, %s19
      %s21 = sphi 0, %s19
      %s22 = sphi 0, %s21
      %s36 = sphi 0, %s22
      %s42 = sphi 0, %s44
      %s45 = sphi 0, %s42
      %s46 = sphi 0, %s45
      %s62 = sphi 0, %s46
    $region4: #{tpu_custom_call.1} parent=1 // loop_header_branch
      %14 = sbr.rel (%p12) target = $region8
    $region5: #{tpu_custom_call.1} parent=1 // loop_body
      %s16 = ssub.s32 %s11, 1
      %s17 = ssub.s32 %s11, 2
      %s18 = sadd.s32 %s11, 1
      %s20 = sadd.s32 %s19, 1
      %p23 = scmp.eq.s32.totalorder %s11, 1
      %p24 = scmp.ne.s32.totalorder %s19, %s21
      %p25 = scmp.eq.s32.totalorder %s11, 0
      %p26 = por %p24, %p25
      %p27 = scmp.ne.s32.totalorder %s19, %s21
      %p28 = scmp.eq.s32.totalorder %s16, 1
      %p29 = por %p27, %p28
      %p30 = scmp.ne.s32.totalorder %s21, %s22
      %p31 = scmp.eq.s32.totalorder %s16, 0
      %p32 = por %p30, %p31
      %p33 = scmp.ne.s32.totalorder %s21, %s22
      %p34 = scmp.eq.s32.totalorder %s17, 1
      %p35 = por %p33, %p34
      %p37 = scmp.ne.s32.totalorder %s22, %s36
      %p38 = scmp.eq.s32.totalorder %s17, 0
      %p39 = por %p37, %p38
      %s40 = ssub.s32 %s11, %s18
      %p41 = scmp.eq.s32.totalorder %s40, 0
      %s43 = sadd.s32 %s42, 1
      %s44 = scalar_select %p41, %s42, %s43
      %p47 = pneg %p41
      %p48 = scmp.eq.s32.totalorder %s11, 1
      %p49 = por %p47, %p48
      %p50 = scmp.ne.s32.totalorder %s42, %s45
      %p51 = scmp.eq.s32.totalorder %s11, 0
      %p52 = por %p50, %p51
      %p53 = scmp.ne.s32.totalorder %s42, %s45
      %p54 = scmp.eq.s32.totalorder %s16, 1
      %p55 = por %p53, %p54
      %p56 = scmp.ne.s32.totalorder %s45, %s46
      %p57 = scmp.eq.s32.totalorder %s16, 0
      %p58 = por %p56, %p57
      %p59 = scmp.ne.s32.totalorder %s45, %s46
      %p60 = scmp.eq.s32.totalorder %s17, 1
      %p61 = por %p59, %p60
      %p63 = scmp.ne.s32.totalorder %s46, %s62
      %p64 = scmp.eq.s32.totalorder %s17, 0
      %p65 = por %p63, %p64
      %p66 = scmp.le.s32.totalorder 1, %s11
      %p67 = scmp.lt.s32.totalorder %s11, 3
      %p68 = pnand %p66, %p67
      %p69 = pneg %p68
      // Predicated region
      $region9: #{tpu_custom_call.1} parent=5 // pred_check
        _
      $region10: #{tpu_custom_call.1} parent=5 // pred_check_branch
        %71 = sbr.rel (%p68) target = $region12
      $region11: #{tpu_custom_call.1} parent=5 // pred_region
        %s72 = ssub.s32 %s11, 1
        // Predicated region
        $region13: #{tpu_custom_call.1} parent=11 // pred_check
          %p73 = pneg %p32
        $region14: #{tpu_custom_call.1} parent=11 // pred_check_branch
          %75 = sbr.rel (%p73) target = $region16
        $region15: #{tpu_custom_call.1} parent=11 // pred_region
          %s77 = ssub.s32 128, 128
          %78 = vsyncadd [#allocation3], %s77
          %s80 = sshll.u32 [#allocation2], 4
          %s81 = int_to_ptr.vmem [resolvable:$true] %s80
          %83 = dma.hbm_to_vmem [thread:$0]  %s0, 128, %s81, [#allocation3]
        $region16: #{tpu_custom_call.1} parent=11 // pred_fallthru
          _
      $region12: #{tpu_custom_call.1} parent=5 // pred_fallthru
        _
      %p84 = scmp.lt.s32.totalorder %s11, 2
      // Predicated region
      $region17: #{tpu_custom_call.1} parent=5 // pred_check
        %p85 = pneg %p84
      $region18: #{tpu_custom_call.1} parent=5 // pred_check_branch
        %87 = sbr.rel (%p85) target = $region20
      $region19: #{tpu_custom_call.1} parent=5 // pred_region
        _
      $region20: #{tpu_custom_call.1} parent=5 // pred_fallthru
        _
      %p88 = scmp.le.s32.totalorder 1, %s11
      %p89 = scmp.lt.s32.totalorder %s11, 3
      %p90 = pnand %p88, %p89
      %p91 = pneg %p90
      // Predicated region
      $region21: #{tpu_custom_call.1} parent=5 // pred_check
        _
      $region22: #{tpu_custom_call.1} parent=5 // pred_check_branch
        %93 = sbr.rel (%p90) target = $region24
      $region23: #{tpu_custom_call.1} parent=5 // pred_region
        %s94 = ssub.s32 %s11, 1
        // Predicated region
        $region25: #{tpu_custom_call.1} parent=23 // pred_check
          %p95 = pneg %p32
        $region26: #{tpu_custom_call.1} parent=23 // pred_check_branch
          %97 = sbr.rel (%p95) target = $region28
        $region27: #{tpu_custom_call.1} parent=23 // pred_region
          %98 = dma.done [#allocation3], 128
        $region28: #{tpu_custom_call.1} parent=23 // pred_fallthru
          _
        %p99 = pneg %p32
        %p100 = pneg %p29
        %p101 = pneg %p58
        %p102 = pneg %p55
        %s103 = sand.u32 %s45, 1
        %s104 = scalar_lea.sflag [#allocation4], %s103
        %s105 = sand.u32 %s45, 1
        %s106 = smul.addr %s105, 8
        %s107 = scalar_lea.vmem [#allocation5], %s106
        %v108 = vld [vmem:[#allocation2] sm:$0xff]
        %v109 = vadd.f32 %v108, 1.0
        %110 = vst [vmem:[%s107] sm:$0xff] %v109
        %s111 = sand.u32 %s45, 1
        %s112 = scalar_lea.sflag [#allocation4], %s111
        %s113 = sand.u32 %s45, 1
        %s114 = smul.addr %s113, 8
        %s115 = scalar_lea.vmem [#allocation5], %s114
        // Predicated region
        $region29: #{tpu_custom_call.1} parent=23 // pred_check
          %p116 = pneg %p55
        $region30: #{tpu_custom_call.1} parent=23 // pred_check_branch
          %118 = sbr.rel (%p116) target = $region32
        $region31: #{tpu_custom_call.1} parent=23 // pred_region
          %s120 = ssub.s32 128, 128
          %121 = vsyncadd %s112, %s120
          %s122 = smul.addr %s16, 128
          %s123 = scalar_lea.hbm %s1, %s122
          %s125 = sshll.u32 %s115, 4
          %s126 = int_to_ptr.vmem [resolvable:$true] %s125
          %128 = dma.vmem_to_hbm [thread:$0]  %s126, 128, %s123, %s112
        $region32: #{tpu_custom_call.1} parent=23 // pred_fallthru
          _
      $region24: #{tpu_custom_call.1} parent=5 // pred_fallthru
        _
      %p129 = scmp.le.s32.totalorder 2, %s11
      // Predicated region
      $region33: #{tpu_custom_call.1} parent=5 // pred_check
        %p130 = pneg %p129
      $region34: #{tpu_custom_call.1} parent=5 // pred_check_branch
        %132 = sbr.rel (%p130) target = $region36
      $region35: #{tpu_custom_call.1} parent=5 // pred_region
        %s133 = ssub.s32 %s11, 2
        // Predicated region
        $region37: #{tpu_custom_call.1} parent=35 // pred_check
          %p134 = pneg %p61
        $region38: #{tpu_custom_call.1} parent=35 // pred_check_branch
          %136 = sbr.rel (%p134) target = $region40
        $region39: #{tpu_custom_call.1} parent=35 // pred_region
          %s137 = sand.u32 %s46, 1
          %s138 = scalar_lea.sflag [#allocation4], %s137
          %s139 = sand.u32 %s46, 1
          %s140 = smul.addr %s139, 8
          %s141 = scalar_lea.vmem [#allocation5], %s140
          %142 = dma.done %s138, 128
        $region40: #{tpu_custom_call.1} parent=35 // pred_fallthru
          _
      $region36: #{tpu_custom_call.1} parent=5 // pred_fallthru
        _
    $region6: #{tpu_custom_call.1} parent=1 // loop_footer
      %s15 = sadd.s32 1, %s11
    $region7: #{tpu_custom_call.1} parent=1 // loop_footer_branch
      %10 = sbr.rel target = $region3
    $region8: #{tpu_custom_call.1} parent=1 // loop_exit
      _
    %143 = vsyncpa [#allocation3], 1
    %s144 = scalar_lea.sflag [#allocation3], 1
    %145 = vsyncpa %s144, 1
    %146 = vsyncpa [#allocation4], 1
    %s147 = scalar_lea.sflag [#allocation4], 1
    %148 = vsyncpa %s147, 1

// kernel: mlp_forward.1
$region0: #{mlp_forward.1}
  #allocation0 [shape = 'u32[]', space=smem, size = 0x4, offset = 0x4, fixed_abs, tag = 'smem constant byte address 0x4 - core index']
  #allocation1 [shape = 'u32[144,128]{1,0:T(1,128)}', space=vmem, size = 0x12000, scoped, tag = 'internal scratch']
  %s0 = inlined_call_operand.vmem [shape: bf16[8,128], index: 0, kind: input, shape index: {}]
  %s1 = inlined_call_operand.hbm [shape: bf16[128,1024], index: 1, kind: input, shape index: {}]
  %s2 = inlined_call_operand.hbm [shape: f32[1,1024], index: 2, kind: input, shape index: {}]
  %s3 = inlined_call_operand.hbm [shape: bf16[1024,768], index: 3, kind: input, shape index: {}]
  %s4 = inlined_call_operand.hbm [shape: f32[1,768], index: 4, kind: input, shape index: {}]
  %s5 = inlined_call_operand.hbm [shape: bf16[768,512], index: 5, kind: input, shape index: {}]
  %s6 = inlined_call_operand.hbm [shape: f32[1,512], index: 6, kind: input, shape index: {}]
  %s7 = inlined_call_operand.hbm [shape: bf16[512,512], index: 7, kind: input, shape index: {}]
  %s8 = inlined_call_operand.hbm [shape: f32[1,512], index: 8, kind: input, shape index: {}]
  %s9 = inlined_call_operand.hbm [shape: bf16[512,128], index: 9, kind: input, shape index: {}]
  %s10 = inlined_call_operand.hbm [shape: f32[1,128], index: 10, kind: input, shape index: {}]
  %s11 = inlined_call_operand.hbm [shape: bf16[128,128], index: 11, kind: input, shape index: {}]
  %s12 = inlined_call_operand.hbm [shape: f32[1,128], index: 12, kind: input, shape index: {}]
  %s13 = inlined_call_operand.hbm [shape: bf16[128,128], index: 13, kind: input, shape index: {}]
  %s14 = inlined_call_operand.hbm [shape: f32[1,128], index: 14, kind: input, shape index: {}]
  %s15 = inlined_call_operand.hbm [shape: f32[6], index: 15, kind: input, shape index: {}]
  %s16 = inlined_call_operand.vmem [shape: f32[8,128], index: 16, kind: output, shape index: {}]
  %s17 = sld [smem:[#allocation0]]
  $region134: #{mlp_forward.1} parent=0
    _
  %s19 = ssub.s32 1, %s17
  %s20 = scalar_select 0, %s19, %s17
  $region1: #{mlp_forward.1} parent=0
    #allocation2 [shape = 'u8[262144]{0}', space=vmem, size = 0x40000, scoped, tag = 'input window, operand 1, single buffered']
    #allocation3 [shape = 's32[1]{0}', space=sflag, size = 0x4, scoped, tag = 'scoped memory for mlp_forward.1']
    #allocation4 [shape = 's32[1]{0}', space=sflag, size = 0x4, scoped, tag = 'scoped memory for mlp_forward.1']
    #allocation5 [shape = 'u8[4096]{0}', space=vmem, size = 0x1000, scoped, tag = 'input window, operand 2, single buffered']
    #allocation6 [shape = 's32[1]{0}', space=sflag, size = 0x4, scoped, tag = 'scoped memory for mlp_forward.1']
    #allocation7 [shape = 'u8[1572864]{0}', space=vmem, size = 0x180000, scoped, tag = 'input window, operand 3, single buffered']
    #allocation8 [shape = 'u8[3072]{0}', space=vmem, size = 0xc00, scoped, tag = 'input window, operand 4, single buffered']
    #allocation9 [shape = 's32[1]{0}', space=sflag, size = 0x4, scoped, tag = 'scoped memory for mlp_forward.1']
    #allocation10 [shape = 'u8[786432]{0}', space=vmem, size = 0xc0000, scoped, tag = 'input window, operand 5, single buffered']
    #allocation11 [shape = 'u8[2048]{0}', space=vmem, size = 0x800, scoped, tag = 'input window, operand 6, single buffered']
    #allocation12 [shape = 's32[1]{0}', space=sflag, size = 0x4, scoped, tag = 'scoped memory for mlp_forward.1']
    #allocation13 [shape = 'u8[524288]{0}', space=vmem, size = 0x80000, scoped, tag = 'input window, operand 7, single buffered']
    #allocation14 [shape = 'u8[2048]{0}', space=vmem, size = 0x800, scoped, tag = 'input window, operand 8, single buffered']
    #allocation15 [shape = 's32[1]{0}', space=sflag, size = 0x4, scoped, tag = 'scoped memory for mlp_forward.1']
    #allocation16 [shape = 'u8[131072]{0}', space=vmem, size = 0x20000, scoped, tag = 'input window, operand 9, single buffered']
    #allocation17 [shape = 'u8[512]{0}', space=vmem, size = 0x400, scoped, tag = 'input window, operand 10, single buffered']
    #allocation18 [shape = 's32[1]{0}', space=sflag, size = 0x4, scoped, tag = 'scoped memory for mlp_forward.1']
    #allocation19 [shape = 'u8[32768]{0}', space=vmem, size = 0x8000, scoped, tag = 'input window, operand 11, single buffered']
    #allocation20 [shape = 'u8[512]{0}', space=vmem, size = 0x400, scoped, tag = 'input window, operand 12, single buffered']
    #allocation21 [shape = 's32[1]{0}', space=sflag, size = 0x4, scoped, tag = 'scoped memory for mlp_forward.1']
    #allocation22 [shape = 'u8[32768]{0}', space=vmem, size = 0x8000, scoped, tag = 'input window, operand 13, single buffered']
    #allocation23 [shape = 'u8[512]{0}', space=vmem, size = 0x400, scoped, tag = 'input window, operand 14, single buffered']
    #allocation24 [shape = 's32[1]{0}', space=sflag, size = 0x4, scoped, tag = 'scoped memory for mlp_forward.1']
    #allocation25 [shape = 'u8[512]{0}', space=smem, size = 0x200, scoped, tag = 'input window, operand 15, single buffered']
    %21 = vsyncpa [#allocation3], 0
    %22 = vsyncpa [#allocation6], 0
    %23 = vsyncpa [#allocation9], 0
    %24 = vsyncpa [#allocation12], 0
    %25 = vsyncpa [#allocation15], 0
    %26 = vsyncpa [#allocation18], 0
    %27 = vsyncpa [#allocation21], 0
    %28 = vsyncpa [#allocation24], 0
    %29 = vsyncpa [#allocation4], 0
    // Predicated region
    $region2: #{mlp_forward.1} parent=1 // pred_check
      _
    $region3: #{mlp_forward.1} parent=1 // pred_check_branch
      %31 = sbr.rel (0) target = $region5
    $region4: #{mlp_forward.1} parent=1 // pred_region
      _
    $region5: #{mlp_forward.1} parent=1 // pred_fallthru
      _
    // Predicated region
    $region6: #{mlp_forward.1} parent=1 // pred_check
      _
    $region7: #{mlp_forward.1} parent=1 // pred_check_branch
      %33 = sbr.rel (0) target = $region9
    $region8: #{mlp_forward.1} parent=1 // pred_region
      %s35 = ssub.s32 8192, 8192
      %36 = vsyncadd [#allocation3], %s35
      %s37 = sshll.u32 [#allocation2], 4
      %s38 = int_to_ptr.vmem [resolvable:$true] %s37
      %43 = dma.hbm_to_vmem [thread:$0]  %s1, 8192, %s38, [#allocation3], 512, 512, 32
    $region9: #{mlp_forward.1} parent=1 // pred_fallthru
      _
    // Predicated region
    $region10: #{mlp_forward.1} parent=1 // pred_check
      _
    $region11: #{mlp_forward.1} parent=1 // pred_check_branch
      %45 = sbr.rel (0) target = $region13
    $region12: #{mlp_forward.1} parent=1 // pred_region
      %s47 = ssub.s32 128, 128
      %48 = vsyncadd [#allocation6], %s47
      %s50 = sshll.u32 [#allocation5], 4
      %s51 = int_to_ptr.vmem [resolvable:$true] %s50
      %53 = dma.hbm_to_vmem [thread:$0]  %s2, 128, %s51, [#allocation6]
    $region13: #{mlp_forward.1} parent=1 // pred_fallthru
      _
    // Predicated region
    $region14: #{mlp_forward.1} parent=1 // pred_check
      _
    $region15: #{mlp_forward.1} parent=1 // pred_check_branch
      %55 = sbr.rel (0) target = $region17
    $region16: #{mlp_forward.1} parent=1 // pred_region
      %s57 = ssub.s32 49152, 49152
      %58 = vsyncadd [#allocation6], %s57
      %s59 = sshll.u32 [#allocation7], 4
      %s60 = int_to_ptr.vmem [resolvable:$true] %s59
      %65 = dma.hbm_to_vmem [thread:$0]  %s3, 49152, %s60, [#allocation6], 384, 384, 24
    $region17: #{mlp_forward.1} parent=1 // pred_fallthru
      _
    // Predicated region
    $region18: #{mlp_forward.1} parent=1 // pred_check
      _
    $region19: #{mlp_forward.1} parent=1 // pred_check_branch
      %67 = sbr.rel (0) target = $region21
    $region20: #{mlp_forward.1} parent=1 // pred_region
      %s69 = ssub.s32 96, 96
      %70 = vsyncadd [#allocation9], %s69
      %s72 = sshll.u32 [#allocation8], 4
      %s73 = int_to_ptr.vmem [resolvable:$true] %s72
      %75 = dma.hbm_to_vmem [thread:$0]  %s4, 96, %s73, [#allocation9]
    $region21: #{mlp_forward.1} parent=1 // pred_fallthru
      _
    // Predicated region
    $region22: #{mlp_forward.1} parent=1 // pred_check
      _
    $region23: #{mlp_forward.1} parent=1 // pred_check_branch
      %77 = sbr.rel (0) target = $region25
    $region24: #{mlp_forward.1} parent=1 // pred_region
      %s79 = ssub.s32 24576, 24576
      %80 = vsyncadd [#allocation9], %s79
      %s81 = sshll.u32 [#allocation10], 4
      %s82 = int_to_ptr.vmem [resolvable:$true] %s81
      %87 = dma.hbm_to_vmem [thread:$0]  %s5, 24576, %s82, [#allocation9], 256, 256, 16
    $region25: #{mlp_forward.1} parent=1 // pred_fallthru
      _
    // Predicated region
    $region26: #{mlp_forward.1} parent=1 // pred_check
      _
    $region27: #{mlp_forward.1} parent=1 // pred_check_branch
      %89 = sbr.rel (0) target = $region29
    $region28: #{mlp_forward.1} parent=1 // pred_region
      %s91 = ssub.s32 64, 64
      %92 = vsyncadd [#allocation12], %s91
      %s94 = sshll.u32 [#allocation11], 4
      %s95 = int_to_ptr.vmem [resolvable:$true] %s94
      %97 = dma.hbm_to_vmem [thread:$0]  %s6, 64, %s95, [#allocation12]
    $region29: #{mlp_forward.1} parent=1 // pred_fallthru
      _
    // Predicated region
    $region30: #{mlp_forward.1} parent=1 // pred_check
      _
    $region31: #{mlp_forward.1} parent=1 // pred_check_branch
      %99 = sbr.rel (0) target = $region33
    $region32: #{mlp_forward.1} parent=1 // pred_region
      %s101 = ssub.s32 16384, 16384
      %102 = vsyncadd [#allocation12], %s101
      %s103 = sshll.u32 [#allocation13], 4
      %s104 = int_to_ptr.vmem [resolvable:$true] %s103
      %109 = dma.hbm_to_vmem [thread:$0]  %s7, 16384, %s104, [#allocation12], 256, 256, 16
    $region33: #{mlp_forward.1} parent=1 // pred_fallthru
      _
    // Predicated region
    $region34: #{mlp_forward.1} parent=1 // pred_check
      _
    $region35: #{mlp_forward.1} parent=1 // pred_check_branch
      %111 = sbr.rel (0) target = $region37
    $region36: #{mlp_forward.1} parent=1 // pred_region
      %s113 = ssub.s32 64, 64
      %114 = vsyncadd [#allocation15], %s113
      %s116 = sshll.u32 [#allocation14], 4
      %s117 = int_to_ptr.vmem [resolvable:$true] %s116
      %119 = dma.hbm_to_vmem [thread:$0]  %s8, 64, %s117, [#allocation15]
    $region37: #{mlp_forward.1} parent=1 // pred_fallthru
      _
    // Predicated region
    $region38: #{mlp_forward.1} parent=1 // pred_check
      _
    $region39: #{mlp_forward.1} parent=1 // pred_check_branch
      %121 = sbr.rel (0) target = $region41
    $region40: #{mlp_forward.1} parent=1 // pred_region
      %s123 = ssub.s32 4096, 4096
      %124 = vsyncadd [#allocation15], %s123
      %s125 = sshll.u32 [#allocation16], 4
      %s126 = int_to_ptr.vmem [resolvable:$true] %s125
      %131 = dma.hbm_to_vmem [thread:$0]  %s9, 4096, %s126, [#allocation15], 64, 64, 4
    $region41: #{mlp_forward.1} parent=1 // pred_fallthru
      _
    // Predicated region
    $region42: #{mlp_forward.1} parent=1 // pred_check
      _
    $region43: #{mlp_forward.1} parent=1 // pred_check_branch
      %133 = sbr.rel (0) target = $region45
    $region44: #{mlp_forward.1} parent=1 // pred_region
      %s135 = ssub.s32 16, 16
      %136 = vsyncadd [#allocation18], %s135
      %s138 = sshll.u32 [#allocation17], 4
      %s139 = int_to_ptr.vmem [resolvable:$true] %s138
      %141 = dma.hbm_to_vmem [thread:$0]  %s10, 16, %s139, [#allocation18]
    $region45: #{mlp_forward.1} parent=1 // pred_fallthru
      _
    // Predicated region
    $region46: #{mlp_forward.1} parent=1 // pred_check
      _
    $region47: #{mlp_forward.1} parent=1 // pred_check_branch
      %143 = sbr.rel (0) target = $region49
    $region48: #{mlp_forward.1} parent=1 // pred_region
      %s145 = ssub.s32 1024, 1024
      %146 = vsyncadd [#allocation18], %s145
      %s147 = sshll.u32 [#allocation19], 4
      %s148 = int_to_ptr.vmem [resolvable:$true] %s147
      %153 = dma.hbm_to_vmem [thread:$0]  %s11, 1024, %s148, [#allocation18], 64, 64, 4
    $region49: #{mlp_forward.1} parent=1 // pred_fallthru
      _
    // Predicated region
    $region50: #{mlp_forward.1} parent=1 // pred_check
      _
    $region51: #{mlp_forward.1} parent=1 // pred_check_branch
      %155 = sbr.rel (0) target = $region53
    $region52: #{mlp_forward.1} parent=1 // pred_region
      %s157 = ssub.s32 16, 16
      %158 = vsyncadd [#allocation21], %s157
      %s160 = sshll.u32 [#allocation20], 4
      %s161 = int_to_ptr.vmem [resolvable:$true] %s160
      %163 = dma.hbm_to_vmem [thread:$0]  %s12, 16, %s161, [#allocation21]
    $region53: #{mlp_forward.1} parent=1 // pred_fallthru
      _
    // Predicated region
    $region54: #{mlp_forward.1} parent=1 // pred_check
      _
    $region55: #{mlp_forward.1} parent=1 // pred_check_branch
      %165 = sbr.rel (0) target = $region57
    $region56: #{mlp_forward.1} parent=1 // pred_region
      %s167 = ssub.s32 1024, 1024
      %168 = vsyncadd [#allocation21], %s167
      %s169 = sshll.u32 [#allocation22], 4
      %s170 = int_to_ptr.vmem [resolvable:$true] %s169
      %175 = dma.hbm_to_vmem [thread:$0]  %s13, 1024, %s170, [#allocation21], 64, 64, 4
    $region57: #{mlp_forward.1} parent=1 // pred_fallthru
      _
    // Predicated region
    $region58: #{mlp_forward.1} parent=1 // pred_check
      _
    $region59: #{mlp_forward.1} parent=1 // pred_check_branch
      %177 = sbr.rel (0) target = $region61
    $region60: #{mlp_forward.1} parent=1 // pred_region
      %s179 = ssub.s32 16, 16
      %180 = vsyncadd [#allocation24], %s179
      %s182 = sshll.u32 [#allocation23], 4
      %s183 = int_to_ptr.vmem [resolvable:$true] %s182
      %185 = dma.hbm_to_vmem [thread:$0]  %s14, 16, %s183, [#allocation24]
    $region61: #{mlp_forward.1} parent=1 // pred_fallthru
      _
    // Predicated region
    $region62: #{mlp_forward.1} parent=1 // pred_check
      _
    $region63: #{mlp_forward.1} parent=1 // pred_check_branch
      %187 = sbr.rel (0) target = $region65
    $region64: #{mlp_forward.1} parent=1 // pred_region
      %s189 = ssub.s32 16, 16
      %190 = vsyncadd [#allocation4], %s189
      %193 = dma.hbm_to_smem %s15, 16, [#allocation25], [#allocation4]
    $region65: #{mlp_forward.1} parent=1 // pred_fallthru
      _
    // Predicated region
    $region66: #{mlp_forward.1} parent=1 // pred_check
      _
    $region67: #{mlp_forward.1} parent=1 // pred_check_branch
      %195 = sbr.rel (0) target = $region69
    $region68: #{mlp_forward.1} parent=1 // pred_region
      %196 = dma.done [#allocation3], 8192
    $region69: #{mlp_forward.1} parent=1 // pred_fallthru
      _
    // Predicated region
    $region70: #{mlp_forward.1} parent=1 // pred_check
      _
    $region71: #{mlp_forward.1} parent=1 // pred_check_branch
      %198 = sbr.rel (0) target = $region73
    $region72: #{mlp_forward.1} parent=1 // pred_region
      %199 = dma.done [#allocation6], 128
    $region73: #{mlp_forward.1} parent=1 // pred_fallthru
      _
    // Predicated region
    $region74: #{mlp_forward.1} parent=1 // pred_check
      _
    $region75: #{mlp_forward.1} parent=1 // pred_check_branch
      %201 = sbr.rel (0) target = $region77
    $region76: #{mlp_forward.1} parent=1 // pred_region
      %202 = dma.done [#allocation6], 49152
    $region77: #{mlp_forward.1} parent=1 // pred_fallthru
      _
    // Predicated region
    $region78: #{mlp_forward.1} parent=1 // pred_check
      _
    $region79: #{mlp_forward.1} parent=1 // pred_check_branch
      %204 = sbr.rel (0) target = $region81
    $region80: #{mlp_forward.1} parent=1 // pred_region
      %205 = dma.done [#allocation9], 96
    $region81: #{mlp_forward.1} parent=1 // pred_fallthru
      _
    // Predicated region
    $region82: #{mlp_forward.1} parent=1 // pred_check
      _
    $region83: #{mlp_forward.1} parent=1 // pred_check_branch
      %207 = sbr.rel (0) target = $region85
    $region84: #{mlp_forward.1} parent=1 // pred_region
      %208 = dma.done [#allocation9], 24576
    $region85: #{mlp_forward.1} parent=1 // pred_fallthru
      _
    // Predicated region
    $region86: #{mlp_forward.1} parent=1 // pred_check
      _
    $region87: #{mlp_forward.1} parent=1 // pred_check_branch
      %210 = sbr.rel (0) target = $region89
    $region88: #{mlp_forward.1} parent=1 // pred_region
      %211 = dma.done [#allocation12], 64
    $region89: #{mlp_forward.1} parent=1 // pred_fallthru
      _
    // Predicated region
    $region90: #{mlp_forward.1} parent=1 // pred_check
      _
    $region91: #{mlp_forward.1} parent=1 // pred_check_branch
      %213 = sbr.rel (0) target = $region93
    $region92: #{mlp_forward.1} parent=1 // pred_region
      %214 = dma.done [#allocation12], 16384
    $region93: #{mlp_forward.1} parent=1 // pred_fallthru
      _
    // Predicated region
    $region94: #{mlp_forward.1} parent=1 // pred_check
      _
    $region95: #{mlp_forward.1} parent=1 // pred_check_branch
      %216 = sbr.rel (0) target = $region97
    $region96: #{mlp_forward.1} parent=1 // pred_region
      %217 = dma.done [#allocation15], 64
    $region97: #{mlp_forward.1} parent=1 // pred_fallthru
      _
    // Predicated region
    $region98: #{mlp_forward.1} parent=1 // pred_check
      _
    $region99: #{mlp_forward.1} parent=1 // pred_check_branch
      %219 = sbr.rel (0) target = $region101
    $region100: #{mlp_forward.1} parent=1 // pred_region
      %220 = dma.done [#allocation15], 4096
    $region101: #{mlp_forward.1} parent=1 // pred_fallthru
      _
    // Predicated region
    $region102: #{mlp_forward.1} parent=1 // pred_check
      _
    $region103: #{mlp_forward.1} parent=1 // pred_check_branch
      %222 = sbr.rel (0) target = $region105
    $region104: #{mlp_forward.1} parent=1 // pred_region
      %223 = dma.done [#allocation18], 16
    $region105: #{mlp_forward.1} parent=1 // pred_fallthru
      _
    // Predicated region
    $region106: #{mlp_forward.1} parent=1 // pred_check
      _
    $region107: #{mlp_forward.1} parent=1 // pred_check_branch
      %225 = sbr.rel (0) target = $region109
    $region108: #{mlp_forward.1} parent=1 // pred_region
      %226 = dma.done [#allocation18], 1024
    $region109: #{mlp_forward.1} parent=1 // pred_fallthru
      _
    // Predicated region
    $region110: #{mlp_forward.1} parent=1 // pred_check
      _
    $region111: #{mlp_forward.1} parent=1 // pred_check_branch
      %228 = sbr.rel (0) target = $region113
    $region112: #{mlp_forward.1} parent=1 // pred_region
      %229 = dma.done [#allocation21], 16
    $region113: #{mlp_forward.1} parent=1 // pred_fallthru
      _
    // Predicated region
    $region114: #{mlp_forward.1} parent=1 // pred_check
      _
    $region115: #{mlp_forward.1} parent=1 // pred_check_branch
      %231 = sbr.rel (0) target = $region117
    $region116: #{mlp_forward.1} parent=1 // pred_region
      %232 = dma.done [#allocation21], 1024
    $region117: #{mlp_forward.1} parent=1 // pred_fallthru
      _
    // Predicated region
    $region118: #{mlp_forward.1} parent=1 // pred_check
      _
    $region119: #{mlp_forward.1} parent=1 // pred_check_branch
      %234 = sbr.rel (0) target = $region121
    $region120: #{mlp_forward.1} parent=1 // pred_region
      %235 = dma.done [#allocation24], 16
    $region121: #{mlp_forward.1} parent=1 // pred_fallthru
      _
    // Predicated region
    $region122: #{mlp_forward.1} parent=1 // pred_check
      _
    $region123: #{mlp_forward.1} parent=1 // pred_check_branch
      %237 = sbr.rel (0) target = $region125
    $region124: #{mlp_forward.1} parent=1 // pred_region
      %238 = dma.done [#allocation4], 16
    $region125: #{mlp_forward.1} parent=1 // pred_fallthru
      _
    %239 = sfence
    %v241 = vld [vmem:[%s0] sm:$0xf]
    %v242 = vld [vmem:[#allocation2] sm:$0xff]
    %v243 = vld [vmem:[#allocation2 + $0x8] sm:$0xff]
    %v244 = vld [vmem:[#allocation2 + $0x10] sm:$0xff]
    %v245 = vld [vmem:[#allocation2 + $0x18] sm:$0xff]
    %v246 = vld [vmem:[#allocation2 + $0x20] sm:$0xff]
    %v247 = vld [vmem:[#allocation2 + $0x28] sm:$0xff]
    %v248 = vld [vmem:[#allocation2 + $0x30] sm:$0xff]
    %v249 = vld [vmem:[#allocation2 + $0x38] sm:$0xff]
    %v250 = vld [vmem:[#allocation2 + $0x40] sm:$0xff]
    %v251 = vld [vmem:[#allocation2 + $0x48] sm:$0xff]
    %v252 = vld [vmem:[#allocation2 + $0x50] sm:$0xff]
    %v253 = vld [vmem:[#allocation2 + $0x58] sm:$0xff]
    %v254 = vld [vmem:[#allocation2 + $0x60] sm:$0xff]
    %v255 = vld [vmem:[#allocation2 + $0x68] sm:$0xff]
    %v256 = vld [vmem:[#allocation2 + $0x70] sm:$0xff]
    %v257 = vld [vmem:[#allocation2 + $0x78] sm:$0xff]
    %v258 = vld [vmem:[#allocation2 + $0x80] sm:$0xff]
    %v259 = vld [vmem:[#allocation2 + $0x88] sm:$0xff]
    %v260 = vld [vmem:[#allocation2 + $0x90] sm:$0xff]
    %v261 = vld [vmem:[#allocation2 + $0x98] sm:$0xff]
    %v262 = vld [vmem:[#allocation2 + $0xa0] sm:$0xff]
    %v263 = vld [vmem:[#allocation2 + $0xa8] sm:$0xff]
    %v264 = vld [vmem:[#allocation2 + $0xb0] sm:$0xff]
    %v265 = vld [vmem:[#allocation2 + $0xb8] sm:$0xff]
    %v266 = vld [vmem:[#allocation2 + $0xc0] sm:$0xff]
    %v267 = vld [vmem:[#allocation2 + $0xc8] sm:$0xff]
    %v268 = vld [vmem:[#allocation2 + $0xd0] sm:$0xff]
    %v269 = vld [vmem:[#allocation2 + $0xd8] sm:$0xff]
    %v270 = vld [vmem:[#allocation2 + $0xe0] sm:$0xff]
    %v271 = vld [vmem:[#allocation2 + $0xe8] sm:$0xff]
    %v272 = vld [vmem:[#allocation2 + $0xf0] sm:$0xff]
    %v273 = vld [vmem:[#allocation2 + $0xf8] sm:$0xff]
    %v274 = vld [vmem:[#allocation2 + $0x100] sm:$0xff]
    %v275 = vld [vmem:[#allocation2 + $0x108] sm:$0xff]
    %v276 = vld [vmem:[#allocation2 + $0x110] sm:$0xff]
    %v277 = vld [vmem:[#allocation2 + $0x118] sm:$0xff]
    %v278 = vld [vmem:[#allocation2 + $0x120] sm:$0xff]
    %v279 = vld [vmem:[#allocation2 + $0x128] sm:$0xff]
    %v280 = vld [vmem:[#allocation2 + $0x130] sm:$0xff]
    %v281 = vld [vmem:[#allocation2 + $0x138] sm:$0xff]
    %v282 = vld [vmem:[#allocation2 + $0x140] sm:$0xff]
    %v283 = vld [vmem:[#allocation2 + $0x148] sm:$0xff]
    %v284 = vld [vmem:[#allocation2 + $0x150] sm:$0xff]
    %v285 = vld [vmem:[#allocation2 + $0x158] sm:$0xff]
    %v286 = vld [vmem:[#allocation2 + $0x160] sm:$0xff]
    %v287 = vld [vmem:[#allocation2 + $0x168] sm:$0xff]
    %v288 = vld [vmem:[#allocation2 + $0x170] sm:$0xff]
    %v289 = vld [vmem:[#allocation2 + $0x178] sm:$0xff]
    %v290 = vld [vmem:[#allocation2 + $0x180] sm:$0xff]
    %v291 = vld [vmem:[#allocation2 + $0x188] sm:$0xff]
    %v292 = vld [vmem:[#allocation2 + $0x190] sm:$0xff]
    %v293 = vld [vmem:[#allocation2 + $0x198] sm:$0xff]
    %v294 = vld [vmem:[#allocation2 + $0x1a0] sm:$0xff]
    %v295 = vld [vmem:[#allocation2 + $0x1a8] sm:$0xff]
    %v296 = vld [vmem:[#allocation2 + $0x1b0] sm:$0xff]
    %v297 = vld [vmem:[#allocation2 + $0x1b8] sm:$0xff]
    %v298 = vld [vmem:[#allocation2 + $0x1c0] sm:$0xff]
    %v299 = vld [vmem:[#allocation2 + $0x1c8] sm:$0xff]
    %v300 = vld [vmem:[#allocation2 + $0x1d0] sm:$0xff]
    %v301 = vld [vmem:[#allocation2 + $0x1d8] sm:$0xff]
    %v302 = vld [vmem:[#allocation2 + $0x1e0] sm:$0xff]
    %v303 = vld [vmem:[#allocation2 + $0x1e8] sm:$0xff]
    %v304 = vld [vmem:[#allocation2 + $0x1f0] sm:$0xff]
    %v305 = vld [vmem:[#allocation2 + $0x1f8] sm:$0xff]
    %v306 = vld [vmem:[#allocation5] sm:$0xff]
    %v308 = vlaneseq
    %v309 = vshrl.u32 %v308, 7
    %v310 = vsub.s32 0, %v309
    %v311 = vrot.slane %v306, %v310
    %v312 = vlaneseq
    %v313 = vshrl.u32 %v312, 7
    %v314 = vsub.s32 1, %v313
    %v315 = vrot.slane %v306, %v314
    %v316 = vlaneseq
    %v317 = vshrl.u32 %v316, 7
    %v318 = vsub.s32 2, %v317
    %v319 = vrot.slane %v306, %v318
    %v320 = vlaneseq
    %v321 = vshrl.u32 %v320, 7
    %v322 = vsub.s32 3, %v321
    %v323 = vrot.slane %v306, %v322
    %v324 = vlaneseq
    %v325 = vshrl.u32 %v324, 7
    %v326 = vsub.s32 4, %v325
    %v327 = vrot.slane %v306, %v326
    %v328 = vlaneseq
    %v329 = vshrl.u32 %v328, 7
    %v330 = vsub.s32 5, %v329
    %v331 = vrot.slane %v306, %v330
    %v332 = vlaneseq
    %v333 = vshrl.u32 %v332, 7
    %v334 = vsub.s32 6, %v333
    %v335 = vrot.slane %v306, %v334
    %v336 = vlaneseq
    %v337 = vshrl.u32 %v336, 7
    %v338 = vsub.s32 7, %v337
    %v339 = vrot.slane %v306, %v338
    %v412 = vunpack.c.l.b16 %v242
    %v413 = vunpack.c.h.b16 %v242
    %v414 = vunpack.c.l.b16 %v243
    %v415 = vunpack.c.h.b16 %v243
    %v416 = vunpack.c.l.b16 %v244
    %v417 = vunpack.c.h.b16 %v244
    %v418 = vunpack.c.l.b16 %v245
    %v419 = vunpack.c.h.b16 %v245
    %v420 = vunpack.c.l.b16 %v246
    %v421 = vunpack.c.h.b16 %v246
    %v422 = vunpack.c.l.b16 %v247
    %v423 = vunpack.c.h.b16 %v247
    %v424 = vunpack.c.l.b16 %v248
    %v425 = vunpack.c.h.b16 %v248
    %v426 = vunpack.c.l.b16 %v249
    %v427 = vunpack.c.h.b16 %v249
    %v428 = vunpack.c.l.b16 %v250
    %v429 = vunpack.c.h.b16 %v250
    %v430 = vunpack.c.l.b16 %v251
    %v431 = vunpack.c.h.b16 %v251
    %v432 = vunpack.c.l.b16 %v252
    %v433 = vunpack.c.h.b16 %v252
    %v434 = vunpack.c.l.b16 %v253
    %v435 = vunpack.c.h.b16 %v253
    %v436 = vunpack.c.l.b16 %v254
    %v437 = vunpack.c.h.b16 %v254
    %v438 = vunpack.c.l.b16 %v255
    %v439 = vunpack.c.h.b16 %v255
    %v440 = vunpack.c.l.b16 %v256
    %v441 = vunpack.c.h.b16 %v256
    %v442 = vunpack.c.l.b16 %v257
    %v443 = vunpack.c.h.b16 %v257
    %v444 = vunpack.c.l.b16 %v258
    %v445 = vunpack.c.h.b16 %v258
    %v446 = vunpack.c.l.b16 %v259
    %v447 = vunpack.c.h.b16 %v259
    %v448 = vunpack.c.l.b16 %v260
    %v449 = vunpack.c.h.b16 %v260
    %v450 = vunpack.c.l.b16 %v261
    %v451 = vunpack.c.h.b16 %v261
    %v452 = vunpack.c.l.b16 %v262
    %v453 = vunpack.c.h.b16 %v262
    %v454 = vunpack.c.l.b16 %v263
    %v455 = vunpack.c.h.b16 %v263
    %v456 = vunpack.c.l.b16 %v264
    %v457 = vunpack.c.h.b16 %v264
    %v458 = vunpack.c.l.b16 %v265
    %v459 = vunpack.c.h.b16 %v265
    %v460 = vunpack.c.l.b16 %v266
    %v461 = vunpack.c.h.b16 %v266
    %v462 = vunpack.c.l.b16 %v267
    %v463 = vunpack.c.h.b16 %v267
    %v464 = vunpack.c.l.b16 %v268
    %v465 = vunpack.c.h.b16 %v268
    %v466 = vunpack.c.l.b16 %v269
    %v467 = vunpack.c.h.b16 %v269
    %v468 = vunpack.c.l.b16 %v270
    %v469 = vunpack.c.h.b16 %v270
    %v470 = vunpack.c.l.b16 %v271
    %v471 = vunpack.c.h.b16 %v271
    %v472 = vunpack.c.l.b16 %v272
    %v473 = vunpack.c.h.b16 %v272
    %v474 = vunpack.c.l.b16 %v273
    %v475 = vunpack.c.h.b16 %v273
    %v476 = vunpack.c.l.b16 %v274
    %v477 = vunpack.c.h.b16 %v274
    %v478 = vunpack.c.l.b16 %v275
    %v479 = vunpack.c.h.b16 %v275
    %v480 = vunpack.c.l.b16 %v276
    %v481 = vunpack.c.h.b16 %v276
    %v482 = vunpack.c.l.b16 %v277
    %v483 = vunpack.c.h.b16 %v277
    %v484 = vunpack.c.l.b16 %v278
    %v485 = vunpack.c.h.b16 %v278
    %v486 = vunpack.c.l.b16 %v279
    %v487 = vunpack.c.h.b16 %v279
    %v488 = vunpack.c.l.b16 %v280
    %v489 = vunpack.c.h.b16 %v280
    %v490 = vunpack.c.l.b16 %v281
    %v491 = vunpack.c.h.b16 %v281
    %v492 = vunpack.c.l.b16 %v282
    %v493 = vunpack.c.h.b16 %v282
    %v494 = vunpack.c.l.b16 %v283
    %v495 = vunpack.c.h.b16 %v283
    %v496 = vunpack.c.l.b16 %v284
    %v497 = vunpack.c.h.b16 %v284
    %v498 = vunpack.c.l.b16 %v285
    %v499 = vunpack.c.h.b16 %v285
    %v500 = vunpack.c.l.b16 %v286
    %v501 = vunpack.c.h.b16 %v286
    %v502 = vunpack.c.l.b16 %v287
    %v503 = vunpack.c.h.b16 %v287
    %v504 = vunpack.c.l.b16 %v288
    %v505 = vunpack.c.h.b16 %v288
    %v506 = vunpack.c.l.b16 %v289
    %v507 = vunpack.c.h.b16 %v289
    %v508 = vunpack.c.l.b16 %v290
    %v509 = vunpack.c.h.b16 %v290
    %v510 = vunpack.c.l.b16 %v291
    %v511 = vunpack.c.h.b16 %v291
    %v512 = vunpack.c.l.b16 %v292
    %v513 = vunpack.c.h.b16 %v292
    %v514 = vunpack.c.l.b16 %v293
    %v515 = vunpack.c.h.b16 %v293
    %v516 = vunpack.c.l.b16 %v294
    %v517 = vunpack.c.h.b16 %v294
    %v518 = vunpack.c.l.b16 %v295
    %v519 = vunpack.c.h.b16 %v295
    %v520 = vunpack.c.l.b16 %v296
    %v521 = vunpack.c.h.b16 %v296
    %v522 = vunpack.c.l.b16 %v297
    %v523 = vunpack.c.h.b16 %v297
    %v524 = vunpack.c.l.b16 %v298
    %v525 = vunpack.c.h.b16 %v298
    %v526 = vunpack.c.l.b16 %v299
    %v527 = vunpack.c.h.b16 %v299
    %v528 = vunpack.c.l.b16 %v300
    %v529 = vunpack.c.h.b16 %v300
    %v530 = vunpack.c.l.b16 %v301
    %v531 = vunpack.c.h.b16 %v301
    %v532 = vunpack.c.l.b16 %v302
    %v533 = vunpack.c.h.b16 %v302
    %v534 = vunpack.c.l.b16 %v303
    %v535 = vunpack.c.h.b16 %v303
    %v536 = vunpack.c.l.b16 %v304
    %v537 = vunpack.c.h.b16 %v304
    %v538 = vunpack.c.l.b16 %v305
    %v539 = vunpack.c.h.b16 %v305
    %v540 = vpack.c.b16 %v420, %v412
    %v541 = vpack.c.b16 %v421, %v413
    %v542 = vpack.c.b16 %v422, %v414
    %v543 = vpack.c.b16 %v423, %v415
    %v544 = vpack.c.b16 %v424, %v416
    %v545 = vpack.c.b16 %v425, %v417
    %v546 = vpack.c.b16 %v426, %v418
    %v547 = vpack.c.b16 %v427, %v419
    %v548 = vpack.c.b16 %v436, %v428
    %v549 = vpack.c.b16 %v437, %v429
    %v550 = vpack.c.b16 %v438, %v430
    %v551 = vpack.c.b16 %v439, %v431
    %v552 = vpack.c.b16 %v440, %v432
    %v553 = vpack.c.b16 %v441, %v433
    %v554 = vpack.c.b16 %v442, %v434
    %v555 = vpack.c.b16 %v443, %v435
    %v556 = vpack.c.b16 %v452, %v444
    %v557 = vpack.c.b16 %v453, %v445
    %v558 = vpack.c.b16 %v454, %v446
    %v559 = vpack.c.b16 %v455, %v447
    %v560 = vpack.c.b16 %v456, %v448
    %v561 = vpack.c.b16 %v457, %v449
    %v562 = vpack.c.b16 %v458, %v450
    %v563 = vpack.c.b16 %v459, %v451
    %v564 = vpack.c.b16 %v468, %v460
    %v565 = vpack.c.b16 %v469, %v461
    %v566 = vpack.c.b16 %v470, %v462
    %v567 = vpack.c.b16 %v471, %v463
    %v568 = vpack.c.b16 %v472, %v464
    %v569 = vpack.c.b16 %v473, %v465
    %v570 = vpack.c.b16 %v474, %v466
    %v571 = vpack.c.b16 %v475, %v467
    %v572 = vpack.c.b16 %v484, %v476
    %v573 = vpack.c.b16 %v485, %v477
    %v574 = vpack.c.b16 %v486, %v478
    %v575 = vpack.c.b16 %v487, %v479
    %v576 = vpack.c.b16 %v488, %v480
    %v577 = vpack.c.b16 %v489, %v481
    %v578 = vpack.c.b16 %v490, %v482
    %v579 = vpack.c.b16 %v491, %v483
    %v580 = vpack.c.b16 %v500, %v492
    %v581 = vpack.c.b16 %v501, %v493
    %v582 = vpack.c.b16 %v502, %v494
    %v583 = vpack.c.b16 %v503, %v495
    %v584 = vpack.c.b16 %v504, %v496
    %v585 = vpack.c.b16 %v505, %v497
    %v586 = vpack.c.b16 %v506, %v498
    %v587 = vpack.c.b16 %v507, %v499
    %v588 = vpack.c.b16 %v516, %v508
    %v589 = vpack.c.b16 %v517, %v509
    %v590 = vpack.c.b16 %v518, %v510
    %v591 = vpack.c.b16 %v519, %v511
    %v592 = vpack.c.b16 %v520, %v512
    %v593 = vpack.c.b16 %v521, %v513
    %v594 = vpack.c.b16 %v522, %v514
    %v595 = vpack.c.b16 %v523, %v515
    %v596 = vpack.c.b16 %v532, %v524
    %v597 = vpack.c.b16 %v533, %v525
    %v598 = vpack.c.b16 %v534, %v526
    %v599 = vpack.c.b16 %v535, %v527
    %v600 = vpack.c.b16 %v536, %v528
    %v601 = vpack.c.b16 %v537, %v529
    %v602 = vpack.c.b16 %v538, %v530
    %v603 = vpack.c.b16 %v539, %v531
    %668 = vmatprep.subr.bf16.mxu0 %v541
    %669 = vmatpush1.bf16.msra.mxu0 %v540
    %670 = vmatprep.subr.bf16.mxu0 %v549
    %671 = vmatpush1.bf16.msra.mxu0 %v548
    %672 = vmatprep.subr.bf16.mxu0 %v557
    %673 = vmatpush1.bf16.msra.mxu0 %v556
    %674 = vmatprep.subr.bf16.mxu0 %v565
    %675 = vmatpush1.bf16.msra.mxu0 %v564
    %676 = vmatprep.subr.bf16.mxu0 %v573
    %677 = vmatpush1.bf16.msra.mxu0 %v572
    %678 = vmatprep.subr.bf16.mxu0 %v581
    %679 = vmatpush1.bf16.msra.mxu0 %v580
    %680 = vmatprep.subr.bf16.mxu0 %v589
    %681 = vmatpush1.bf16.msra.mxu0 %v588
    %682 = vmatprep.subr.bf16.mxu0 %v597
    %683 = vmatpush1.bf16.msra.mxu0 %v596
    %684 = vmatprep.subr.bf16.mxu0 0
    %685 = vmatpush1.bf16.msra.mxu0 0
    %686 = vmatprep.subr.bf16.mxu0 0
    %687 = vmatpush1.bf16.msra.mxu0 0
    %688 = vmatprep.subr.bf16.mxu0 0
    %689 = vmatpush1.bf16.msra.mxu0 0
    %690 = vmatprep.subr.bf16.mxu0 0
    %691 = vmatpush1.bf16.msra.mxu0 0
    %692 = vmatprep.subr.bf16.mxu0 0
    %693 = vmatpush1.bf16.msra.mxu0 0
    %694 = vmatprep.subr.bf16.mxu0 0
    %695 = vmatpush1.bf16.msra.mxu0 0
    %696 = vmatprep.subr.bf16.mxu0 0
    %697 = vmatpush1.bf16.msra.mxu0 0
    %698 = vmatprep.subr.bf16.mxu0 0
    %699 = vmatpush1.bf16.msra.mxu0 0
    %700 = vmatprep.mubr.bf16.mxu0 0
    %701 = vmatmul.mubr.bf16.gmra.mrb[0].mxu0 %v241
    %v702 = vpop.f32.mrb[0].mxu0
    %v703 = vadd.f32 %v311, %v702
    %v704 = vpop.f32.mrb[0].mxu0
    %v705 = vadd.f32 %v315, %v704
    %v706 = vpop.f32.mrb[0].mxu0
    %v707 = vpop.f32.mrb[0].mxu0
    %708 = vdwg.mxu0
    %709 = vmatprep.subr.bf16.mxu0 %v543
    %710 = vmatpush1.bf16.msra.mxu0 %v542
    %711 = vmatprep.subr.bf16.mxu0 %v551
    %712 = vmatpush1.bf16.msra.mxu0 %v550
    %713 = vmatprep.subr.bf16.mxu0 %v559
    %714 = vmatpush1.bf16.msra.mxu0 %v558
    %715 = vmatprep.subr.bf16.mxu0 %v567
    %716 = vmatpush1.bf16.msra.mxu0 %v566
    %717 = vmatprep.subr.bf16.mxu0 %v575
    %718 = vmatpush1.bf16.msra.mxu0 %v574
    %719 = vmatprep.subr.bf16.mxu0 %v583
    %720 = vmatpush1.bf16.msra.mxu0 %v582
    %721 = vmatprep.subr.bf16.mxu0 %v591
    %722 = vmatpush1.bf16.msra.mxu0 %v590
    %723 = vmatprep.subr.bf16.mxu0 %v599
    %724 = vmatpush1.bf16.msra.mxu0 %v598
    %725 = vmatprep.subr.bf16.mxu0 0
    %726 = vmatpush1.bf16.msra.mxu0 0
    %727 = vmatprep.subr.bf16.mxu0 0
    %728 = vmatpush1.bf16.msra.mxu0 0
    %729 = vmatprep.subr.bf16.mxu0 0
    %730 = vmatpush1.bf16.msra.mxu0 0
    %731 = vmatprep.subr.bf16.mxu0 0
    %732 = vmatpush1.bf16.msra.mxu0 0
    %733 = vmatprep.subr.bf16.mxu0 0
    %734 = vmatpush1.bf16.msra.mxu0 0
    %735 = vmatprep.subr.bf16.mxu0 0
    %736 = vmatpush1.bf16.msra.mxu0 0
    %737 = vmatprep.subr.bf16.mxu0 0
    %738 = vmatpush1.bf16.msra.mxu0 0
    %739 = vmatprep.subr.bf16.mxu0 0
    %740 = vmatpush1.bf16.msra.mxu0 0
    %741 = vmatprep.mubr.bf16.mxu0 0
    %742 = vmatmul.mubr.bf16.gmra.mrb[0].mxu0 %v241
    %v743 = vpop.f32.mrb[0].mxu0
    %v744 = vadd.f32 %v319, %v743
    %v745 = vpop.f32.mrb[0].mxu0
    %v746 = vadd.f32 %v323, %v745
    %v747 = vpop.f32.mrb[0].mxu0
    %v748 = vpop.f32.mrb[0].mxu0
    %749 = vdwg.mxu0
    %750 = vmatprep.subr.bf16.mxu0 %v545
    %751 = vmatpush1.bf16.msra.mxu0 %v544
    %752 = vmatprep.subr.bf16.mxu0 %v553
    %753 = vmatpush1.bf16.msra.mxu0 %v552
    %754 = vmatprep.subr.bf16.mxu0 %v561
    %755 = vmatpush1.bf16.msra.mxu0 %v560
    %756 = vmatprep.subr.bf16.mxu0 %v569
    %757 = vmatpush1.bf16.msra.mxu0 %v568
    %758 = vmatprep.subr.bf16.mxu0 %v577
    %759 = vmatpush1.bf16.msra.mxu0 %v576
    %760 = vmatprep.subr.bf16.mxu0 %v585
    %761 = vmatpush1.bf16.msra.mxu0 %v584
    %762 = vmatprep.subr.bf16.mxu0 %v593
    %763 = vmatpush1.bf16.msra.mxu0 %v592
    %764 = vmatprep.subr.bf16.mxu0 %v601
    %765 = vmatpush1.bf16.msra.mxu0 %v600
    %766 = vmatprep.subr.bf16.mxu0 0
    %767 = vmatpush1.bf16.msra.mxu0 0
    %768 = vmatprep.subr.bf16.mxu0 0
    %769 = vmatpush1.bf16.msra.mxu0 0
    %770 = vmatprep.subr.bf16.mxu0 0
    %771 = vmatpush1.bf16.msra.mxu0 0
    %772 = vmatprep.subr.bf16.mxu0 0
    %773 = vmatpush1.bf16.msra.mxu0 0
    %774 = vmatprep.subr.bf16.mxu0 0
    %775 = vmatpush1.bf16.msra.mxu0 0
    %776 = vmatprep.subr.bf16.mxu0 0
    %777 = vmatpush1.bf16.msra.mxu0 0
    %778 = vmatprep.subr.bf16.mxu0 0
    %779 = vmatpush1.bf16.msra.mxu0 0
    %780 = vmatprep.subr.bf16.mxu0 0
    %781 = vmatpush1.bf16.msra.mxu0 0
    %782 = vmatprep.mubr.bf16.mxu0 0
    %783 = vmatmul.mubr.bf16.gmra.mrb[0].mxu0 %v241
    %v784 = vpop.f32.mrb[0].mxu0
    %v785 = vadd.f32 %v327, %v784
    %v786 = vpop.f32.mrb[0].mxu0
    %v787 = vadd.f32 %v331, %v786
    %v788 = vpop.f32.mrb[0].mxu0
    %v789 = vpop.f32.mrb[0].mxu0
    %790 = vdwg.mxu0
    %791 = vmatprep.subr.bf16.mxu0 %v547
    %792 = vmatpush1.bf16.msra.mxu0 %v546
    %793 = vmatprep.subr.bf16.mxu0 %v555
    %794 = vmatpush1.bf16.msra.mxu0 %v554
    %795 = vmatprep.subr.bf16.mxu0 %v563
    %796 = vmatpush1.bf16.msra.mxu0 %v562
    %797 = vmatprep.subr.bf16.mxu0 %v571
    %798 = vmatpush1.bf16.msra.mxu0 %v570
    %799 = vmatprep.subr.bf16.mxu0 %v579
    %800 = vmatpush1.bf16.msra.mxu0 %v578
    %801 = vmatprep.subr.bf16.mxu0 %v587
    %802 = vmatpush1.bf16.msra.mxu0 %v586
    %803 = vmatprep.subr.bf16.mxu0 %v595
    %804 = vmatpush1.bf16.msra.mxu0 %v594
    %805 = vmatprep.subr.bf16.mxu0 %v603
    %806 = vmatpush1.bf16.msra.mxu0 %v602
    %807 = vmatprep.subr.bf16.mxu0 0
    %808 = vmatpush1.bf16.msra.mxu0 0
    %809 = vmatprep.subr.bf16.mxu0 0
    %810 = vmatpush1.bf16.msra.mxu0 0
    %811 = vmatprep.subr.bf16.mxu0 0
    %812 = vmatpush1.bf16.msra.mxu0 0
    %813 = vmatprep.subr.bf16.mxu0 0
    %814 = vmatpush1.bf16.msra.mxu0 0
    %815 = vmatprep.subr.bf16.mxu0 0
    %816 = vmatpush1.bf16.msra.mxu0 0
    %817 = vmatprep.subr.bf16.mxu0 0
    %818 = vmatpush1.bf16.msra.mxu0 0
    %819 = vmatprep.subr.bf16.mxu0 0
    %820 = vmatpush1.bf16.msra.mxu0 0
    %821 = vmatprep.subr.bf16.mxu0 0
    %822 = vmatpush1.bf16.msra.mxu0 0
    %823 = vmatprep.mubr.bf16.mxu0 0
    %824 = vmatmul.mubr.bf16.gmra.mrb[0].mxu0 %v241
    %v825 = vpop.f32.mrb[0].mxu0
    %v826 = vadd.f32 %v335, %v825
    %v827 = vpop.f32.mrb[0].mxu0
    %v828 = vadd.f32 %v339, %v827
    %v829 = vpop.f32.mrb[0].mxu0
    %v830 = vpop.f32.mrb[0].mxu0
    %831 = vdwg.mxu0
    %s832 = sld [smem:[#allocation25]]
    %vm833 = vcmp.ge.f32.partialorder %v703, 0.0
    %vm834 = vcmp.ge.f32.partialorder %v705, 0.0
    %vm835 = vcmp.ge.f32.partialorder %v744, 0.0
    %vm836 = vcmp.ge.f32.partialorder %v746, 0.0
    %vm837 = vcmp.ge.f32.partialorder %v785, 0.0
    %vm838 = vcmp.ge.f32.partialorder %v787, 0.0
    %vm839 = vcmp.ge.f32.partialorder %v826, 0.0
    %vm840 = vcmp.ge.f32.partialorder %v828, 0.0
    %v841 = vstv %s832
    %v842 = vmul.f32 %v841, %v703
    %v843 = vmul.f32 %v841, %v705
    %v844 = vmul.f32 %v841, %v744
    %v845 = vmul.f32 %v841, %v746
    %v846 = vmul.f32 %v841, %v785
    %v847 = vmul.f32 %v841, %v787
    %v848 = vmul.f32 %v841, %v826
    %v849 = vmul.f32 %v841, %v828
    %v850 = vsel %vm833, %v703, %v842
    %v851 = vsel %vm834, %v705, %v843
    %v852 = vsel %vm835, %v744, %v844
    %v853 = vsel %vm836, %v746, %v845
    %v854 = vsel %vm837, %v785, %v846
    %v855 = vsel %vm838, %v787, %v847
    %v856 = vsel %vm839, %v826, %v848
    %v857 = vsel %vm840, %v828, %v849
    %v858 = vpack.c.bf16 %v850, %v850
    %v859 = vpack.c.bf16 %v851, %v851
    %v860 = vpack.c.bf16 %v852, %v852
    %v861 = vpack.c.bf16 %v853, %v853
    %v862 = vpack.c.bf16 %v854, %v854
    %v863 = vpack.c.bf16 %v855, %v855
    %v864 = vpack.c.bf16 %v856, %v856
    %v865 = vpack.c.bf16 %v857, %v857
    %v866 = vld [vmem:[#allocation7] sm:$0xff]
    %v867 = vld [vmem:[#allocation7 + $0x8] sm:$0xff]
    %v868 = vld [vmem:[#allocation7 + $0x10] sm:$0xff]
    %v869 = vld [vmem:[#allocation7 + $0x18] sm:$0xff]
    %v870 = vld [vmem:[#allocation7 + $0x20] sm:$0xff]
    %v871 = vld [vmem:[#allocation7 + $0x28] sm:$0xff]
    %v872 = vld [vmem:[#allocation7 + $0x30] sm:$0xff]
    %v873 = vld [vmem:[#allocation7 + $0x38] sm:$0xff]
    %v874 = vld [vmem:[#allocation7 + $0x40] sm:$0xff]
    %v875 = vld [vmem:[#allocation7 + $0x48] sm:$0xff]
    %v876 = vld [vmem:[#allocation7 + $0x50] sm:$0xff]
    %v877 = vld [vmem:[#allocation7 + $0x58] sm:$0xff]
    %v878 = vld [vmem:[#allocation7 + $0x60] sm:$0xff]
    %v879 = vld [vmem:[#allocation7 + $0x68] sm:$0xff]
    %v880 = vld [vmem:[#allocation7 + $0x70] sm:$0xff]
    %v881 = vld [vmem:[#allocation7 + $0x78] sm:$0xff]
    %v882 = vld [vmem:[#allocation7 + $0x80] sm:$0xff]
    %v883 = vld [vmem:[#allocation7 + $0x88] sm:$0xff]
    %v884 = vld [vmem:[#allocation7 + $0x90] sm:$0xff]
    %v885 = vld [vmem:[#allocation7 + $0x98] sm:$0xff]
    %v886 = vld [vmem:[#allocation7 + $0xa0] sm:$0xff]
    %v887 = vld [vmem:[#allocation7 + $0xa8] sm:$0xff]
    %v888 = vld [vmem:[#allocation7 + $0xb0] sm:$0xff]
    %v889 = vld [vmem:[#allocation7 + $0xb8] sm:$0xff]
    %v890 = vld [vmem:[#allocation7 + $0xc0] sm:$0xff]
    %v891 = vld [vmem:[#allocation7 + $0xc8] sm:$0xff]
    %v892 = vld [vmem:[#allocation7 + $0xd0] sm:$0xff]
    %v893 = vld [vmem:[#allocation7 + $0xd8] sm:$0xff]
    %v894 = vld [vmem:[#allocation7 + $0xe0] sm:$0xff]
    %v895 = vld [vmem:[#allocation7 + $0xe8] sm:$0xff]
    %v896 = vld [vmem:[#allocation7 + $0xf0] sm:$0xff]
    %v897 = vld [vmem:[#allocation7 + $0xf8] sm:$0xff]
    %v898 = vld [vmem:[#allocation7 + $0x100] sm:$0xff]
    %v899 = vld [vmem:[#allocation7 + $0x108] sm:$0xff]
    %v900 = vld [vmem:[#allocation7 + $0x110] sm:$0xff]
    %v901 = vld [vmem:[#allocation7 + $0x118] sm:$0xff]
    %v902 = vld [vmem:[#allocation7 + $0x120] sm:$0xff]
    %v903 = vld [vmem:[#allocation7 + $0x128] sm:$0xff]
    %v904 = vld [vmem:[#allocation7 + $0x130] sm:$0xff]
    %v905 = vld [vmem:[#allocation7 + $0x138] sm:$0xff]
    %v906 = vld [vmem:[#allocation7 + $0x140] sm:$0xff]
    %v907 = vld [vmem:[#allocation7 + $0x148] sm:$0xff]
    %v908 = vld [vmem:[#allocation7 + $0x150] sm:$0xff]
    %v909 = vld [vmem:[#allocation7 + $0x158] sm:$0xff]
    %v910 = vld [vmem:[#allocation7 + $0x160] sm:$0xff]
    %v911 = vld [vmem:[#allocation7 + $0x168] sm:$0xff]
    %v912 = vld [vmem:[#allocation7 + $0x170] sm:$0xff]
    %v913 = vld [vmem:[#allocation7 + $0x178] sm:$0xff]
    %v914 = vld [vmem:[#allocation7 + $0x180] sm:$0xff]
    %v915 = vld [vmem:[#allocation7 + $0x188] sm:$0xff]
    %v916 = vld [vmem:[#allocation7 + $0x190] sm:$0xff]
    %v917 = vld [vmem:[#allocation7 + $0x198] sm:$0xff]
    %v918 = vld [vmem:[#allocation7 + $0x1a0] sm:$0xff]
    %v919 = vld [vmem:[#allocation7 + $0x1a8] sm:$0xff]
    %v920 = vld [vmem:[#allocation7 + $0x1b0] sm:$0xff]
    %v921 = vld [vmem:[#allocation7 + $0x1b8] sm:$0xff]
    %v922 = vld [vmem:[#allocation7 + $0x1c0] sm:$0xff]
    %v923 = vld [vmem:[#allocation7 + $0x1c8] sm:$0xff]
    %v924 = vld [vmem:[#allocation7 + $0x1d0] sm:$0xff]
    %v925 = vld [vmem:[#allocation7 + $0x1d8] sm:$0xff]
    %v926 = vld [vmem:[#allocation7 + $0x1e0] sm:$0xff]
    %v927 = vld [vmem:[#allocation7 + $0x1e8] sm:$0xff]
    %v928 = vld [vmem:[#allocation7 + $0x1f0] sm:$0xff]
    %v929 = vld [vmem:[#allocation7 + $0x1f8] sm:$0xff]
    %v930 = vld [vmem:[#allocation7 + $0x200] sm:$0xff]
    %v931 = vld [vmem:[#allocation7 + $0x208] sm:$0xff]
    %v932 = vld [vmem:[#allocation7 + $0x210] sm:$0xff]
    %v933 = vld [vmem:[#allocation7 + $0x218] sm:$0xff]
    %v934 = vld [vmem:[#allocation7 + $0x220] sm:$0xff]
    %v935 = vld [vmem:[#allocation7 + $0x228] sm:$0xff]
    %v936 = vld [vmem:[#allocation7 + $0x230] sm:$0xff]
    %v937 = vld [vmem:[#allocation7 + $0x238] sm:$0xff]
    %v938 = vld [vmem:[#allocation7 + $0x240] sm:$0xff]
    %v939 = vld [vmem:[#allocation7 + $0x248] sm:$0xff]
    %v940 = vld [vmem:[#allocation7 + $0x250] sm:$0xff]
    %v941 = vld [vmem:[#allocation7 + $0x258] sm:$0xff]
    %v942 = vld [vmem:[#allocation7 + $0x260] sm:$0xff]
    %v943 = vld [vmem:[#allocation7 + $0x268] sm:$0xff]
    %v944 = vld [vmem:[#allocation7 + $0x270] sm:$0xff]
    %v945 = vld [vmem:[#allocation7 + $0x278] sm:$0xff]
    %v946 = vld [vmem:[#allocation7 + $0x280] sm:$0xff]
    %v947 = vld [vmem:[#allocation7 + $0x288] sm:$0xff]
    %v948 = vld [vmem:[#allocation7 + $0x290] sm:$0xff]
    %v949 = vld [vmem:[#allocation7 + $0x298] sm:$0xff]
    %v950 = vld [vmem:[#allocation7 + $0x2a0] sm:$0xff]
    %v951 = vld [vmem:[#allocation7 + $0x2a8] sm:$0xff]
    %v952 = vld [vmem:[#allocation7 + $0x2b0] sm:$0xff]
    %v953 = vld [vmem:[#allocation7 + $0x2b8] sm:$0xff]
    %v954 = vld [vmem:[#allocation7 + $0x2c0] sm:$0xff]
    %v955 = vld [vmem:[#allocation7 + $0x2c8] sm:$0xff]
    %v956 = vld [vmem:[#allocation7 + $0x2d0] sm:$0xff]
    %v957 = vld [vmem:[#allocation7 + $0x2d8] sm:$0xff]
    %v958 = vld [vmem:[#allocation7 + $0x2e0] sm:$0xff]
    %v959 = vld [vmem:[#allocation7 + $0x2e8] sm:$0xff]
    %v960 = vld [vmem:[#allocation7 + $0x2f0] sm:$0xff]
    %v961 = vld [vmem:[#allocation7 + $0x2f8] sm:$0xff]
    %v962 = vld [vmem:[#allocation7 + $0x300] sm:$0xff]
    %v963 = vld [vmem:[#allocation7 + $0x308] sm:$0xff]
    %v964 = vld [vmem:[#allocation7 + $0x310] sm:$0xff]
    %v965 = vld [vmem:[#allocation7 + $0x318] sm:$0xff]
    %v966 = vld [vmem:[#allocation7 + $0x320] sm:$0xff]
    %v967 = vld [vmem:[#allocation7 + $0x328] sm:$0xff]
    %v968 = vld [vmem:[#allocation7 + $0x330] sm:$0xff]
    %v969 = vld [vmem:[#allocation7 + $0x338] sm:$0xff]
    %v970 = vld [vmem:[#allocation7 + $0x340] sm:$0xff]
    %v971 = vld [vmem:[#allocation7 + $0x348] sm:$0xff]
    %v972 = vld [vmem:[#allocation7 + $0x350] sm:$0xff]
    %v973 = vld [vmem:[#allocation7 + $0x358] sm:$0xff]
    %v974 = vld [vmem:[#allocation7 + $0x360] sm:$0xff]
    %v975 = vld [vmem:[#allocation7 + $0x368] sm:$0xff]
    %v976 = vld [vmem:[#allocation7 + $0x370] sm:$0xff]
    %v977 = vld [vmem:[#allocation7 + $0x378] sm:$0xff]
    %v978 = vld [vmem:[#allocation7 + $0x380] sm:$0xff]
    %v979 = vld [vmem:[#allocation7 + $0x388] sm:$0xff]
    %v980 = vld [vmem:[#allocation7 + $0x390] sm:$0xff]
    %v981 = vld [vmem:[#allocation7 + $0x398] sm:$0xff]
    %v982 = vld [vmem:[#allocation7 + $0x3a0] sm:$0xff]
    %v983 = vld [vmem:[#allocation7 + $0x3a8] sm:$0xff]
    %v984 = vld [vmem:[#allocation7 + $0x3b0] sm:$0xff]
    %v985 = vld [vmem:[#allocation7 + $0x3b8] sm:$0xff]
    %v986 = vld [vmem:[#allocation7 + $0x3c0] sm:$0xff]
    %v987 = vld [vmem:[#allocation7 + $0x3c8] sm:$0xff]
    %v988 = vld [vmem:[#allocation7 + $0x3d0] sm:$0xff]
    %v989 = vld [vmem:[#allocation7 + $0x3d8] sm:$0xff]
    %v990 = vld [vmem:[#allocation7 + $0x3e0] sm:$0xff]
    %v991 = vld [vmem:[#allocation7 + $0x3e8] sm:$0xff]
    %v992 = vld [vmem:[#allocation7 + $0x3f0] sm:$0xff]
    %v993 = vld [vmem:[#allocation7 + $0x3f8] sm:$0xff]
    %v994 = vld [vmem:[#allocation7 + $0x400] sm:$0xff]
    %v995 = vld [vmem:[#allocation7 + $0x408] sm:$0xff]
    %v996 = vld [vmem:[#allocation7 + $0x410] sm:$0xff]
    %v997 = vld [vmem:[#allocation7 + $0x418] sm:$0xff]
    %v998 = vld [vmem:[#allocation7 + $0x420] sm:$0xff]
    %v999 = vld [vmem:[#allocation7 + $0x428] sm:$0xff]
    %v1000 = vld [vmem:[#allocation7 + $0x430] sm:$0xff]
    %v1001 = vld [vmem:[#allocation7 + $0x438] sm:$0xff]
    %v1002 = vld [vmem:[#allocation7 + $0x440] sm:$0xff]
    %v1003 = vld [vmem:[#allocation7 + $0x448] sm:$0xff]
    %v1004 = vld [vmem:[#allocation7 + $0x450] sm:$0xff]
    %v1005 = vld [vmem:[#allocation7 + $0x458] sm:$0xff]
    %v1006 = vld [vmem:[#allocation7 + $0x460] sm:$0xff]
    %v1007 = vld [vmem:[#allocation7 + $0x468] sm:$0xff]
    %v1008 = vld [vmem:[#allocation7 + $0x470] sm:$0xff]
    %v1009 = vld [vmem:[#allocation7 + $0x478] sm:$0xff]
    %v1010 = vld [vmem:[#allocation7 + $0x480] sm:$0xff]
    %v1011 = vld [vmem:[#allocation7 + $0x488] sm:$0xff]
    %v1012 = vld [vmem:[#allocation7 + $0x490] sm:$0xff]
    %v1013 = vld [vmem:[#allocation7 + $0x498] sm:$0xff]
    %v1014 = vld [vmem:[#allocation7 + $0x4a0] sm:$0xff]
    %v1015 = vld [vmem:[#allocation7 + $0x4a8] sm:$0xff]
    %v1016 = vld [vmem:[#allocation7 + $0x4b0] sm:$0xff]
    %v1017 = vld [vmem:[#allocation7 + $0x4b8] sm:$0xff]
    %v1018 = vld [vmem:[#allocation7 + $0x4c0] sm:$0xff]
    %v1019 = vld [vmem:[#allocation7 + $0x4c8] sm:$0xff]
    %v1020 = vld [vmem:[#allocation7 + $0x4d0] sm:$0xff]
    %v1021 = vld [vmem:[#allocation7 + $0x4d8] sm:$0xff]
    %v1022 = vld [vmem:[#allocation7 + $0x4e0] sm:$0xff]
    %v1023 = vld [vmem:[#allocation7 + $0x4e8] sm:$0xff]
    %v1024 = vld [vmem:[#allocation7 + $0x4f0] sm:$0xff]
    %v1025 = vld [vmem:[#allocation7 + $0x4f8] sm:$0xff]
    %v1026 = vld [vmem:[#allocation7 + $0x500] sm:$0xff]
    %v1027 = vld [vmem:[#allocation7 + $0x508] sm:$0xff]
    %v1028 = vld [vmem:[#allocation7 + $0x510] sm:$0xff]
    %v1029 = vld [vmem:[#allocation7 + $0x518] sm:$0xff]
    %v1030 = vld [vmem:[#allocation7 + $0x520] sm:$0xff]
    %v1031 = vld [vmem:[#allocation7 + $0x528] sm:$0xff]
    %v1032 = vld [vmem:[#allocation7 + $0x530] sm:$0xff]
    %v1033 = vld [vmem:[#allocation7 + $0x538] sm:$0xff]
    %v1034 = vld [vmem:[#allocation7 + $0x540] sm:$0xff]
    %v1035 = vld [vmem:[#allocation7 + $0x548] sm:$0xff]
    %v1036 = vld [vmem:[#allocation7 + $0x550] sm:$0xff]
    %v1037 = vld [vmem:[#allocation7 + $0x558] sm:$0xff]
    %v1038 = vld [vmem:[#allocation7 + $0x560] sm:$0xff]
    %v1039 = vld [vmem:[#allocation7 + $0x568] sm:$0xff]
    %v1040 = vld [vmem:[#allocation7 + $0x570] sm:$0xff]
    %v1041 = vld [vmem:[#allocation7 + $0x578] sm:$0xff]
    %v1042 = vld [vmem:[#allocation7 + $0x580] sm:$0xff]
    %v1043 = vld [vmem:[#allocation7 + $0x588] sm:$0xff]
    %v1044 = vld [vmem:[#allocation7 + $0x590] sm:$0xff]
    %v1045 = vld [vmem:[#allocation7 + $0x598] sm:$0xff]
    %v1046 = vld [vmem:[#allocation7 + $0x5a0] sm:$0xff]
    %v1047 = vld [vmem:[#allocation7 + $0x5a8] sm:$0xff]
    %v1048 = vld [vmem:[#allocation7 + $0x5b0] sm:$0xff]
    %v1049 = vld [vmem:[#allocation7 + $0x5b8] sm:$0xff]
    %v1050 = vld [vmem:[#allocation7 + $0x5c0] sm:$0xff]
    %v1051 = vld [vmem:[#allocation7 + $0x5c8] sm:$0xff]
    %v1052 = vld [vmem:[#allocation7 + $0x5d0] sm:$0xff]
    %v1053 = vld [vmem:[#allocation7 + $0x5d8] sm:$0xff]
    %v1054 = vld [vmem:[#allocation7 + $0x5e0] sm:$0xff]
    %v1055 = vld [vmem:[#allocation7 + $0x5e8] sm:$0xff]
    %v1056 = vld [vmem:[#allocation7 + $0x5f0] sm:$0xff]
    %v1057 = vld [vmem:[#allocation7 + $0x5f8] sm:$0xff]
    %v1058 = vld [vmem:[#allocation7 + $0x600] sm:$0xff]
    %v1059 = vld [vmem:[#allocation7 + $0x608] sm:$0xff]
    %v1060 = vld [vmem:[#allocation7 + $0x610] sm:$0xff]
    %v1061 = vld [vmem:[#allocation7 + $0x618] sm:$0xff]
    %v1062 = vld [vmem:[#allocation7 + $0x620] sm:$0xff]
    %v1063 = vld [vmem:[#allocation7 + $0x628] sm:$0xff]
    %v1064 = vld [vmem:[#allocation7 + $0x630] sm:$0xff]
    %v1065 = vld [vmem:[#allocation7 + $0x638] sm:$0xff]
    %v1066 = vld [vmem:[#allocation7 + $0x640] sm:$0xff]
    %v1067 = vld [vmem:[#allocation7 + $0x648] sm:$0xff]
    %v1068 = vld [vmem:[#allocation7 + $0x650] sm:$0xff]
    %v1069 = vld [vmem:[#allocation7 + $0x658] sm:$0xff]
    %v1070 = vld [vmem:[#allocation7 + $0x660] sm:$0xff]
    %v1071 = vld [vmem:[#allocation7 + $0x668] sm:$0xff]
    %v1072 = vld [vmem:[#allocation7 + $0x670] sm:$0xff]
    %v1073 = vld [vmem:[#allocation7 + $0x678] sm:$0xff]
    %v1074 = vld [vmem:[#allocation7 + $0x680] sm:$0xff]
    %v1075 = vld [vmem:[#allocation7 + $0x688] sm:$0xff]
    %v1076 = vld [vmem:[#allocation7 + $0x690] sm:$0xff]
    %v1077 = vld [vmem:[#allocation7 + $0x698] sm:$0xff]
    %v1078 = vld [vmem:[#allocation7 + $0x6a0] sm:$0xff]
    %v1079 = vld [vmem:[#allocation7 + $0x6a8] sm:$0xff]
    %v1080 = vld [vmem:[#allocation7 + $0x6b0] sm:$0xff]
    %v1081 = vld [vmem:[#allocation7 + $0x6b8] sm:$0xff]
    %v1082 = vld [vmem:[#allocation7 + $0x6c0] sm:$0xff]
    %v1083 = vld [vmem:[#allocation7 + $0x6c8] sm:$0xff]
    %v1084 = vld [vmem:[#allocation7 + $0x6d0] sm:$0xff]
    %v1085 = vld [vmem:[#allocation7 + $0x6d8] sm:$0xff]
    %v1086 = vld [vmem:[#allocation7 + $0x6e0] sm:$0xff]
    %v1087 = vld [vmem:[#allocation7 + $0x6e8] sm:$0xff]
    %v1088 = vld [vmem:[#allocation7 + $0x6f0] sm:$0xff]
    %v1089 = vld [vmem:[#allocation7 + $0x6f8] sm:$0xff]
    %v1090 = vld [vmem:[#allocation7 + $0x700] sm:$0xff]
    %v1091 = vld [vmem:[#allocation7 + $0x708] sm:$0xff]
    %v1092 = vld [vmem:[#allocation7 + $0x710] sm:$0xff]
    %v1093 = vld [vmem:[#allocation7 + $0x718] sm:$0xff]
    %v1094 = vld [vmem:[#allocation7 + $0x720] sm:$0xff]
    %v1095 = vld [vmem:[#allocation7 + $0x728] sm:$0xff]
    %v1096 = vld [vmem:[#allocation7 + $0x730] sm:$0xff]
    %v1097 = vld [vmem:[#allocation7 + $0x738] sm:$0xff]
    %v1098 = vld [vmem:[#allocation7 + $0x740] sm:$0xff]
    %v1099 = vld [vmem:[#allocation7 + $0x748] sm:$0xff]
    %v1100 = vld [vmem:[#allocation7 + $0x750] sm:$0xff]
    %v1101 = vld [vmem:[#allocation7 + $0x758] sm:$0xff]
    %v1102 = vld [vmem:[#allocation7 + $0x760] sm:$0xff]
    %v1103 = vld [vmem:[#allocation7 + $0x768] sm:$0xff]
    %v1104 = vld [vmem:[#allocation7 + $0x770] sm:$0xff]
    %v1105 = vld [vmem:[#allocation7 + $0x778] sm:$0xff]
    %v1106 = vld [vmem:[#allocation7 + $0x780] sm:$0xff]
    %v1107 = vld [vmem:[#allocation7 + $0x788] sm:$0xff]
    %v1108 = vld [vmem:[#allocation7 + $0x790] sm:$0xff]
    %v1109 = vld [vmem:[#allocation7 + $0x798] sm:$0xff]
    %v1110 = vld [vmem:[#allocation7 + $0x7a0] sm:$0xff]
    %v1111 = vld [vmem:[#allocation7 + $0x7a8] sm:$0xff]
    %v1112 = vld [vmem:[#allocation7 + $0x7b0] sm:$0xff]
    %v1113 = vld [vmem:[#allocation7 + $0x7b8] sm:$0xff]
    %v1114 = vld [vmem:[#allocation7 + $0x7c0] sm:$0xff]
    %v1115 = vld [vmem:[#allocation7 + $0x7c8] sm:$0xff]
    %v1116 = vld [vmem:[#allocation7 + $0x7d0] sm:$0xff]
    %v1117 = vld [vmem:[#allocation7 + $0x7d8] sm:$0xff]
    %v1118 = vld [vmem:[#allocation7 + $0x7e0] sm:$0xff]
    %v1119 = vld [vmem:[#allocation7 + $0x7e8] sm:$0xff]
    %v1120 = vld [vmem:[#allocation7 + $0x7f0] sm:$0xff]
    %v1121 = vld [vmem:[#allocation7 + $0x7f8] sm:$0xff]
    %v1122 = vld [vmem:[#allocation7 + $0x800] sm:$0xff]
    %v1123 = vld [vmem:[#allocation7 + $0x808] sm:$0xff]
    %v1124 = vld [vmem:[#allocation7 + $0x810] sm:$0xff]
    %v1125 = vld [vmem:[#allocation7 + $0x818] sm:$0xff]
    %v1126 = vld [vmem:[#allocation7 + $0x820] sm:$0xff]
    %v1127 = vld [vmem:[#allocation7 + $0x828] sm:$0xff]
    %v1128 = vld [vmem:[#allocation7 + $0x830] sm:$0xff]
    %v1129 = vld [vmem:[#allocation7 + $0x838] sm:$0xff]
    %v1130 = vld [vmem:[#allocation7 + $0x840] sm:$0xff]
    %v1131 = vld [vmem:[#allocation7 + $0x848] sm:$0xff]
    %v1132 = vld [vmem:[#allocation7 + $0x850] sm:$0xff]
    %v1133 = vld [vmem:[#allocation7 + $0x858] sm:$0xff]
    %v1134 = vld [vmem:[#allocation7 + $0x860] sm:$0xff]
    %v1135 = vld [vmem:[#allocation7 + $0x868] sm:$0xff]
    %v1136 = vld [vmem:[#allocation7 + $0x870] sm:$0xff]
    %v1137 = vld [vmem:[#allocation7 + $0x878] sm:$0xff]
    %v1138 = vld [vmem:[#allocation7 + $0x880] sm:$0xff]
    %v1139 = vld [vmem:[#allocation7 + $0x888] sm:$0xff]
    %v1140 = vld [vmem:[#allocation7 + $0x890] sm:$0xff]
    %v1141 = vld [vmem:[#allocation7 + $0x898] sm:$0xff]
    %v1142 = vld [vmem:[#allocation7 + $0x8a0] sm:$0xff]
    %v1143 = vld [vmem:[#allocation7 + $0x8a8] sm:$0xff]
    %v1144 = vld [vmem:[#allocation7 + $0x8b0] sm:$0xff]
    %v1145 = vld [vmem:[#allocation7 + $0x8b8] sm:$0xff]
    %v1146 = vld [vmem:[#allocation7 + $0x8c0] sm:$0xff]
    %v1147 = vld [vmem:[#allocation7 + $0x8c8] sm:$0xff]
    %v1148 = vld [vmem:[#allocation7 + $0x8d0] sm:$0xff]
    %v1149 = vld [vmem:[#allocation7 + $0x8d8] sm:$0xff]
    %v1150 = vld [vmem:[#allocation7 + $0x8e0] sm:$0xff]
    %v1151 = vld [vmem:[#allocation7 + $0x8e8] sm:$0xff]
    %v1152 = vld [vmem:[#allocation7 + $0x8f0] sm:$0xff]
    %v1153 = vld [vmem:[#allocation7 + $0x8f8] sm:$0xff]
    %v1154 = vld [vmem:[#allocation7 + $0x900] sm:$0xff]
    %v1155 = vld [vmem:[#allocation7 + $0x908] sm:$0xff]
    %v1156 = vld [vmem:[#allocation7 + $0x910] sm:$0xff]
    %v1157 = vld [vmem:[#allocation7 + $0x918] sm:$0xff]
    %v1158 = vld [vmem:[#allocation7 + $0x920] sm:$0xff]
    %v1159 = vld [vmem:[#allocation7 + $0x928] sm:$0xff]
    %v1160 = vld [vmem:[#allocation7 + $0x930] sm:$0xff]
    %v1161 = vld [vmem:[#allocation7 + $0x938] sm:$0xff]
    %v1162 = vld [vmem:[#allocation7 + $0x940] sm:$0xff]
    %v1163 = vld [vmem:[#allocation7 + $0x948] sm:$0xff]
    %v1164 = vld [vmem:[#allocation7 + $0x950] sm:$0xff]
    %v1165 = vld [vmem:[#allocation7 + $0x958] sm:$0xff]
    %v1166 = vld [vmem:[#allocation7 + $0x960] sm:$0xff]
    %v1167 = vld [vmem:[#allocation7 + $0x968] sm:$0xff]
    %v1168 = vld [vmem:[#allocation7 + $0x970] sm:$0xff]
    %v1169 = vld [vmem:[#allocation7 + $0x978] sm:$0xff]
    %v1170 = vld [vmem:[#allocation7 + $0x980] sm:$0xff]
    %v1171 = vld [vmem:[#allocation7 + $0x988] sm:$0xff]
    %v1172 = vld [vmem:[#allocation7 + $0x990] sm:$0xff]
    %v1173 = vld [vmem:[#allocation7 + $0x998] sm:$0xff]
    %v1174 = vld [vmem:[#allocation7 + $0x9a0] sm:$0xff]
    %v1175 = vld [vmem:[#allocation7 + $0x9a8] sm:$0xff]
    %v1176 = vld [vmem:[#allocation7 + $0x9b0] sm:$0xff]
    %v1177 = vld [vmem:[#allocation7 + $0x9b8] sm:$0xff]
    %v1178 = vld [vmem:[#allocation7 + $0x9c0] sm:$0xff]
    %v1179 = vld [vmem:[#allocation7 + $0x9c8] sm:$0xff]
    %v1180 = vld [vmem:[#allocation7 + $0x9d0] sm:$0xff]
    %v1181 = vld [vmem:[#allocation7 + $0x9d8] sm:$0xff]
    %v1182 = vld [vmem:[#allocation7 + $0x9e0] sm:$0xff]
    %v1183 = vld [vmem:[#allocation7 + $0x9e8] sm:$0xff]
    %v1184 = vld [vmem:[#allocation7 + $0x9f0] sm:$0xff]
    %v1185 = vld [vmem:[#allocation7 + $0x9f8] sm:$0xff]
    %v1186 = vld [vmem:[#allocation7 + $0xa00] sm:$0xff]
    %v1187 = vld [vmem:[#allocation7 + $0xa08] sm:$0xff]
    %v1188 = vld [vmem:[#allocation7 + $0xa10] sm:$0xff]
    %v1189 = vld [vmem:[#allocation7 + $0xa18] sm:$0xff]
    %v1190 = vld [vmem:[#allocation7 + $0xa20] sm:$0xff]
    %v1191 = vld [vmem:[#allocation7 + $0xa28] sm:$0xff]
    %v1192 = vld [vmem:[#allocation7 + $0xa30] sm:$0xff]
    %v1193 = vld [vmem:[#allocation7 + $0xa38] sm:$0xff]
    %v1194 = vld [vmem:[#allocation7 + $0xa40] sm:$0xff]
    %v1195 = vld [vmem:[#allocation7 + $0xa48] sm:$0xff]
    %v1196 = vld [vmem:[#allocation7 + $0xa50] sm:$0xff]
    %v1197 = vld [vmem:[#allocation7 + $0xa58] sm:$0xff]
    %v1198 = vld [vmem:[#allocation7 + $0xa60] sm:$0xff]
    %v1199 = vld [vmem:[#allocation7 + $0xa68] sm:$0xff]
    %v1200 = vld [vmem:[#allocation7 + $0xa70] sm:$0xff]
    %v1201 = vld [vmem:[#allocation7 + $0xa78] sm:$0xff]
    %v1202 = vld [vmem:[#allocation7 + $0xa80] sm:$0xff]
    %v1203 = vld [vmem:[#allocation7 + $0xa88] sm:$0xff]
    %v1204 = vld [vmem:[#allocation7 + $0xa90] sm:$0xff]
    %v1205 = vld [vmem:[#allocation7 + $0xa98] sm:$0xff]
    %v1206 = vld [vmem:[#allocation7 + $0xaa0] sm:$0xff]
    %v1207 = vld [vmem:[#allocation7 + $0xaa8] sm:$0xff]
    %v1208 = vld [vmem:[#allocation7 + $0xab0] sm:$0xff]
    %v1209 = vld [vmem:[#allocation7 + $0xab8] sm:$0xff]
    %v1210 = vld [vmem:[#allocation7 + $0xac0] sm:$0xff]
    %v1211 = vld [vmem:[#allocation7 + $0xac8] sm:$0xff]
    %v1212 = vld [vmem:[#allocation7 + $0xad0] sm:$0xff]
    %v1213 = vld [vmem:[#allocation7 + $0xad8] sm:$0xff]
    %v1214 = vld [vmem:[#allocation7 + $0xae0] sm:$0xff]
    %v1215 = vld [vmem:[#allocation7 + $0xae8] sm:$0xff]
    %v1216 = vld [vmem:[#allocation7 + $0xaf0] sm:$0xff]
    %v1217 = vld [vmem:[#allocation7 + $0xaf8] sm:$0xff]
    %v1218 = vld [vmem:[#allocation7 + $0xb00] sm:$0xff]
    %v1219 = vld [vmem:[#allocation7 + $0xb08] sm:$0xff]
    %v1220 = vld [vmem:[#allocation7 + $0xb10] sm:$0xff]
    %v1221 = vld [vmem:[#allocation7 + $0xb18] sm:$0xff]
    %v1222 = vld [vmem:[#allocation7 + $0xb20] sm:$0xff]
    %v1223 = vld [vmem:[#allocation7 + $0xb28] sm:$0xff]
    %v1224 = vld [vmem:[#allocation7 + $0xb30] sm:$0xff]
    %v1225 = vld [vmem:[#allocation7 + $0xb38] sm:$0xff]
    %v1226 = vld [vmem:[#allocation7 + $0xb40] sm:$0xff]
    %v1227 = vld [vmem:[#allocation7 + $0xb48] sm:$0xff]
    %v1228 = vld [vmem:[#allocation7 + $0xb50] sm:$0xff]
    %v1229 = vld [vmem:[#allocation7 + $0xb58] sm:$0xff]
    %v1230 = vld [vmem:[#allocation7 + $0xb60] sm:$0xff]
    %v1231 = vld [vmem:[#allocation7 + $0xb68] sm:$0xff]
    %v1232 = vld [vmem:[#allocation7 + $0xb70] sm:$0xff]
    %v1233 = vld [vmem:[#allocation7 + $0xb78] sm:$0xff]
    %v1234 = vld [vmem:[#allocation7 + $0xb80] sm:$0xff]
    %v1235 = vld [vmem:[#allocation7 + $0xb88] sm:$0xff]
    %v1236 = vld [vmem:[#allocation7 + $0xb90] sm:$0xff]
    %v1237 = vld [vmem:[#allocation7 + $0xb98] sm:$0xff]
    %v1238 = vld [vmem:[#allocation7 + $0xba0] sm:$0xff]
    %v1239 = vld [vmem:[#allocation7 + $0xba8] sm:$0xff]
    %v1240 = vld [vmem:[#allocation7 + $0xbb0] sm:$0xff]
    %v1241 = vld [vmem:[#allocation7 + $0xbb8] sm:$0xff]
    %v1242 = vld [vmem:[#allocation7 + $0xbc0] sm:$0xff]
    %v1243 = vld [vmem:[#allocation7 + $0xbc8] sm:$0xff]
    %v1244 = vld [vmem:[#allocation7 + $0xbd0] sm:$0xff]
    %v1245 = vld [vmem:[#allocation7 + $0xbd8] sm:$0xff]
    %v1246 = vld [vmem:[#allocation7 + $0xbe0] sm:$0xff]
    %v1247 = vld [vmem:[#allocation7 + $0xbe8] sm:$0xff]
    %v1248 = vld [vmem:[#allocation7 + $0xbf0] sm:$0xff]
    %v1249 = vld [vmem:[#allocation7 + $0xbf8] sm:$0xff]
    %v1250 = vld [vmem:[#allocation8] sm:$0x3f]
    %v1252 = vlaneseq
    %v1253 = vshrl.u32 %v1252, 7
    %v1254 = vsub.s32 0, %v1253
    %v1255 = vrot.slane %v1250, %v1254
    %v1256 = vlaneseq
    %v1257 = vshrl.u32 %v1256, 7
    %v1258 = vsub.s32 1, %v1257
    %v1259 = vrot.slane %v1250, %v1258
    %v1260 = vlaneseq
    %v1261 = vshrl.u32 %v1260, 7
    %v1262 = vsub.s32 2, %v1261
    %v1263 = vrot.slane %v1250, %v1262
    %v1264 = vlaneseq
    %v1265 = vshrl.u32 %v1264, 7
    %v1266 = vsub.s32 3, %v1265
    %v1267 = vrot.slane %v1250, %v1266
    %v1268 = vlaneseq
    %v1269 = vshrl.u32 %v1268, 7
    %v1270 = vsub.s32 4, %v1269
    %v1271 = vrot.slane %v1250, %v1270
    %v1272 = vlaneseq
    %v1273 = vshrl.u32 %v1272, 7
    %v1274 = vsub.s32 5, %v1273
    %v1275 = vrot.slane %v1250, %v1274
    %v1666 = vunpack.c.l.b16 %v866
    %v1667 = vunpack.c.h.b16 %v866
    %v1668 = vunpack.c.l.b16 %v867
    %v1669 = vunpack.c.h.b16 %v867
    %v1670 = vunpack.c.l.b16 %v868
    %v1671 = vunpack.c.h.b16 %v868
    %v1672 = vunpack.c.l.b16 %v869
    %v1673 = vunpack.c.h.b16 %v869
    %v1674 = vunpack.c.l.b16 %v870
    %v1675 = vunpack.c.h.b16 %v870
    %v1676 = vunpack.c.l.b16 %v871
    %v1677 = vunpack.c.h.b16 %v871
    %v1678 = vunpack.c.l.b16 %v872
    %v1679 = vunpack.c.h.b16 %v872
    %v1680 = vunpack.c.l.b16 %v873
    %v1681 = vunpack.c.h.b16 %v873
    %v1682 = vunpack.c.l.b16 %v874
    %v1683 = vunpack.c.h.b16 %v874
    %v1684 = vunpack.c.l.b16 %v875
    %v1685 = vunpack.c.h.b16 %v875
    %v1686 = vunpack.c.l.b16 %v876
    %v1687 = vunpack.c.h.b16 %v876
    %v1688 = vunpack.c.l.b16 %v877
    %v1689 = vunpack.c.h.b16 %v877
    %v1690 = vunpack.c.l.b16 %v878
    %v1691 = vunpack.c.h.b16 %v878
    %v1692 = vunpack.c.l.b16 %v879
    %v1693 = vunpack.c.h.b16 %v879
    %v1694 = vunpack.c.l.b16 %v880
    %v1695 = vunpack.c.h.b16 %v880
    %v1696 = vunpack.c.l.b16 %v881
    %v1697 = vunpack.c.h.b16 %v881
    %v1698 = vunpack.c.l.b16 %v882
    %v1699 = vunpack.c.h.b16 %v882
    %v1700 = vunpack.c.l.b16 %v883
    %v1701 = vunpack.c.h.b16 %v883
    %v1702 = vunpack.c.l.b16 %v884
    %v1703 = vunpack.c.h.b16 %v884
    %v1704 = vunpack.c.l.b16 %v885
    %v1705 = vunpack.c.h.b16 %v885
    %v1706 = vunpack.c.l.b16 %v886
    %v1707 = vunpack.c.h.b16 %v886
    %v1708 = vunpack.c.l.b16 %v887
    %v1709 = vunpack.c.h.b16 %v887
    %v1710 = vunpack.c.l.b16 %v888
    %v1711 = vunpack.c.h.b16 %v888
    %v1712 = vunpack.c.l.b16 %v889
    %v1713 = vunpack.c.h.b16 %v889
    %v1714 = vunpack.c.l.b16 %v890
    %v1715 = vunpack.c.h.b16 %v890
    %v1716 = vunpack.c.l.b16 %v891
    %v1717 = vunpack.c.h.b16 %v891
    %v1718 = vunpack.c.l.b16 %v892
    %v1719 = vunpack.c.h.b16 %v892
    %v1720 = vunpack.c.l.b16 %v893
    %v1721 = vunpack.c.h.b16 %v893
    %v1722 = vunpack.c.l.b16 %v894
    %v1723 = vunpack.c.h.b16 %v894
    %v1724 = vunpack.c.l.b16 %v895
    %v1725 = vunpack.c.h.b16 %v895
    %v1726 = vunpack.c.l.b16 %v896
    %v1727 = vunpack.c.h.b16 %v896
    %v1728 = vunpack.c.l.b16 %v897
    %v1729 = vunpack.c.h.b16 %v897
    %v1730 = vunpack.c.l.b16 %v898
    %v1731 = vunpack.c.h.b16 %v898
    %v1732 = vunpack.c.l.b16 %v899
    %v1733 = vunpack.c.h.b16 %v899
    %v1734 = vunpack.c.l.b16 %v900
    %v1735 = vunpack.c.h.b16 %v900
    %v1736 = vunpack.c.l.b16 %v901
    %v1737 = vunpack.c.h.b16 %v901
    %v1738 = vunpack.c.l.b16 %v902
    %v1739 = vunpack.c.h.b16 %v902
    %v1740 = vunpack.c.l.b16 %v903
    %v1741 = vunpack.c.h.b16 %v903
    %v1742 = vunpack.c.l.b16 %v904
    %v1743 = vunpack.c.h.b16 %v904
    %v1744 = vunpack.c.l.b16 %v905
    %v1745 = vunpack.c.h.b16 %v905
    %v1746 = vunpack.c.l.b16 %v906
    %v1747 = vunpack.c.h.b16 %v906
    %v1748 = vunpack.c.l.b16 %v907
    %v1749 = vunpack.c.h.b16 %v907
    %v1750 = vunpack.c.l.b16 %v908
    %v1751 = vunpack.c.h.b16 %v908
    %v1752 = vunpack.c.l.b16 %v909
    %v1753 = vunpack.c.h.b16 %v909
    %v1754 = vunpack.c.l.b16 %v910
    %v1755 = vunpack.c.h.b16 %v910
    %v1756 = vunpack.c.l.b16 %v911
    %v1757 = vunpack.c.h.b16 %v911
    %v1758 = vunpack.c.l.b16 %v912
    %v1759 = vunpack.c.h.b16 %v912
    %v1760 = vunpack.c.l.b16 %v913
    %v1761 = vunpack.c.h.b16 %v913
    %v1762 = vunpack.c.l.b16 %v914
    %v1763 = vunpack.c.h.b16 %v914
    %v1764 = vunpack.c.l.b16 %v915
    %v1765 = vunpack.c.h.b16 %v915
    %v1766 = vunpack.c.l.b16 %v916
    %v1767 = vunpack.c.h.b16 %v916
    %v1768 = vunpack.c.l.b16 %v917
    %v1769 = vunpack.c.h.b16 %v917
    %v1770 = vunpack.c.l.b16 %v918
    %v1771 = vunpack.c.h.b16 %v918
    %v1772 = vunpack.c.l.b16 %v919
    %v1773 = vunpack.c.h.b16 %v919
    %v1774 = vunpack.c.l.b16 %v920
    %v1775 = vunpack.c.h.b16 %v920
    %v1776 = vunpack.c.l.b16 %v921
    %v1777 = vunpack.c.h.b16 %v921
    %v1778 = vunpack.c.l.b16 %v922
    %v1779 = vunpack.c.h.b16 %v922
    %v1780 = vunpack.c.l.b16 %v923
    %v1781 = vunpack.c.h.b16 %v923
    %v1782 = vunpack.c.l.b16 %v924
    %v1783 = vunpack.c.h.b16 %v924
    %v1784 = vunpack.c.l.b16 %v925
    %v1785 = vunpack.c.h.b16 %v925
    %v1786 = vunpack.c.l.b16 %v926
    %v1787 = vunpack.c.h.b16 %v926
    %v1788 = vunpack.c.l.b16 %v927
    %v1789 = vunpack.c.h.b16 %v927
    %v1790 = vunpack.c.l.b16 %v928
    %v1791 = vunpack.c.h.b16 %v928
    %v1792 = vunpack.c.l.b16 %v929
    %v1793 = vunpack.c.h.b16 %v929
    %v1794 = vunpack.c.l.b16 %v930
    %v1795 = vunpack.c.h.b16 %v930
    %v1796 = vunpack.c.l.b16 %v931
    %v1797 = vunpack.c.h.b16 %v931
    %v1798 = vunpack.c.l.b16 %v932
    %v1799 = vunpack.c.h.b16 %v932
    %v1800 = vunpack.c.l.b16 %v933
    %v1801 = vunpack.c.h.b16 %v933
    %v1802 = vunpack.c.l.b16 %v934
    %v1803 = vunpack.c.h.b16 %v934
    %v1804 = vunpack.c.l.b16 %v935
    %v1805 = vunpack.c.h.b16 %v935
    %v1806 = vunpack.c.l.b16 %v936
    %v1807 = vunpack.c.h.b16 %v936
    %v1808 = vunpack.c.l.b16 %v937
    %v1809 = vunpack.c.h.b16 %v937
    %v1810 = vunpack.c.l.b16 %v938
    %v1811 = vunpack.c.h.b16 %v938
    %v1812 = vunpack.c.l.b16 %v939
    %v1813 = vunpack.c.h.b16 %v939
    %v1814 = vunpack.c.l.b16 %v940
    %v1815 = vunpack.c.h.b16 %v940
    %v1816 = vunpack.c.l.b16 %v941
    %v1817 = vunpack.c.h.b16 %v941
    %v1818 = vunpack.c.l.b16 %v942
    %v1819 = vunpack.c.h.b16 %v942
    %v1820 = vunpack.c.l.b16 %v943
    %v1821 = vunpack.c.h.b16 %v943
    %v1822 = vunpack.c.l.b16 %v944
    %v1823 = vunpack.c.h.b16 %v944
    %v1824 = vunpack.c.l.b16 %v945
    %v1825 = vunpack.c.h.b16 %v945
    %v1826 = vunpack.c.l.b16 %v946
    %v1827 = vunpack.c.h.b16 %v946
    %v1828 = vunpack.c.l.b16 %v947
    %v1829 = vunpack.c.h.b16 %v947
    %v1830 = vunpack.c.l.b16 %v948
    %v1831 = vunpack.c.h.b16 %v948
    %v1832 = vunpack.c.l.b16 %v949
    %v1833 = vunpack.c.h.b16 %v949
    %v1834 = vunpack.c.l.b16 %v950
    %v1835 = vunpack.c.h.b16 %v950
    %v1836 = vunpack.c.l.b16 %v951
    %v1837 = vunpack.c.h.b16 %v951
    %v1838 = vunpack.c.l.b16 %v952
    %v1839 = vunpack.c.h.b16 %v952
    %v1840 = vunpack.c.l.b16 %v953
    %v1841 = vunpack.c.h.b16 %v953
    %v1842 = vunpack.c.l.b16 %v954
    %v1843 = vunpack.c.h.b16 %v954
    %v1844 = vunpack.c.l.b16 %v955
    %v1845 = vunpack.c.h.b16 %v955
    %v1846 = vunpack.c.l.b16 %v956
    %v1847 = vunpack.c.h.b16 %v956
    %v1848 = vunpack.c.l.b16 %v957
    %v1849 = vunpack.c.h.b16 %v957
    %v1850 = vunpack.c.l.b16 %v958
    %v1851 = vunpack.c.h.b16 %v958
    %v1852 = vunpack.c.l.b16 %v959
    %v1853 = vunpack.c.h.b16 %v959
    %v1854 = vunpack.c.l.b16 %v960
    %v1855 = vunpack.c.h.b16 %v960
    %v1856 = vunpack.c.l.b16 %v961
    %v1857 = vunpack.c.h.b16 %v961
    %v1858 = vunpack.c.l.b16 %v962
    %v1859 = vunpack.c.h.b16 %v962
    %v1860 = vunpack.c.l.b16 %v963
    %v1861 = vunpack.c.h.b16 %v963
    %v1862 = vunpack.c.l.b16 %v964
    %v1863 = vunpack.c.h.b16 %v964
    %v1864 = vunpack.c.l.b16 %v965
    %v1865 = vunpack.c.h.b16 %v965
    %v1866 = vunpack.c.l.b16 %v966
    %v1867 = vunpack.c.h.b16 %v966
    %v1868 = vunpack.c.l.b16 %v967
    %v1869 = vunpack.c.h.b16 %v967
    %v1870 = vunpack.c.l.b16 %v968
    %v1871 = vunpack.c.h.b16 %v968
    %v1872 = vunpack.c.l.b16 %v969
    %v1873 = vunpack.c.h.b16 %v969
    %v1874 = vunpack.c.l.b16 %v970
    %v1875 = vunpack.c.h.b16 %v970
    %v1876 = vunpack.c.l.b16 %v971
    %v1877 = vunpack.c.h.b16 %v971
    %v1878 = vunpack.c.l.b16 %v972
    %v1879 = vunpack.c.h.b16 %v972
    %v1880 = vunpack.c.l.b16 %v973
    %v1881 = vunpack.c.h.b16 %v973
    %v1882 = vunpack.c.l.b16 %v974
    %v1883 = vunpack.c.h.b16 %v974
    %v1884 = vunpack.c.l.b16 %v975
    %v1885 = vunpack.c.h.b16 %v975
    %v1886 = vunpack.c.l.b16 %v976
    %v1887 = vunpack.c.h.b16 %v976
    %v1888 = vunpack.c.l.b16 %v977
    %v1889 = vunpack.c.h.b16 %v977
    %v1890 = vunpack.c.l.b16 %v978
    %v1891 = vunpack.c.h.b16 %v978
    %v1892 = vunpack.c.l.b16 %v979
    %v1893 = vunpack.c.h.b16 %v979
    %v1894 = vunpack.c.l.b16 %v980
    %v1895 = vunpack.c.h.b16 %v980
    %v1896 = vunpack.c.l.b16 %v981
    %v1897 = vunpack.c.h.b16 %v981
    %v1898 = vunpack.c.l.b16 %v982
    %v1899 = vunpack.c.h.b16 %v982
    %v1900 = vunpack.c.l.b16 %v983
    %v1901 = vunpack.c.h.b16 %v983
    %v1902 = vunpack.c.l.b16 %v984
    %v1903 = vunpack.c.h.b16 %v984
    %v1904 = vunpack.c.l.b16 %v985
    %v1905 = vunpack.c.h.b16 %v985
    %v1906 = vunpack.c.l.b16 %v986
    %v1907 = vunpack.c.h.b16 %v986
    %v1908 = vunpack.c.l.b16 %v987
    %v1909 = vunpack.c.h.b16 %v987
    %v1910 = vunpack.c.l.b16 %v988
    %v1911 = vunpack.c.h.b16 %v988
    %v1912 = vunpack.c.l.b16 %v989
    %v1913 = vunpack.c.h.b16 %v989
    %v1914 = vunpack.c.l.b16 %v990
    %v1915 = vunpack.c.h.b16 %v990
    %v1916 = vunpack.c.l.b16 %v991
    %v1917 = vunpack.c.h.b16 %v991
    %v1918 = vunpack.c.l.b16 %v992
    %v1919 = vunpack.c.h.b16 %v992
    %v1920 = vunpack.c.l.b16 %v993
    %v1921 = vunpack.c.h.b16 %v993
    %v1922 = vunpack.c.l.b16 %v994
    %v1923 = vunpack.c.h.b16 %v994
    %v1924 = vunpack.c.l.b16 %v995
    %v1925 = vunpack.c.h.b16 %v995
    %v1926 = vunpack.c.l.b16 %v996
    %v1927 = vunpack.c.h.b16 %v996
    %v1928 = vunpack.c.l.b16 %v997
    %v1929 = vunpack.c.h.b16 %v997
    %v1930 = vunpack.c.l.b16 %v998
    %v1931 = vunpack.c.h.b16 %v998
    %v1932 = vunpack.c.l.b16 %v999
    %v1933 = vunpack.c.h.b16 %v999
    %v1934 = vunpack.c.l.b16 %v1000
    %v1935 = vunpack.c.h.b16 %v1000
    %v1936 = vunpack.c.l.b16 %v1001
    %v1937 = vunpack.c.h.b16 %v1001
    %v1938 = vunpack.c.l.b16 %v1002
    %v1939 = vunpack.c.h.b16 %v1002
    %v1940 = vunpack.c.l.b16 %v1003
    %v1941 = vunpack.c.h.b16 %v1003
    %v1942 = vunpack.c.l.b16 %v1004
    %v1943 = vunpack.c.h.b16 %v1004
    %v1944 = vunpack.c.l.b16 %v1005
    %v1945 = vunpack.c.h.b16 %v1005
    %v1946 = vunpack.c.l.b16 %v1006
    %v1947 = vunpack.c.h.b16 %v1006
    %v1948 = vunpack.c.l.b16 %v1007
    %v1949 = vunpack.c.h.b16 %v1007
    %v1950 = vunpack.c.l.b16 %v1008
    %v1951 = vunpack.c.h.b16 %v1008
    %v1952 = vunpack.c.l.b16 %v1009
    %v1953 = vunpack.c.h.b16 %v1009
    %v1954 = vunpack.c.l.b16 %v1010
    %v1955 = vunpack.c.h.b16 %v1010
    %v1956 = vunpack.c.l.b16 %v1011
    %v1957 = vunpack.c.h.b16 %v1011
    %v1958 = vunpack.c.l.b16 %v1012
    %v1959 = vunpack.c.h.b16 %v1012
    %v1960 = vunpack.c.l.b16 %v1013
    %v1961 = vunpack.c.h.b16 %v1013
    %v1962 = vunpack.c.l.b16 %v1014
    %v1963 = vunpack.c.h.b16 %v1014
    %v1964 = vunpack.c.l.b16 %v1015
    %v1965 = vunpack.c.h.b16 %v1015
    %v1966 = vunpack.c.l.b16 %v1016
    %v1967 = vunpack.c.h.b16 %v1016
    %v1968 = vunpack.c.l.b16 %v1017
    %v1969 = vunpack.c.h.b16 %v1017
    %v1970 = vunpack.c.l.b16 %v1018
    %v1971 = vunpack.c.h.b16 %v1018
    %v1972 = vunpack.c.l.b16 %v1019
    %v1973 = vunpack.c.h.b16 %v1019
    %v1974 = vunpack.c.l.b16 %v1020
    %v1975 = vunpack.c.h.b16 %v1020
    %v1976 = vunpack.c.l.b16 %v1021
    %v1977 = vunpack.c.h.b16 %v1021
    %v1978 = vunpack.c.l.b16 %v1022
    %v1979 = vunpack.c.h.b16 %v1022
    %v1980 = vunpack.c.l.b16 %v1023
    %v1981 = vunpack.c.h.b16 %v1023
    %v1982 = vunpack.c.l.b16 %v1024
    %v1983 = vunpack.c.h.b16 %v1024
    %v1984 = vunpack.c.l.b16 %v1025
    %v1985 = vunpack.c.h.b16 %v1025
    %v1986 = vunpack.c.l.b16 %v1026
    %v1987 = vunpack.c.h.b16 %v1026
    %v1988 = vunpack.c.l.b16 %v1027
    %v1989 = vunpack.c.h.b16 %v1027
    %v1990 = vunpack.c.l.b16 %v1028
    %v1991 = vunpack.c.h.b16 %v1028
    %v1992 = vunpack.c.l.b16 %v1029
    %v1993 = vunpack.c.h.b16 %v1029
    %v1994 = vunpack.c.l.b16 %v1030
    %v1995 = vunpack.c.h.b16 %v1030
    %v1996 = vunpack.c.l.b16 %v1031
    %v1997 = vunpack.c.h.b16 %v1031
    %v1998 = vunpack.c.l.b16 %v1032
    %v1999 = vunpack.c.h.b16 %v1032
    %v2000 = vunpack.c.l.b16 %v1033
    %v2001 = vunpack.c.h.b16 %v1033
    %v2002 = vunpack.c.l.b16 %v1034
    %v2003 = vunpack.c.h.b16 %v1034
    %v2004 = vunpack.c.l.b16 %v1035
    %v2005 = vunpack.c.h.b16 %v1035
    %v2006 = vunpack.c.l.b16 %v1036
    %v2007 = vunpack.c.h.b16 %v1036
    %v2008 = vunpack.c.l.b16 %v1037
    %v2009 = vunpack.c.h.b16 %v1037
    %v2010 = vunpack.c.l.b16 %v1038
    %v2011 = vunpack.c.h.b16 %v1038
    %v2012 = vunpack.c.l.b16 %v1039
    %v2013 = vunpack.c.h.b16 %v1039
    %v2014 = vunpack.c.l.b16 %v1040
    %v2015 = vunpack.c.h.b16 %v1040
    %v2016 = vunpack.c.l.b16 %v1041
    %v2017 = vunpack.c.h.b16 %v1041
    %v2018 = vunpack.c.l.b16 %v1042
    %v2019 = vunpack.c.h.b16 %v1042
    %v2020 = vunpack.c.l.b16 %v1043
    %v2021 = vunpack.c.h.b16 %v1043
    %v2022 = vunpack.c.l.b16 %v1044
    %v2023 = vunpack.c.h.b16 %v1044
    %v2024 = vunpack.c.l.b16 %v1045
    %v2025 = vunpack.c.h.b16 %v1045
    %v2026 = vunpack.c.l.b16 %v1046
    %v2027 = vunpack.c.h.b16 %v1046
    %v2028 = vunpack.c.l.b16 %v1047
    %v2029 = vunpack.c.h.b16 %v1047
    %v2030 = vunpack.c.l.b16 %v1048
    %v2031 = vunpack.c.h.b16 %v1048
    %v2032 = vunpack.c.l.b16 %v1049
    %v2033 = vunpack.c.h.b16 %v1049
    %v2034 = vunpack.c.l.b16 %v1050
    %v2035 = vunpack.c.h.b16 %v1050
    %v2036 = vunpack.c.l.b16 %v1051
    %v2037 = vunpack.c.h.b16 %v1051
    %v2038 = vunpack.c.l.b16 %v1052
    %v2039 = vunpack.c.h.b16 %v1052
    %v2040 = vunpack.c.l.b16 %v1053
    %v2041 = vunpack.c.h.b16 %v1053
    %v2042 = vunpack.c.l.b16 %v1054
    %v2043 = vunpack.c.h.b16 %v1054
    %v2044 = vunpack.c.l.b16 %v1055
    %v2045 = vunpack.c.h.b16 %v1055
    %v2046 = vunpack.c.l.b16 %v1056
    %v2047 = vunpack.c.h.b16 %v1056
    %v2048 = vunpack.c.l.b16 %v1057
    %v2049 = vunpack.c.h.b16 %v1057
    %v2050 = vunpack.c.l.b16 %v1058
    %v2051 = vunpack.c.h.b16 %v1058
    %v2052 = vunpack.c.l.b16 %v1059
    %v2053 = vunpack.c.h.b16 %v1059
    %v2054 = vunpack.c.l.b16 %v1060
    %v2055 = vunpack.c.h.b16 %v1060
    %v2056 = vunpack.c.l.b16 %v1061
    %v2057 = vunpack.c.h.b16 %v1061
    %v2058 = vunpack.c.l.b16 %v1062
    %v2059 = vunpack.c.h.b16 %v1062
    %v2060 = vunpack.c.l.b16 %v1063
    %v2061 = vunpack.c.h.b16 %v1063
    %v2062 = vunpack.c.l.b16 %v1064
    %v2063 = vunpack.c.h.b16 %v1064
    %v2064 = vunpack.c.l.b16 %v1065
    %v2065 = vunpack.c.h.b16 %v1065
    %v2066 = vunpack.c.l.b16 %v1066
    %v2067 = vunpack.c.h.b16 %v1066
    %v2068 = vunpack.c.l.b16 %v1067
    %v2069 = vunpack.c.h.b16 %v1067
    %v2070 = vunpack.c.l.b16 %v1068
    %v2071 = vunpack.c.h.b16 %v1068
    %v2072 = vunpack.c.l.b16 %v1069
    %v2073 = vunpack.c.h.b16 %v1069
    %v2074 = vunpack.c.l.b16 %v1070
    %v2075 = vunpack.c.h.b16 %v1070
    %v2076 = vunpack.c.l.b16 %v1071
    %v2077 = vunpack.c.h.b16 %v1071
    %v2078 = vunpack.c.l.b16 %v1072
    %v2079 = vunpack.c.h.b16 %v1072
    %v2080 = vunpack.c.l.b16 %v1073
    %v2081 = vunpack.c.h.b16 %v1073
    %v2082 = vunpack.c.l.b16 %v1074
    %v2083 = vunpack.c.h.b16 %v1074
    %v2084 = vunpack.c.l.b16 %v1075
    %v2085 = vunpack.c.h.b16 %v1075
    %v2086 = vunpack.c.l.b16 %v1076
    %v2087 = vunpack.c.h.b16 %v1076
    %v2088 = vunpack.c.l.b16 %v1077
    %v2089 = vunpack.c.h.b16 %v1077
    %v2090 = vunpack.c.l.b16 %v1078
    %v2091 = vunpack.c.h.b16 %v1078
    %v2092 = vunpack.c.l.b16 %v1079
    %v2093 = vunpack.c.h.b16 %v1079
    %v2094 = vunpack.c.l.b16 %v1080
    %v2095 = vunpack.c.h.b16 %v1080
    %v2096 = vunpack.c.l.b16 %v1081
    %v2097 = vunpack.c.h.b16 %v1081
    %v2098 = vunpack.c.l.b16 %v1082
    %v2099 = vunpack.c.h.b16 %v1082
    %v2100 = vunpack.c.l.b16 %v1083
    %v2101 = vunpack.c.h.b16 %v1083
    %v2102 = vunpack.c.l.b16 %v1084
    %v2103 = vunpack.c.h.b16 %v1084
    %v2104 = vunpack.c.l.b16 %v1085
    %v2105 = vunpack.c.h.b16 %v1085
    %v2106 = vunpack.c.l.b16 %v1086
    %v2107 = vunpack.c.h.b16 %v1086
    %v2108 = vunpack.c.l.b16 %v1087
    %v2109 = vunpack.c.h.b16 %v1087
    %v2110 = vunpack.c.l.b16 %v1088
    %v2111 = vunpack.c.h.b16 %v1088
    %v2112 = vunpack.c.l.b16 %v1089
    %v2113 = vunpack.c.h.b16 %v1089
    %v2114 = vunpack.c.l.b16 %v1090
    %v2115 = vunpack.c.h.b16 %v1090
    %v2116 = vunpack.c.l.b16 %v1091
    %v2117 = vunpack.c.h.b16 %v1091
    %v2118 = vunpack.c.l.b16 %v1092
    %v2119 = vunpack.c.h.b16 %v1092
    %v2120 = vunpack.c.l.b16 %v1093
    %v2121 = vunpack.c.h.b16 %v1093
    %v2122 = vunpack.c.l.b16 %v1094
    %v2123 = vunpack.c.h.b16 %v1094
    %v2124 = vunpack.c.l.b16 %v1095
    %v2125 = vunpack.c.h.b16 %v1095
    %v2126 = vunpack.c.l.b16 %v1096
    %v2127 = vunpack.c.h.b16 %v1096
    %v2128 = vunpack.c.l.b16 %v1097
    %v2129 = vunpack.c.h.b16 %v1097
    %v2130 = vunpack.c.l.b16 %v1098
    %v2131 = vunpack.c.h.b16 %v1098
    %v2132 = vunpack.c.l.b16 %v1099
    %v2133 = vunpack.c.h.b16 %v1099
    %v2134 = vunpack.c.l.b16 %v1100
    %v2135 = vunpack.c.h.b16 %v1100
    %v2136 = vunpack.c.l.b16 %v1101
    %v2137 = vunpack.c.h.b16 %v1101
    %v2138 = vunpack.c.l.b16 %v1102
    %v2139 = vunpack.c.h.b16 %v1102
    %v2140 = vunpack.c.l.b16 %v1103
    %v2141 = vunpack.c.h.b16 %v1103
    %v2142 = vunpack.c.l.b16 %v1104
    %v2143 = vunpack.c.h.b16 %v1104
    %v2144 = vunpack.c.l.b16 %v1105
    %v2145 = vunpack.c.h.b16 %v1105
    %v2146 = vunpack.c.l.b16 %v1106
    %v2147 = vunpack.c.h.b16 %v1106
    %v2148 = vunpack.c.l.b16 %v1107
    %v2149 = vunpack.c.h.b16 %v1107
    %v2150 = vunpack.c.l.b16 %v1108
    %v2151 = vunpack.c.h.b16 %v1108
    %v2152 = vunpack.c.l.b16 %v1109
    %v2153 = vunpack.c.h.b16 %v1109
    %v2154 = vunpack.c.l.b16 %v1110
    %v2155 = vunpack.c.h.b16 %v1110
    %v2156 = vunpack.c.l.b16 %v1111
    %v2157 = vunpack.c.h.b16 %v1111
    %v2158 = vunpack.c.l.b16 %v1112
    %v2159 = vunpack.c.h.b16 %v1112
    %v2160 = vunpack.c.l.b16 %v1113
    %v2161 = vunpack.c.h.b16 %v1113
    %v2162 = vunpack.c.l.b16 %v1114
    %v2163 = vunpack.c.h.b16 %v1114
    %v2164 = vunpack.c.l.b16 %v1115
    %v2165 = vunpack.c.h.b16 %v1115
    %v2166 = vunpack.c.l.b16 %v1116
    %v2167 = vunpack.c.h.b16 %v1116
    %v2168 = vunpack.c.l.b16 %v1117
    %v2169 = vunpack.c.h.b16 %v1117
    %v2170 = vunpack.c.l.b16 %v1118
    %v2171 = vunpack.c.h.b16 %v1118
    %v2172 = vunpack.c.l.b16 %v1119
    %v2173 = vunpack.c.h.b16 %v1119
    %v2174 = vunpack.c.l.b16 %v1120
    %v2175 = vunpack.c.h.b16 %v1120
    %v2176 = vunpack.c.l.b16 %v1121
    %v2177 = vunpack.c.h.b16 %v1121
    %v2178 = vunpack.c.l.b16 %v1122
    %v2179 = vunpack.c.h.b16 %v1122
    %v2180 = vunpack.c.l.b16 %v1123
    %v2181 = vunpack.c.h.b16 %v1123
    %v2182 = vunpack.c.l.b16 %v1124
    %v2183 = vunpack.c.h.b16 %v1124
    %v2184 = vunpack.c.l.b16 %v1125
    %v2185 = vunpack.c.h.b16 %v1125
    %v2186 = vunpack.c.l.b16 %v1126
    %v2187 = vunpack.c.h.b16 %v1126
    %v2188 = vunpack.c.l.b16 %v1127
    %v2189 = vunpack.c.h.b16 %v1127
    %v2190 = vunpack.c.l.b16 %v1128
    %v2191 = vunpack.c.h.b16 %v1128
    %v2192 = vunpack.c.l.b16 %v1129
    %v2193 = vunpack.c.h.b16 %v1129
    %v2194 = vunpack.c.l.b16 %v1130
    %v2195 = vunpack.c.h.b16 %v1130
    %v2196 = vunpack.c.l.b16 %v1131
    %v2197 = vunpack.c.h.b16 %v1131
    %v2198 = vunpack.c.l.b16 %v1132
    %v2199 = vunpack.c.h.b16 %v1132
    %v2200 = vunpack.c.l.b16 %v1133
    %v2201 = vunpack.c.h.b16 %v1133
    %v2202 = vunpack.c.l.b16 %v1134
    %v2203 = vunpack.c.h.b16 %v1134
    %v2204 = vunpack.c.l.b16 %v1135
    %v2205 = vunpack.c.h.b16 %v1135
    %v2206 = vunpack.c.l.b16 %v1136
    %v2207 = vunpack.c.h.b16 %v1136
    %v2208 = vunpack.c.l.b16 %v1137
    %v2209 = vunpack.c.h.b16 %v1137
    %v2210 = vunpack.c.l.b16 %v1138
    %v2211 = vunpack.c.h.b16 %v1138
    %v2212 = vunpack.c.l.b16 %v1139
    %v2213 = vunpack.c.h.b16 %v1139
    %v2214 = vunpack.c.l.b16 %v1140
    %v2215 = vunpack.c.h.b16 %v1140
    %v2216 = vunpack.c.l.b16 %v1141
    %v2217 = vunpack.c.h.b16 %v1141
    %v2218 = vunpack.c.l.b16 %v1142
    %v2219 = vunpack.c.h.b16 %v1142
    %v2220 = vunpack.c.l.b16 %v1143
    %v2221 = vunpack.c.h.b16 %v1143
    %v2222 = vunpack.c.l.b16 %v1144
    %v2223 = vunpack.c.h.b16 %v1144
    %v2224 = vunpack.c.l.b16 %v1145
    %v2225 = vunpack.c.h.b16 %v1145
    %v2226 = vunpack.c.l.b16 %v1146
    %v2227 = vunpack.c.h.b16 %v1146
    %v2228 = vunpack.c.l.b16 %v1147
    %v2229 = vunpack.c.h.b16 %v1147
    %v2230 = vunpack.c.l.b16 %v1148
    %v2231 = vunpack.c.h.b16 %v1148
    %v2232 = vunpack.c.l.b16 %v1149
    %v2233 = vunpack.c.h.b16 %v1149
    %v2234 = vunpack.c.l.b16 %v1150
    %v2235 = vunpack.c.h.b16 %v1150
    %v2236 = vunpack.c.l.b16 %v1151
    %v2237 = vunpack.c.h.b16 %v1151
    %v2238 = vunpack.c.l.b16 %v1152
    %v2239 = vunpack.c.h.b16 %v1152
    %v2240 = vunpack.c.l.b16 %v1153
    %v2241 = vunpack.c.h.b16 %v1153
    %v2242 = vunpack.c.l.b16 %v1154
    %v2243 = vunpack.c.h.b16 %v1154
    %v2244 = vunpack.c.l.b16 %v1155
    %v2245 = vunpack.c.h.b16 %v1155
    %v2246 = vunpack.c.l.b16 %v1156
    %v2247 = vunpack.c.h.b16 %v1156
    %v2248 = vunpack.c.l.b16 %v1157
    %v2249 = vunpack.c.h.b16 %v1157
    %v2250 = vunpack.c.l.b16 %v1158
    %v2251 = vunpack.c.h.b16 %v1158
    %v2252 = vunpack.c.l.b16 %v1159
    %v2253 = vunpack.c.h.b16 %v1159
    %v2254 = vunpack.c.l.b16 %v1160
    %v2255 = vunpack.c.h.b16 %v1160
    %v2256 = vunpack.c.l.b16 %v1161
    %v2257 = vunpack.c.h.b16 %v1161
    %v2258 = vunpack.c.l.b16 %v1162
    %v2259 = vunpack.c.h.b16 %v1162
    %v2260 = vunpack.c.l.b16 %v1163
    %v2261 = vunpack.c.h.b16 %v1163
    %v2262 = vunpack.c.l.b16 %v1164
    %v2263 = vunpack.c.h.b16 %v1164
    %v2264 = vunpack.c.l.b16 %v1165
    %v2265 = vunpack.c.h.b16 %v1165
    %v2266 = vunpack.c.l.b16 %v1166
    %v2267 = vunpack.c.h.b16 %v1166
    %v2268 = vunpack.c.l.b16 %v1167
    %v2269 = vunpack.c.h.b16 %v1167
    %v2270 = vunpack.c.l.b16 %v1168
    %v2271 = vunpack.c.h.b16 %v1168
    %v2272 = vunpack.c.l.b16 %v1169
    %v2273 = vunpack.c.h.b16 %v1169
    %v2274 = vunpack.c.l.b16 %v1170
    %v2275 = vunpack.c.h.b16 %v1170
    %v2276 = vunpack.c.l.b16 %v1171
    %v2277 = vunpack.c.h.b16 %v1171
    %v2278 = vunpack.c.l.b16 %v1172
    %v2279 = vunpack.c.h.b16 %v1172
    %v2280 = vunpack.c.l.b16 %v1173
    %v2281 = vunpack.c.h.b16 %v1173
    %v2282 = vunpack.c.l.b16 %v1174
    %v2283 = vunpack.c.h.b16 %v1174
    %v2284 = vunpack.c.l.b16 %v1175
    %v2285 = vunpack.c.h.b16 %v1175
    %v2286 = vunpack.c.l.b16 %v1176
    %v2287 = vunpack.c.h.b16 %v1176
    %v2288 = vunpack.c.l.b16 %v1177
    %v2289 = vunpack.c.h.b16 %v1177
    %v2290 = vunpack.c.l.b16 %v1178
    %v2291 = vunpack.c.h.b16 %v1178
    %v2292 = vunpack.c.l.b16 %v1179
    %v2293 = vunpack.c.h.b16 %v1179
    %v2294 = vunpack.c.l.b16 %v1180
    %v2295 = vunpack.c.h.b16 %v1180
    %v2296 = vunpack.c.l.b16 %v1181
    %v2297 = vunpack.c.h.b16 %v1181
    %v2298 = vunpack.c.l.b16 %v1182
    %v2299 = vunpack.c.h.b16 %v1182
    %v2300 = vunpack.c.l.b16 %v1183
    %v2301 = vunpack.c.h.b16 %v1183
    %v2302 = vunpack.c.l.b16 %v1184
    %v2303 = vunpack.c.h.b16 %v1184
    %v2304 = vunpack.c.l.b16 %v1185
    %v2305 = vunpack.c.h.b16 %v1185
    %v2306 = vunpack.c.l.b16 %v1186
    %v2307 = vunpack.c.h.b16 %v1186
    %v2308 = vunpack.c.l.b16 %v1187
    %v2309 = vunpack.c.h.b16 %v1187
    %v2310 = vunpack.c.l.b16 %v1188
    %v2311 = vunpack.c.h.b16 %v1188
    %v2312 = vunpack.c.l.b16 %v1189
    %v2313 = vunpack.c.h.b16 %v1189
    %v2314 = vunpack.c.l.b16 %v1190
    %v2315 = vunpack.c.h.b16 %v1190
    %v2316 = vunpack.c.l.b16 %v1191
    %v2317 = vunpack.c.h.b16 %v1191
    %v2318 = vunpack.c.l.b16 %v1192
    %v2319 = vunpack.c.h.b16 %v1192
    %v2320 = vunpack.c.l.b16 %v1193
    %v2321 = vunpack.c.h.b16 %v1193
    %v2322 = vunpack.c.l.b16 %v1194
    %v2323 = vunpack.c.h.b16 %v1194
    %v2324 = vunpack.c.l.b16 %v1195
    %v2325 = vunpack.c.h.b16 %v1195
    %v2326 = vunpack.c.l.b16 %v1196
    %v2327 = vunpack.c.h.b16 %v1196
    %v2328 = vunpack.c.l.b16 %v1197
    %v2329 = vunpack.c.h.b16 %v1197
    %v2330 = vunpack.c.l.b16 %v1198
    %v2331 = vunpack.c.h.b16 %v1198
    %v2332 = vunpack.c.l.b16 %v1199
    %v2333 = vunpack.c.h.b16 %v1199
    %v2334 = vunpack.c.l.b16 %v1200
    %v2335 = vunpack.c.h.b16 %v1200
    %v2336 = vunpack.c.l.b16 %v1201
    %v2337 = vunpack.c.h.b16 %v1201
    %v2338 = vunpack.c.l.b16 %v1202
    %v2339 = vunpack.c.h.b16 %v1202
    %v2340 = vunpack.c.l.b16 %v1203
    %v2341 = vunpack.c.h.b16 %v1203
    %v2342 = vunpack.c.l.b16 %v1204
    %v2343 = vunpack.c.h.b16 %v1204
    %v2344 = vunpack.c.l.b16 %v1205
    %v2345 = vunpack.c.h.b16 %v1205
    %v2346 = vunpack.c.l.b16 %v1206
    %v2347 = vunpack.c.h.b16 %v1206
    %v2348 = vunpack.c.l.b16 %v1207
    %v2349 = vunpack.c.h.b16 %v1207
    %v2350 = vunpack.c.l.b16 %v1208
    %v2351 = vunpack.c.h.b16 %v1208
    %v2352 = vunpack.c.l.b16 %v1209
    %v2353 = vunpack.c.h.b16 %v1209
    %v2354 = vunpack.c.l.b16 %v1210
    %v2355 = vunpack.c.h.b16 %v1210
    %v2356 = vunpack.c.l.b16 %v1211
    %v2357 = vunpack.c.h.b16 %v1211
    %v2358 = vunpack.c.l.b16 %v1212
    %v2359 = vunpack.c.h.b16 %v1212
    %v2360 = vunpack.c.l.b16 %v1213
    %v2361 = vunpack.c.h.b16 %v1213
    %v2362 = vunpack.c.l.b16 %v1214
    %v2363 = vunpack.c.h.b16 %v1214
    %v2364 = vunpack.c.l.b16 %v1215
    %v2365 = vunpack.c.h.b16 %v1215
    %v2366 = vunpack.c.l.b16 %v1216
    %v2367 = vunpack.c.h.b16 %v1216
    %v2368 = vunpack.c.l.b16 %v1217
    %v2369 = vunpack.c.h.b16 %v1217
    %v2370 = vunpack.c.l.b16 %v1218
    %v2371 = vunpack.c.h.b16 %v1218
    %v2372 = vunpack.c.l.b16 %v1219
    %v2373 = vunpack.c.h.b16 %v1219
    %v2374 = vunpack.c.l.b16 %v1220
    %v2375 = vunpack.c.h.b16 %v1220
    %v2376 = vunpack.c.l.b16 %v1221
    %v2377 = vunpack.c.h.b16 %v1221
    %v2378 = vunpack.c.l.b16 %v1222
    %v2379 = vunpack.c.h.b16 %v1222
    %v2380 = vunpack.c.l.b16 %v1223
    %v2381 = vunpack.c.h.b16 %v1223
    %v2382 = vunpack.c.l.b16 %v1224
    %v2383 = vunpack.c.h.b16 %v1224
    %v2384 = vunpack.c.l.b16 %v1225
    %v2385 = vunpack.c.h.b16 %v1225
    %v2386 = vunpack.c.l.b16 %v1226
    %v2387 = vunpack.c.h.b16 %v1226
    %v2388 = vunpack.c.l.b16 %v1227
    %v2389 = vunpack.c.h.b16 %v1227
    %v2390 = vunpack.c.l.b16 %v1228
    %v2391 = vunpack.c.h.b16 %v1228
    %v2392 = vunpack.c.l.b16 %v1229
    %v2393 = vunpack.c.h.b16 %v1229
    %v2394 = vunpack.c.l.b16 %v1230
    %v2395 = vunpack.c.h.b16 %v1230
    %v2396 = vunpack.c.l.b16 %v1231
    %v2397 = vunpack.c.h.b16 %v1231
    %v2398 = vunpack.c.l.b16 %v1232
    %v2399 = vunpack.c.h.b16 %v1232
    %v2400 = vunpack.c.l.b16 %v1233
    %v2401 = vunpack.c.h.b16 %v1233
    %v2402 = vunpack.c.l.b16 %v1234
    %v2403 = vunpack.c.h.b16 %v1234
    %v2404 = vunpack.c.l.b16 %v1235
    %v2405 = vunpack.c.h.b16 %v1235
    %v2406 = vunpack.c.l.b16 %v1236
    %v2407 = vunpack.c.h.b16 %v1236
    %v2408 = vunpack.c.l.b16 %v1237
    %v2409 = vunpack.c.h.b16 %v1237
    %v2410 = vunpack.c.l.b16 %v1238
    %v2411 = vunpack.c.h.b16 %v1238
    %v2412 = vunpack.c.l.b16 %v1239
    %v2413 = vunpack.c.h.b16 %v1239
    %v2414 = vunpack.c.l.b16 %v1240
    %v2415 = vunpack.c.h.b16 %v1240
    %v2416 = vunpack.c.l.b16 %v1241
    %v2417 = vunpack.c.h.b16 %v1241
    %v2418 = vunpack.c.l.b16 %v1242
    %v2419 = vunpack.c.h.b16 %v1242
    %v2420 = vunpack.c.l.b16 %v1243
    %v2421 = vunpack.c.h.b16 %v1243
    %v2422 = vunpack.c.l.b16 %v1244
    %v2423 = vunpack.c.h.b16 %v1244
    %v2424 = vunpack.c.l.b16 %v1245
    %v2425 = vunpack.c.h.b16 %v1245
    %v2426 = vunpack.c.l.b16 %v1246
    %v2427 = vunpack.c.h.b16 %v1246
    %v2428 = vunpack.c.l.b16 %v1247
    %v2429 = vunpack.c.h.b16 %v1247
    %v2430 = vunpack.c.l.b16 %v1248
    %v2431 = vunpack.c.h.b16 %v1248
    %v2432 = vunpack.c.l.b16 %v1249
    %v2433 = vunpack.c.h.b16 %v1249
    %v2434 = vpack.c.b16 %v1672, %v1666
    %v2435 = vpack.c.b16 %v1673, %v1667
    %v2436 = vpack.c.b16 %v1674, %v1668
    %v2437 = vpack.c.b16 %v1675, %v1669
    %v2438 = vpack.c.b16 %v1676, %v1670
    %v2439 = vpack.c.b16 %v1677, %v1671
    %v2440 = vpack.c.b16 %v1684, %v1678
    %v2441 = vpack.c.b16 %v1685, %v1679
    %v2442 = vpack.c.b16 %v1686, %v1680
    %v2443 = vpack.c.b16 %v1687, %v1681
    %v2444 = vpack.c.b16 %v1688, %v1682
    %v2445 = vpack.c.b16 %v1689, %v1683
    %v2446 = vpack.c.b16 %v1696, %v1690
    %v2447 = vpack.c.b16 %v1697, %v1691
    %v2448 = vpack.c.b16 %v1698, %v1692
    %v2449 = vpack.c.b16 %v1699, %v1693
    %v2450 = vpack.c.b16 %v1700, %v1694
    %v2451 = vpack.c.b16 %v1701, %v1695
    %v2452 = vpack.c.b16 %v1708, %v1702
    %v2453 = vpack.c.b16 %v1709, %v1703
    %v2454 = vpack.c.b16 %v1710, %v1704
    %v2455 = vpack.c.b16 %v1711, %v1705
    %v2456 = vpack.c.b16 %v1712, %v1706
    %v2457 = vpack.c.b16 %v1713, %v1707
    %v2458 = vpack.c.b16 %v1720, %v1714
    %v2459 = vpack.c.b16 %v1721, %v1715
    %v2460 = vpack.c.b16 %v1722, %v1716
    %v2461 = vpack.c.b16 %v1723, %v1717
    %v2462 = vpack.c.b16 %v1724, %v1718
    %v2463 = vpack.c.b16 %v1725, %v1719
    %v2464 = vpack.c.b16 %v1732, %v1726
    %v2465 = vpack.c.b16 %v1733, %v1727
    %v2466 = vpack.c.b16 %v1734, %v1728
    %v2467 = vpack.c.b16 %v1735, %v1729
    %v2468 = vpack.c.b16 %v1736, %v1730
    %v2469 = vpack.c.b16 %v1737, %v1731
    %v2470 = vpack.c.b16 %v1744, %v1738
    %v2471 = vpack.c.b16 %v1745, %v1739
    %v2472 = vpack.c.b16 %v1746, %v1740
    %v2473 = vpack.c.b16 %v1747, %v1741
    %v2474 = vpack.c.b16 %v1748, %v1742
    %v2475 = vpack.c.b16 %v1749, %v1743
    %v2476 = vpack.c.b16 %v1756, %v1750
    %v2477 = vpack.c.b16 %v1757, %v1751
    %v2478 = vpack.c.b16 %v1758, %v1752
    %v2479 = vpack.c.b16 %v1759, %v1753
    %v2480 = vpack.c.b16 %v1760, %v1754
    %v2481 = vpack.c.b16 %v1761, %v1755
    %v2482 = vpack.c.b16 %v1768, %v1762
    %v2483 = vpack.c.b16 %v1769, %v1763
    %v2484 = vpack.c.b16 %v1770, %v1764
    %v2485 = vpack.c.b16 %v1771, %v1765
    %v2486 = vpack.c.b16 %v1772, %v1766
    %v2487 = vpack.c.b16 %v1773, %v1767
    %v2488 = vpack.c.b16 %v1780, %v1774
    %v2489 = vpack.c.b16 %v1781, %v1775
    %v2490 = vpack.c.b16 %v1782, %v1776
    %v2491 = vpack.c.b16 %v1783, %v1777
    %v2492 = vpack.c.b16 %v1784, %v1778
    %v2493 = vpack.c.b16 %v1785, %v1779
    %v2494 = vpack.c.b16 %v1792, %v1786
    %v2495 = vpack.c.b16 %v1793, %v1787
    %v2496 = vpack.c.b16 %v1794, %v1788
    %v2497 = vpack.c.b16 %v1795, %v1789
    %v2498 = vpack.c.b16 %v1796, %v1790
    %v2499 = vpack.c.b16 %v1797, %v1791
    %v2500 = vpack.c.b16 %v1804, %v1798
    %v2501 = vpack.c.b16 %v1805, %v1799
    %v2502 = vpack.c.b16 %v1806, %v1800
    %v2503 = vpack.c.b16 %v1807, %v1801
    %v2504 = vpack.c.b16 %v1808, %v1802
    %v2505 = vpack.c.b16 %v1809, %v1803
    %v2506 = vpack.c.b16 %v1816, %v1810
    %v2507 = vpack.c.b16 %v1817, %v1811
    %v2508 = vpack.c.b16 %v1818, %v1812
    %v2509 = vpack.c.b16 %v1819, %v1813
    %v2510 = vpack.c.b16 %v1820, %v1814
    %v2511 = vpack.c.b16 %v1821, %v1815
    %v2512 = vpack.c.b16 %v1828, %v1822
    %v2513 = vpack.c.b16 %v1829, %v1823
    %v2514 = vpack.c.b16 %v1830, %v1824
    %v2515 = vpack.c.b16 %v1831, %v1825
    %v2516 = vpack.c.b16 %v1832, %v1826
    %v2517 = vpack.c.b16 %v1833, %v1827
    %v2518 = vpack.c.b16 %v1840, %v1834
    %v2519 = vpack.c.b16 %v1841, %v1835
    %v2520 = vpack.c.b16 %v1842, %v1836
    %v2521 = vpack.c.b16 %v1843, %v1837
    %v2522 = vpack.c.b16 %v1844, %v1838
    %v2523 = vpack.c.b16 %v1845, %v1839
    %v2524 = vpack.c.b16 %v1852, %v1846
    %v2525 = vpack.c.b16 %v1853, %v1847
    %v2526 = vpack.c.b16 %v1854, %v1848
    %v2527 = vpack.c.b16 %v1855, %v1849
    %v2528 = vpack.c.b16 %v1856, %v1850
    %v2529 = vpack.c.b16 %v1857, %v1851
    %v2530 = vpack.c.b16 %v1864, %v1858
    %v2531 = vpack.c.b16 %v1865, %v1859
    %v2532 = vpack.c.b16 %v1866, %v1860
    %v2533 = vpack.c.b16 %v1867, %v1861
    %v2534 = vpack.c.b16 %v1868, %v1862
    %v2535 = vpack.c.b16 %v1869, %v1863
    %v2536 = vpack.c.b16 %v1876, %v1870
    %v2537 = vpack.c.b16 %v1877, %v1871
    %v2538 = vpack.c.b16 %v1878, %v1872
    %v2539 = vpack.c.b16 %v1879, %v1873
    %v2540 = vpack.c.b16 %v1880, %v1874
    %v2541 = vpack.c.b16 %v1881, %v1875
    %v2542 = vpack.c.b16 %v1888, %v1882
    %v2543 = vpack.c.b16 %v1889, %v1883
    %v2544 = vpack.c.b16 %v1890, %v1884
    %v2545 = vpack.c.b16 %v1891, %v1885
    %v2546 = vpack.c.b16 %v1892, %v1886
    %v2547 = vpack.c.b16 %v1893, %v1887
    %v2548 = vpack.c.b16 %v1900, %v1894
    %v2549 = vpack.c.b16 %v1901, %v1895
    %v2550 = vpack.c.b16 %v1902, %v1896
    %v2551 = vpack.c.b16 %v1903, %v1897
    %v2552 = vpack.c.b16 %v1904, %v1898
    %v2553 = vpack.c.b16 %v1905, %v1899
    %v2554 = vpack.c.b16 %v1912, %v1906
    %v2555 = vpack.c.b16 %v1913, %v1907
    %v2556 = vpack.c.b16 %v1914, %v1908
    %v2557 = vpack.c.b16 %v1915, %v1909
    %v2558 = vpack.c.b16 %v1916, %v1910
    %v2559 = vpack.c.b16 %v1917, %v1911
    %v2560 = vpack.c.b16 %v1924, %v1918
    %v2561 = vpack.c.b16 %v1925, %v1919
    %v2562 = vpack.c.b16 %v1926, %v1920
    %v2563 = vpack.c.b16 %v1927, %v1921
    %v2564 = vpack.c.b16 %v1928, %v1922
    %v2565 = vpack.c.b16 %v1929, %v1923
    %v2566 = vpack.c.b16 %v1936, %v1930
    %v2567 = vpack.c.b16 %v1937, %v1931
    %v2568 = vpack.c.b16 %v1938, %v1932
    %v2569 = vpack.c.b16 %v1939, %v1933
    %v2570 = vpack.c.b16 %v1940, %v1934
    %v2571 = vpack.c.b16 %v1941, %v1935
    %v2572 = vpack.c.b16 %v1948, %v1942
    %v2573 = vpack.c.b16 %v1949, %v1943
    %v2574 = vpack.c.b16 %v1950, %v1944
    %v2575 = vpack.c.b16 %v1951, %v1945
    %v2576 = vpack.c.b16 %v1952, %v1946
    %v2577 = vpack.c.b16 %v1953, %v1947
    %v2578 = vpack.c.b16 %v1960, %v1954
    %v2579 = vpack.c.b16 %v1961, %v1955
    %v2580 = vpack.c.b16 %v1962, %v1956
    %v2581 = vpack.c.b16 %v1963, %v1957
    %v2582 = vpack.c.b16 %v1964, %v1958
    %v2583 = vpack.c.b16 %v1965, %v1959
    %v2584 = vpack.c.b16 %v1972, %v1966
    %v2585 = vpack.c.b16 %v1973, %v1967
    %v2586 = vpack.c.b16 %v1974, %v1968
    %v2587 = vpack.c.b16 %v1975, %v1969
    %v2588 = vpack.c.b16 %v1976, %v1970
    %v2589 = vpack.c.b16 %v1977, %v1971
    %v2590 = vpack.c.b16 %v1984, %v1978
    %v2591 = vpack.c.b16 %v1985, %v1979
    %v2592 = vpack.c.b16 %v1986, %v1980
    %v2593 = vpack.c.b16 %v1987, %v1981
    %v2594 = vpack.c.b16 %v1988, %v1982
    %v2595 = vpack.c.b16 %v1989, %v1983
    %v2596 = vpack.c.b16 %v1996, %v1990
    %v2597 = vpack.c.b16 %v1997, %v1991
    %v2598 = vpack.c.b16 %v1998, %v1992
    %v2599 = vpack.c.b16 %v1999, %v1993
    %v2600 = vpack.c.b16 %v2000, %v1994
    %v2601 = vpack.c.b16 %v2001, %v1995
    %v2602 = vpack.c.b16 %v2008, %v2002
    %v2603 = vpack.c.b16 %v2009, %v2003
    %v2604 = vpack.c.b16 %v2010, %v2004
    %v2605 = vpack.c.b16 %v2011, %v2005
    %v2606 = vpack.c.b16 %v2012, %v2006
    %v2607 = vpack.c.b16 %v2013, %v2007
    %v2608 = vpack.c.b16 %v2020, %v2014
    %v2609 = vpack.c.b16 %v2021, %v2015
    %v2610 = vpack.c.b16 %v2022, %v2016
    %v2611 = vpack.c.b16 %v2023, %v2017
    %v2612 = vpack.c.b16 %v2024, %v2018
    %v2613 = vpack.c.b16 %v2025, %v2019
    %v2614 = vpack.c.b16 %v2032, %v2026
    %v2615 = vpack.c.b16 %v2033, %v2027
    %v2616 = vpack.c.b16 %v2034, %v2028
    %v2617 = vpack.c.b16 %v2035, %v2029
    %v2618 = vpack.c.b16 %v2036, %v2030
    %v2619 = vpack.c.b16 %v2037, %v2031
    %v2620 = vpack.c.b16 %v2044, %v2038
    %v2621 = vpack.c.b16 %v2045, %v2039
    %v2622 = vpack.c.b16 %v2046, %v2040
    %v2623 = vpack.c.b16 %v2047, %v2041
    %v2624 = vpack.c.b16 %v2048, %v2042
    %v2625 = vpack.c.b16 %v2049, %v2043
    %v2626 = vpack.c.b16 %v2056, %v2050
    %v2627 = vpack.c.b16 %v2057, %v2051
    %v2628 = vpack.c.b16 %v2058, %v2052
    %v2629 = vpack.c.b16 %v2059, %v2053
    %v2630 = vpack.c.b16 %v2060, %v2054
    %v2631 = vpack.c.b16 %v2061, %v2055
    %v2632 = vpack.c.b16 %v2068, %v2062
    %v2633 = vpack.c.b16 %v2069, %v2063
    %v2634 = vpack.c.b16 %v2070, %v2064
    %v2635 = vpack.c.b16 %v2071, %v2065
    %v2636 = vpack.c.b16 %v2072, %v2066
    %v2637 = vpack.c.b16 %v2073, %v2067
    %v2638 = vpack.c.b16 %v2080, %v2074
    %v2639 = vpack.c.b16 %v2081, %v2075
    %v2640 = vpack.c.b16 %v2082, %v2076
    %v2641 = vpack.c.b16 %v2083, %v2077
    %v2642 = vpack.c.b16 %v2084, %v2078
    %v2643 = vpack.c.b16 %v2085, %v2079
    %v2644 = vpack.c.b16 %v2092, %v2086
    %v2645 = vpack.c.b16 %v2093, %v2087
    %v2646 = vpack.c.b16 %v2094, %v2088
    %v2647 = vpack.c.b16 %v2095, %v2089
    %v2648 = vpack.c.b16 %v2096, %v2090
    %v2649 = vpack.c.b16 %v2097, %v2091
    %v2650 = vpack.c.b16 %v2104, %v2098
    %v2651 = vpack.c.b16 %v2105, %v2099
    %v2652 = vpack.c.b16 %v2106, %v2100
    %v2653 = vpack.c.b16 %v2107, %v2101
    %v2654 = vpack.c.b16 %v2108, %v2102
    %v2655 = vpack.c.b16 %v2109, %v2103
    %v2656 = vpack.c.b16 %v2116, %v2110
    %v2657 = vpack.c.b16 %v2117, %v2111
    %v2658 = vpack.c.b16 %v2118, %v2112
    %v2659 = vpack.c.b16 %v2119, %v2113
    %v2660 = vpack.c.b16 %v2120, %v2114
    %v2661 = vpack.c.b16 %v2121, %v2115
    %v2662 = vpack.c.b16 %v2128, %v2122
    %v2663 = vpack.c.b16 %v2129, %v2123
    %v2664 = vpack.c.b16 %v2130, %v2124
    %v2665 = vpack.c.b16 %v2131, %v2125
    %v2666 = vpack.c.b16 %v2132, %v2126
    %v2667 = vpack.c.b16 %v2133, %v2127
    %v2668 = vpack.c.b16 %v2140, %v2134
    %v2669 = vpack.c.b16 %v2141, %v2135
    %v2670 = vpack.c.b16 %v2142, %v2136
    %v2671 = vpack.c.b16 %v2143, %v2137
    %v2672 = vpack.c.b16 %v2144, %v2138
    %v2673 = vpack.c.b16 %v2145, %v2139
    %v2674 = vpack.c.b16 %v2152, %v2146
    %v2675 = vpack.c.b16 %v2153, %v2147
    %v2676 = vpack.c.b16 %v2154, %v2148
    %v2677 = vpack.c.b16 %v2155, %v2149
    %v2678 = vpack.c.b16 %v2156, %v2150
    %v2679 = vpack.c.b16 %v2157, %v2151
    %v2680 = vpack.c.b16 %v2164, %v2158
    %v2681 = vpack.c.b16 %v2165, %v2159
    %v2682 = vpack.c.b16 %v2166, %v2160
    %v2683 = vpack.c.b16 %v2167, %v2161
    %v2684 = vpack.c.b16 %v2168, %v2162
    %v2685 = vpack.c.b16 %v2169, %v2163
    %v2686 = vpack.c.b16 %v2176, %v2170
    %v2687 = vpack.c.b16 %v2177, %v2171
    %v2688 = vpack.c.b16 %v2178, %v2172
    %v2689 = vpack.c.b16 %v2179, %v2173
    %v2690 = vpack.c.b16 %v2180, %v2174
    %v2691 = vpack.c.b16 %v2181, %v2175
    %v2692 = vpack.c.b16 %v2188, %v2182
    %v2693 = vpack.c.b16 %v2189, %v2183
    %v2694 = vpack.c.b16 %v2190, %v2184
    %v2695 = vpack.c.b16 %v2191, %v2185
    %v2696 = vpack.c.b16 %v2192, %v2186
    %v2697 = vpack.c.b16 %v2193, %v2187
    %v2698 = vpack.c.b16 %v2200, %v2194
    %v2699 = vpack.c.b16 %v2201, %v2195
    %v2700 = vpack.c.b16 %v2202, %v2196
    %v2701 = vpack.c.b16 %v2203, %v2197
    %v2702 = vpack.c.b16 %v2204, %v2198
    %v2703 = vpack.c.b16 %v2205, %v2199
    %v2704 = vpack.c.b16 %v2212, %v2206
    %v2705 = vpack.c.b16 %v2213, %v2207
    %v2706 = vpack.c.b16 %v2214, %v2208
    %v2707 = vpack.c.b16 %v2215, %v2209
    %v2708 = vpack.c.b16 %v2216, %v2210
    %v2709 = vpack.c.b16 %v2217, %v2211
    %v2710 = vpack.c.b16 %v2224, %v2218
    %v2711 = vpack.c.b16 %v2225, %v2219
    %v2712 = vpack.c.b16 %v2226, %v2220
    %v2713 = vpack.c.b16 %v2227, %v2221
    %v2714 = vpack.c.b16 %v2228, %v2222
    %v2715 = vpack.c.b16 %v2229, %v2223
    %v2716 = vpack.c.b16 %v2236, %v2230
    %v2717 = vpack.c.b16 %v2237, %v2231
    %v2718 = vpack.c.b16 %v2238, %v2232
    %v2719 = vpack.c.b16 %v2239, %v2233
    %v2720 = vpack.c.b16 %v2240, %v2234
    %v2721 = vpack.c.b16 %v2241, %v2235
    %v2722 = vpack.c.b16 %v2248, %v2242
    %v2723 = vpack.c.b16 %v2249, %v2243
    %v2724 = vpack.c.b16 %v2250, %v2244
    %v2725 = vpack.c.b16 %v2251, %v2245
    %v2726 = vpack.c.b16 %v2252, %v2246
    %v2727 = vpack.c.b16 %v2253, %v2247
    %v2728 = vpack.c.b16 %v2260, %v2254
    %v2729 = vpack.c.b16 %v2261, %v2255
    %v2730 = vpack.c.b16 %v2262, %v2256
    %v2731 = vpack.c.b16 %v2263, %v2257
    %v2732 = vpack.c.b16 %v2264, %v2258
    %v2733 = vpack.c.b16 %v2265, %v2259
    %v2734 = vpack.c.b16 %v2272, %v2266
    %v2735 = vpack.c.b16 %v2273, %v2267
    %v2736 = vpack.c.b16 %v2274, %v2268
    %v2737 = vpack.c.b16 %v2275, %v2269
    %v2738 = vpack.c.b16 %v2276, %v2270
    %v2739 = vpack.c.b16 %v2277, %v2271
    %v2740 = vpack.c.b16 %v2284, %v2278
    %v2741 = vpack.c.b16 %v2285, %v2279
    %v2742 = vpack.c.b16 %v2286, %v2280
    %v2743 = vpack.c.b16 %v2287, %v2281
    %v2744 = vpack.c.b16 %v2288, %v2282
    %v2745 = vpack.c.b16 %v2289, %v2283
    %v2746 = vpack.c.b16 %v2296, %v2290
    %v2747 = vpack.c.b16 %v2297, %v2291
    %v2748 = vpack.c.b16 %v2298, %v2292
    %v2749 = vpack.c.b16 %v2299, %v2293
    %v2750 = vpack.c.b16 %v2300, %v2294
    %v2751 = vpack.c.b16 %v2301, %v2295
    %v2752 = vpack.c.b16 %v2308, %v2302
    %v2753 = vpack.c.b16 %v2309, %v2303
    %v2754 = vpack.c.b16 %v2310, %v2304
    %v2755 = vpack.c.b16 %v2311, %v2305
    %v2756 = vpack.c.b16 %v2312, %v2306
    %v2757 = vpack.c.b16 %v2313, %v2307
    %v2758 = vpack.c.b16 %v2320, %v2314
    %v2759 = vpack.c.b16 %v2321, %v2315
    %v2760 = vpack.c.b16 %v2322, %v2316
    %v2761 = vpack.c.b16 %v2323, %v2317
    %v2762 = vpack.c.b16 %v2324, %v2318
    %v2763 = vpack.c.b16 %v2325, %v2319
    %v2764 = vpack.c.b16 %v2332, %v2326
    %v2765 = vpack.c.b16 %v2333, %v2327
    %v2766 = vpack.c.b16 %v2334, %v2328
    %v2767 = vpack.c.b16 %v2335, %v2329
    %v2768 = vpack.c.b16 %v2336, %v2330
    %v2769 = vpack.c.b16 %v2337, %v2331
    %v2770 = vpack.c.b16 %v2344, %v2338
    %v2771 = vpack.c.b16 %v2345, %v2339
    %v2772 = vpack.c.b16 %v2346, %v2340
    %v2773 = vpack.c.b16 %v2347, %v2341
    %v2774 = vpack.c.b16 %v2348, %v2342
    %v2775 = vpack.c.b16 %v2349, %v2343
    %v2776 = vpack.c.b16 %v2356, %v2350
    %v2777 = vpack.c.b16 %v2357, %v2351
    %v2778 = vpack.c.b16 %v2358, %v2352
    %v2779 = vpack.c.b16 %v2359, %v2353
    %v2780 = vpack.c.b16 %v2360, %v2354
    %v2781 = vpack.c.b16 %v2361, %v2355
    %v2782 = vpack.c.b16 %v2368, %v2362
    %v2783 = vpack.c.b16 %v2369, %v2363
    %v2784 = vpack.c.b16 %v2370, %v2364
    %v2785 = vpack.c.b16 %v2371, %v2365
    %v2786 = vpack.c.b16 %v2372, %v2366
    %v2787 = vpack.c.b16 %v2373, %v2367
    %v2788 = vpack.c.b16 %v2380, %v2374
    %v2789 = vpack.c.b16 %v2381, %v2375
    %v2790 = vpack.c.b16 %v2382, %v2376
    %v2791 = vpack.c.b16 %v2383, %v2377
    %v2792 = vpack.c.b16 %v2384, %v2378
    %v2793 = vpack.c.b16 %v2385, %v2379
    %v2794 = vpack.c.b16 %v2392, %v2386
    %v2795 = vpack.c.b16 %v2393, %v2387
    %v2796 = vpack.c.b16 %v2394, %v2388
    %v2797 = vpack.c.b16 %v2395, %v2389
    %v2798 = vpack.c.b16 %v2396, %v2390
    %v2799 = vpack.c.b16 %v2397, %v2391
    %v2800 = vpack.c.b16 %v2404, %v2398
    %v2801 = vpack.c.b16 %v2405, %v2399
    %v2802 = vpack.c.b16 %v2406, %v2400
    %v2803 = vpack.c.b16 %v2407, %v2401
    %v2804 = vpack.c.b16 %v2408, %v2402
    %v2805 = vpack.c.b16 %v2409, %v2403
    %v2806 = vpack.c.b16 %v2416, %v2410
    %v2807 = vpack.c.b16 %v2417, %v2411
    %v2808 = vpack.c.b16 %v2418, %v2412
    %v2809 = vpack.c.b16 %v2419, %v2413
    %v2810 = vpack.c.b16 %v2420, %v2414
    %v2811 = vpack.c.b16 %v2421, %v2415
    %v2812 = vpack.c.b16 %v2428, %v2422
    %v2813 = vpack.c.b16 %v2429, %v2423
    %v2814 = vpack.c.b16 %v2430, %v2424
    %v2815 = vpack.c.b16 %v2431, %v2425
    %v2816 = vpack.c.b16 %v2432, %v2426
    %v2817 = vpack.c.b16 %v2433, %v2427
    %3202 = vmatprep.subr.bf16.mxu0 %v2435
    %3203 = vmatpush1.bf16.msra.mxu0 %v2434
    %3204 = vmatprep.subr.bf16.mxu0 %v2441
    %3205 = vmatpush1.bf16.msra.mxu0 %v2440
    %3206 = vmatprep.subr.bf16.mxu0 %v2447
    %3207 = vmatpush1.bf16.msra.mxu0 %v2446
    %3208 = vmatprep.subr.bf16.mxu0 %v2453
    %3209 = vmatpush1.bf16.msra.mxu0 %v2452
    %3210 = vmatprep.subr.bf16.mxu0 %v2459
    %3211 = vmatpush1.bf16.msra.mxu0 %v2458
    %3212 = vmatprep.subr.bf16.mxu0 %v2465
    %3213 = vmatpush1.bf16.msra.mxu0 %v2464
    %3214 = vmatprep.subr.bf16.mxu0 %v2471
    %3215 = vmatpush1.bf16.msra.mxu0 %v2470
    %3216 = vmatprep.subr.bf16.mxu0 %v2477
    %3217 = vmatpush1.bf16.msra.mxu0 %v2476
    %3218 = vmatprep.subr.bf16.mxu0 %v2483
    %3219 = vmatpush1.bf16.msra.mxu0 %v2482
    %3220 = vmatprep.subr.bf16.mxu0 %v2489
    %3221 = vmatpush1.bf16.msra.mxu0 %v2488
    %3222 = vmatprep.subr.bf16.mxu0 %v2495
    %3223 = vmatpush1.bf16.msra.mxu0 %v2494
    %3224 = vmatprep.subr.bf16.mxu0 %v2501
    %3225 = vmatpush1.bf16.msra.mxu0 %v2500
    %3226 = vmatprep.subr.bf16.mxu0 %v2507
    %3227 = vmatpush1.bf16.msra.mxu0 %v2506
    %3228 = vmatprep.subr.bf16.mxu0 %v2513
    %3229 = vmatpush1.bf16.msra.mxu0 %v2512
    %3230 = vmatprep.subr.bf16.mxu0 %v2519
    %3231 = vmatpush1.bf16.msra.mxu0 %v2518
    %3232 = vmatprep.subr.bf16.mxu0 %v2525
    %3233 = vmatpush1.bf16.msra.mxu0 %v2524
    %3234 = vmatprep.mubr.bf16.mxu0 %v859
    %3235 = vmatmul.mubr.bf16.gmra.mrb[0].mxu0 %v858
    %v3236 = vpop.f32.mrb[0].mxu0
    %v3237 = vadd.f32 %v1255, %v3236
    %v3238 = vpop.f32.mrb[0].mxu0
    %v3239 = vadd.f32 %v1259, %v3238
    %v3240 = vpop.f32.mrb[0].mxu0
    %v3241 = vpop.f32.mrb[0].mxu0
    %3242 = vdwg.mxu0
    %3243 = vmatprep.subr.bf16.mxu0 %v2531
    %3244 = vmatpush1.bf16.msra.mxu0 %v2530
    %3245 = vmatprep.subr.bf16.mxu0 %v2537
    %3246 = vmatpush1.bf16.msra.mxu0 %v2536
    %3247 = vmatprep.subr.bf16.mxu0 %v2543
    %3248 = vmatpush1.bf16.msra.mxu0 %v2542
    %3249 = vmatprep.subr.bf16.mxu0 %v2549
    %3250 = vmatpush1.bf16.msra.mxu0 %v2548
    %3251 = vmatprep.subr.bf16.mxu0 %v2555
    %3252 = vmatpush1.bf16.msra.mxu0 %v2554
    %3253 = vmatprep.subr.bf16.mxu0 %v2561
    %3254 = vmatpush1.bf16.msra.mxu0 %v2560
    %3255 = vmatprep.subr.bf16.mxu0 %v2567
    %3256 = vmatpush1.bf16.msra.mxu0 %v2566
    %3257 = vmatprep.subr.bf16.mxu0 %v2573
    %3258 = vmatpush1.bf16.msra.mxu0 %v2572
    %3259 = vmatprep.subr.bf16.mxu0 %v2579
    %3260 = vmatpush1.bf16.msra.mxu0 %v2578
    %3261 = vmatprep.subr.bf16.mxu0 %v2585
    %3262 = vmatpush1.bf16.msra.mxu0 %v2584
    %3263 = vmatprep.subr.bf16.mxu0 %v2591
    %3264 = vmatpush1.bf16.msra.mxu0 %v2590
    %3265 = vmatprep.subr.bf16.mxu0 %v2597
    %3266 = vmatpush1.bf16.msra.mxu0 %v2596
    %3267 = vmatprep.subr.bf16.mxu0 %v2603
    %3268 = vmatpush1.bf16.msra.mxu0 %v2602
    %3269 = vmatprep.subr.bf16.mxu0 %v2609
    %3270 = vmatpush1.bf16.msra.mxu0 %v2608
    %3271 = vmatprep.subr.bf16.mxu0 %v2615
    %3272 = vmatpush1.bf16.msra.mxu0 %v2614
    %3273 = vmatprep.subr.bf16.mxu0 %v2621
    %3274 = vmatpush1.bf16.msra.mxu0 %v2620
    %3275 = vmatprep.mubr.bf16.mxu0 %v861
    %3276 = vmatmul.mubr.bf16.gmra.mrb[0].mxu0 %v860
    %v3277 = vpop.f32.mrb[0].mxu0
    %v3278 = vadd.f32 %v3237, %v3277
    %v3279 = vpop.f32.mrb[0].mxu0
    %v3280 = vadd.f32 %v3239, %v3279
    %v3281 = vpop.f32.mrb[0].mxu0
    %v3282 = vpop.f32.mrb[0].mxu0
    %3283 = vdwg.mxu0
    %3284 = vmatprep.subr.bf16.mxu0 %v2627
    %3285 = vmatpush1.bf16.msra.mxu0 %v2626
    %3286 = vmatprep.subr.bf16.mxu0 %v2633
    %3287 = vmatpush1.bf16.msra.mxu0 %v2632
    %3288 = vmatprep.subr.bf16.mxu0 %v2639
    %3289 = vmatpush1.bf16.msra.mxu0 %v2638
    %3290 = vmatprep.subr.bf16.mxu0 %v2645
    %3291 = vmatpush1.bf16.msra.mxu0 %v2644
    %3292 = vmatprep.subr.bf16.mxu0 %v2651
    %3293 = vmatpush1.bf16.msra.mxu0 %v2650
    %3294 = vmatprep.subr.bf16.mxu0 %v2657
    %3295 = vmatpush1.bf16.msra.mxu0 %v2656
    %3296 = vmatprep.subr.bf16.mxu0 %v2663
    %3297 = vmatpush1.bf16.msra.mxu0 %v2662
    %3298 = vmatprep.subr.bf16.mxu0 %v2669
    %3299 = vmatpush1.bf16.msra.mxu0 %v2668
    %3300 = vmatprep.subr.bf16.mxu0 %v2675
    %3301 = vmatpush1.bf16.msra.mxu0 %v2674
    %3302 = vmatprep.subr.bf16.mxu0 %v2681
    %3303 = vmatpush1.bf16.msra.mxu0 %v2680
    %3304 = vmatprep.subr.bf16.mxu0 %v2687
    %3305 = vmatpush1.bf16.msra.mxu0 %v2686
    %3306 = vmatprep.subr.bf16.mxu0 %v2693
    %3307 = vmatpush1.bf16.msra.mxu0 %v2692
    %3308 = vmatprep.subr.bf16.mxu0 %v2699
    %3309 = vmatpush1.bf16.msra.mxu0 %v2698
    %3310 = vmatprep.subr.bf16.mxu0 %v2705
    %3311 = vmatpush1.bf16.msra.mxu0 %v2704
    %3312 = vmatprep.subr.bf16.mxu0 %v2711
    %3313 = vmatpush1.bf16.msra.mxu0 %v2710
    %3314 = vmatprep.subr.bf16.mxu0 %v2717
    %3315 = vmatpush1.bf16.msra.mxu0 %v2716
    %3316 = vmatprep.mubr.bf16.mxu0 %v863
    %3317 = vmatmul.mubr.bf16.gmra.mrb[0].mxu0 %v862
    %v3318 = vpop.f32.mrb[0].mxu0
    %v3319 = vadd.f32 %v3278, %v3318
    %v3320 = vpop.f32.mrb[0].mxu0
    %v3321 = vadd.f32 %v3280, %v3320
    %v3322 = vpop.f32.mrb[0].mxu0
    %v3323 = vpop.f32.mrb[0].mxu0
    %3324 = vdwg.mxu0
    %3325 = vmatprep.subr.bf16.mxu0 %v2723
    %3326 = vmatpush1.bf16.msra.mxu0 %v2722
    %3327 = vmatprep.subr.bf16.mxu0 %v2729
    %3328 = vmatpush1.bf16.msra.mxu0 %v2728
    %3329 = vmatprep.subr.bf16.mxu0 %v2735
    %3330 = vmatpush1.bf16.msra.mxu0 %v2734
    %3331 = vmatprep.subr.bf16.mxu0 %v2741
    %3332 = vmatpush1.bf16.msra.mxu0 %v2740
    %3333 = vmatprep.subr.bf16.mxu0 %v2747
    %3334 = vmatpush1.bf16.msra.mxu0 %v2746
    %3335 = vmatprep.subr.bf16.mxu0 %v2753
    %3336 = vmatpush1.bf16.msra.mxu0 %v2752
    %3337 = vmatprep.subr.bf16.mxu0 %v2759
    %3338 = vmatpush1.bf16.msra.mxu0 %v2758
    %3339 = vmatprep.subr.bf16.mxu0 %v2765
    %3340 = vmatpush1.bf16.msra.mxu0 %v2764
    %3341 = vmatprep.subr.bf16.mxu0 %v2771
    %3342 = vmatpush1.bf16.msra.mxu0 %v2770
    %3343 = vmatprep.subr.bf16.mxu0 %v2777
    %3344 = vmatpush1.bf16.msra.mxu0 %v2776
    %3345 = vmatprep.subr.bf16.mxu0 %v2783
    %3346 = vmatpush1.bf16.msra.mxu0 %v2782
    %3347 = vmatprep.subr.bf16.mxu0 %v2789
    %3348 = vmatpush1.bf16.msra.mxu0 %v2788
    %3349 = vmatprep.subr.bf16.mxu0 %v2795
    %3350 = vmatpush1.bf16.msra.mxu0 %v2794
    %3351 = vmatprep.subr.bf16.mxu0 %v2801
    %3352 = vmatpush1.bf16.msra.mxu0 %v2800
    %3353 = vmatprep.subr.bf16.mxu0 %v2807
    %3354 = vmatpush1.bf16.msra.mxu0 %v2806
    %3355 = vmatprep.subr.bf16.mxu0 %v2813
    %3356 = vmatpush1.bf16.msra.mxu0 %v2812
    %3357 = vmatprep.mubr.bf16.mxu0 %v865
    %3358 = vmatmul.mubr.bf16.gmra.mrb[0].mxu0 %v864
    %v3359 = vpop.f32.mrb[0].mxu0
    %v3360 = vadd.f32 %v3319, %v3359
    %v3361 = vpop.f32.mrb[0].mxu0
    %v3362 = vadd.f32 %v3321, %v3361
    %v3363 = vpop.f32.mrb[0].mxu0
    %v3364 = vpop.f32.mrb[0].mxu0
    %3365 = vdwg.mxu0
    %3366 = vmatprep.subr.bf16.mxu0 %v2437
    %3367 = vmatpush1.bf16.msra.mxu0 %v2436
    %3368 = vmatprep.subr.bf16.mxu0 %v2443
    %3369 = vmatpush1.bf16.msra.mxu0 %v2442
    %3370 = vmatprep.subr.bf16.mxu0 %v2449
    %3371 = vmatpush1.bf16.msra.mxu0 %v2448
    %3372 = vmatprep.subr.bf16.mxu0 %v2455
    %3373 = vmatpush1.bf16.msra.mxu0 %v2454
    %3374 = vmatprep.subr.bf16.mxu0 %v2461
    %3375 = vmatpush1.bf16.msra.mxu0 %v2460
    %3376 = vmatprep.subr.bf16.mxu0 %v2467
    %3377 = vmatpush1.bf16.msra.mxu0 %v2466
    %3378 = vmatprep.subr.bf16.mxu0 %v2473
    %3379 = vmatpush1.bf16.msra.mxu0 %v2472
    %3380 = vmatprep.subr.bf16.mxu0 %v2479
    %3381 = vmatpush1.bf16.msra.mxu0 %v2478
    %3382 = vmatprep.subr.bf16.mxu0 %v2485
    %3383 = vmatpush1.bf16.msra.mxu0 %v2484
    %3384 = vmatprep.subr.bf16.mxu0 %v2491
    %3385 = vmatpush1.bf16.msra.mxu0 %v2490
    %3386 = vmatprep.subr.bf16.mxu0 %v2497
    %3387 = vmatpush1.bf16.msra.mxu0 %v2496
    %3388 = vmatprep.subr.bf16.mxu0 %v2503
    %3389 = vmatpush1.bf16.msra.mxu0 %v2502
    %3390 = vmatprep.subr.bf16.mxu0 %v2509
    %3391 = vmatpush1.bf16.msra.mxu0 %v2508
    %3392 = vmatprep.subr.bf16.mxu0 %v2515
    %3393 = vmatpush1.bf16.msra.mxu0 %v2514
    %3394 = vmatprep.subr.bf16.mxu0 %v2521
    %3395 = vmatpush1.bf16.msra.mxu0 %v2520
    %3396 = vmatprep.subr.bf16.mxu0 %v2527
    %3397 = vmatpush1.bf16.msra.mxu0 %v2526
    %3398 = vmatprep.mubr.bf16.mxu0 %v859
    %3399 = vmatmul.mubr.bf16.gmra.mrb[0].mxu0 %v858
    %v3400 = vpop.f32.mrb[0].mxu0
    %v3401 = vadd.f32 %v1263, %v3400
    %v3402 = vpop.f32.mrb[0].mxu0
    %v3403 = vadd.f32 %v1267, %v3402
    %v3404 = vpop.f32.mrb[0].mxu0
    %v3405 = vpop.f32.mrb[0].mxu0
    %3406 = vdwg.mxu0
    %3407 = vmatprep.subr.bf16.mxu0 %v2533
    %3408 = vmatpush1.bf16.msra.mxu0 %v2532
    %3409 = vmatprep.subr.bf16.mxu0 %v2539
    %3410 = vmatpush1.bf16.msra.mxu0 %v2538
    %3411 = vmatprep.subr.bf16.mxu0 %v2545
    %3412 = vmatpush1.bf16.msra.mxu0 %v2544
    %3413 = vmatprep.subr.bf16.mxu0 %v2551
    %3414 = vmatpush1.bf16.msra.mxu0 %v2550
    %3415 = vmatprep.subr.bf16.mxu0 %v2557
    %3416 = vmatpush1.bf16.msra.mxu0 %v2556
    %3417 = vmatprep.subr.bf16.mxu0 %v2563
    %3418 = vmatpush1.bf16.msra.mxu0 %v2562
    %3419 = vmatprep.subr.bf16.mxu0 %v2569
    %3420 = vmatpush1.bf16.msra.mxu0 %v2568
    %3421 = vmatprep.subr.bf16.mxu0 %v2575
    %3422 = vmatpush1.bf16.msra.mxu0 %v2574
    %3423 = vmatprep.subr.bf16.mxu0 %v2581
    %3424 = vmatpush1.bf16.msra.mxu0 %v2580
    %3425 = vmatprep.subr.bf16.mxu0 %v2587
    %3426 = vmatpush1.bf16.msra.mxu0 %v2586
    %3427 = vmatprep.subr.bf16.mxu0 %v2593
    %3428 = vmatpush1.bf16.msra.mxu0 %v2592
    %3429 = vmatprep.subr.bf16.mxu0 %v2599
    %3430 = vmatpush1.bf16.msra.mxu0 %v2598
    %3431 = vmatprep.subr.bf16.mxu0 %v2605
    %3432 = vmatpush1.bf16.msra.mxu0 %v2604
    %3433 = vmatprep.subr.bf16.mxu0 %v2611
    %3434 = vmatpush1.bf16.msra.mxu0 %v2610
    %3435 = vmatprep.subr.bf16.mxu0 %v2617
    %3436 = vmatpush1.bf16.msra.mxu0 %v2616
    %3437 = vmatprep.subr.bf16.mxu0 %v2623
    %3438 = vmatpush1.bf16.msra.mxu0 %v2622
    %3439 = vmatprep.mubr.bf16.mxu0 %v861
    %3440 = vmatmul.mubr.bf16.gmra.mrb[0].mxu0 %v860
    %v3441 = vpop.f32.mrb[0].mxu0
    %v3442 = vadd.f32 %v3401, %v3441
    %v3443 = vpop.f32.mrb[0].mxu0
    %v3444 = vadd.f32 %v3403, %v3443
    %v3445 = vpop.f32.mrb[0].mxu0
    %v3446 = vpop.f32.mrb[0].mxu0
    %3447 = vdwg.mxu0
    %3448 = vmatprep.subr.bf16.mxu0 %v2629
    %3449 = vmatpush1.bf16.msra.mxu0 %v2628
    %3450 = vmatprep.subr.bf16.mxu0 %v2635
    %3451 = vmatpush1.bf16.msra.mxu0 %v2634
    %3452 = vmatprep.subr.bf16.mxu0 %v2641
    %3453 = vmatpush1.bf16.msra.mxu0 %v2640
    %3454 = vmatprep.subr.bf16.mxu0 %v2647
    %3455 = vmatpush1.bf16.msra.mxu0 %v2646
    %3456 = vmatprep.subr.bf16.mxu0 %v2653
    %3457 = vmatpush1.bf16.msra.mxu0 %v2652
    %3458 = vmatprep.subr.bf16.mxu0 %v2659
    %3459 = vmatpush1.bf16.msra.mxu0 %v2658
    %3460 = vmatprep.subr.bf16.mxu0 %v2665
    %3461 = vmatpush1.bf16.msra.mxu0 %v2664
    %3462 = vmatprep.subr.bf16.mxu0 %v2671
    %3463 = vmatpush1.bf16.msra.mxu0 %v2670
    %3464 = vmatprep.subr.bf16.mxu0 %v2677
    %3465 = vmatpush1.bf16.msra.mxu0 %v2676
    %3466 = vmatprep.subr.bf16.mxu0 %v2683
    %3467 = vmatpush1.bf16.msra.mxu0 %v2682
    %3468 = vmatprep.subr.bf16.mxu0 %v2689
    %3469 = vmatpush1.bf16.msra.mxu0 %v2688
    %3470 = vmatprep.subr.bf16.mxu0 %v2695
    %3471 = vmatpush1.bf16.msra.mxu0 %v2694
    %3472 = vmatprep.subr.bf16.mxu0 %v2701
    %3473 = vmatpush1.bf16.msra.mxu0 %v2700
    %3474 = vmatprep.subr.bf16.mxu0 %v2707
    %3475 = vmatpush1.bf16.msra.mxu0 %v2706
    %3476 = vmatprep.subr.bf16.mxu0 %v2713
    %3477 = vmatpush1.bf16.msra.mxu0 %v2712
    %3478 = vmatprep.subr.bf16.mxu0 %v2719
    %3479 = vmatpush1.bf16.msra.mxu0 %v2718
    %3480 = vmatprep.mubr.bf16.mxu0 %v863
    %3481 = vmatmul.mubr.bf16.gmra.mrb[0].mxu0 %v862
    %v3482 = vpop.f32.mrb[0].mxu0
    %v3483 = vadd.f32 %v3442, %v3482
    %v3484 = vpop.f32.mrb[0].mxu0
    %v3485 = vadd.f32 %v3444, %v3484
    %v3486 = vpop.f32.mrb[0].mxu0
    %v3487 = vpop.f32.mrb[0].mxu0
    %3488 = vdwg.mxu0
    %3489 = vmatprep.subr.bf16.mxu0 %v2725
    %3490 = vmatpush1.bf16.msra.mxu0 %v2724
    %3491 = vmatprep.subr.bf16.mxu0 %v2731
    %3492 = vmatpush1.bf16.msra.mxu0 %v2730
    %3493 = vmatprep.subr.bf16.mxu0 %v2737
    %3494 = vmatpush1.bf16.msra.mxu0 %v2736
    %3495 = vmatprep.subr.bf16.mxu0 %v2743
    %3496 = vmatpush1.bf16.msra.mxu0 %v2742
    %3497 = vmatprep.subr.bf16.mxu0 %v2749
    %3498 = vmatpush1.bf16.msra.mxu0 %v2748
    %3499 = vmatprep.subr.bf16.mxu0 %v2755
    %3500 = vmatpush1.bf16.msra.mxu0 %v2754
    %3501 = vmatprep.subr.bf16.mxu0 %v2761
    %3502 = vmatpush1.bf16.msra.mxu0 %v2760
    %3503 = vmatprep.subr.bf16.mxu0 %v2767
    %3504 = vmatpush1.bf16.msra.mxu0 %v2766
    %3505 = vmatprep.subr.bf16.mxu0 %v2773
    %3506 = vmatpush1.bf16.msra.mxu0 %v2772
    %3507 = vmatprep.subr.bf16.mxu0 %v2779
    %3508 = vmatpush1.bf16.msra.mxu0 %v2778
    %3509 = vmatprep.subr.bf16.mxu0 %v2785
    %3510 = vmatpush1.bf16.msra.mxu0 %v2784
    %3511 = vmatprep.subr.bf16.mxu0 %v2791
    %3512 = vmatpush1.bf16.msra.mxu0 %v2790
    %3513 = vmatprep.subr.bf16.mxu0 %v2797
    %3514 = vmatpush1.bf16.msra.mxu0 %v2796
    %3515 = vmatprep.subr.bf16.mxu0 %v2803
    %3516 = vmatpush1.bf16.msra.mxu0 %v2802
    %3517 = vmatprep.subr.bf16.mxu0 %v2809
    %3518 = vmatpush1.bf16.msra.mxu0 %v2808
    %3519 = vmatprep.subr.bf16.mxu0 %v2815
    %3520 = vmatpush1.bf16.msra.mxu0 %v2814
    %3521 = vmatprep.mubr.bf16.mxu0 %v865
    %3522 = vmatmul.mubr.bf16.gmra.mrb[0].mxu0 %v864
    %v3523 = vpop.f32.mrb[0].mxu0
    %v3524 = vadd.f32 %v3483, %v3523
    %v3525 = vpop.f32.mrb[0].mxu0
    %v3526 = vadd.f32 %v3485, %v3525
    %v3527 = vpop.f32.mrb[0].mxu0
    %v3528 = vpop.f32.mrb[0].mxu0
    %3529 = vdwg.mxu0
    %3530 = vmatprep.subr.bf16.mxu0 %v2439
    %3531 = vmatpush1.bf16.msra.mxu0 %v2438
    %3532 = vmatprep.subr.bf16.mxu0 %v2445
    %3533 = vmatpush1.bf16.msra.mxu0 %v2444
    %3534 = vmatprep.subr.bf16.mxu0 %v2451
    %3535 = vmatpush1.bf16.msra.mxu0 %v2450
    %3536 = vmatprep.subr.bf16.mxu0 %v2457
    %3537 = vmatpush1.bf16.msra.mxu0 %v2456
    %3538 = vmatprep.subr.bf16.mxu0 %v2463
    %3539 = vmatpush1.bf16.msra.mxu0 %v2462
    %3540 = vmatprep.subr.bf16.mxu0 %v2469
    %3541 = vmatpush1.bf16.msra.mxu0 %v2468
    %3542 = vmatprep.subr.bf16.mxu0 %v2475
    %3543 = vmatpush1.bf16.msra.mxu0 %v2474
    %3544 = vmatprep.subr.bf16.mxu0 %v2481
    %3545 = vmatpush1.bf16.msra.mxu0 %v2480
    %3546 = vmatprep.subr.bf16.mxu0 %v2487
    %3547 = vmatpush1.bf16.msra.mxu0 %v2486
    %3548 = vmatprep.subr.bf16.mxu0 %v2493
    %3549 = vmatpush1.bf16.msra.mxu0 %v2492
    %3550 = vmatprep.subr.bf16.mxu0 %v2499
    %3551 = vmatpush1.bf16.msra.mxu0 %v2498
    %3552 = vmatprep.subr.bf16.mxu0 %v2505
    %3553 = vmatpush1.bf16.msra.mxu0 %v2504
    %3554 = vmatprep.subr.bf16.mxu0 %v2511
    %3555 = vmatpush1.bf16.msra.mxu0 %v2510
    %3556 = vmatprep.subr.bf16.mxu0 %v2517
    %3557 = vmatpush1.bf16.msra.mxu0 %v2516
    %3558 = vmatprep.subr.bf16.mxu0 %v2523
    %3559 = vmatpush1.bf16.msra.mxu0 %v2522
    %3560 = vmatprep.subr.bf16.mxu0 %v2529
    %3561 = vmatpush1.bf16.msra.mxu0 %v2528
    %3562 = vmatprep.mubr.bf16.mxu0 %v859
    %3563 = vmatmul.mubr.bf16.gmra.mrb[0].mxu0 %v858
    %v3564 = vpop.f32.mrb[0].mxu0
    %v3565 = vadd.f32 %v1271, %v3564
    %v3566 = vpop.f32.mrb[0].mxu0
    %v3567 = vadd.f32 %v1275, %v3566
    %v3568 = vpop.f32.mrb[0].mxu0
    %v3569 = vpop.f32.mrb[0].mxu0
    %3570 = vdwg.mxu0
    %3571 = vmatprep.subr.bf16.mxu0 %v2535
    %3572 = vmatpush1.bf16.msra.mxu0 %v2534
    %3573 = vmatprep.subr.bf16.mxu0 %v2541
    %3574 = vmatpush1.bf16.msra.mxu0 %v2540
    %3575 = vmatprep.subr.bf16.mxu0 %v2547
    %3576 = vmatpush1.bf16.msra.mxu0 %v2546
    %3577 = vmatprep.subr.bf16.mxu0 %v2553
    %3578 = vmatpush1.bf16.msra.mxu0 %v2552
    %3579 = vmatprep.subr.bf16.mxu0 %v2559
    %3580 = vmatpush1.bf16.msra.mxu0 %v2558
    %3581 = vmatprep.subr.bf16.mxu0 %v2565
    %3582 = vmatpush1.bf16.msra.mxu0 %v2564
    %3583 = vmatprep.subr.bf16.mxu0 %v2571
    %3584 = vmatpush1.bf16.msra.mxu0 %v2570
    %3585 = vmatprep.subr.bf16.mxu0 %v2577
    %3586 = vmatpush1.bf16.msra.mxu0 %v2576
    %3587 = vmatprep.subr.bf16.mxu0 %v2583
    %3588 = vmatpush1.bf16.msra.mxu0 %v2582
    %3589 = vmatprep.subr.bf16.mxu0 %v2589
    %3590 = vmatpush1.bf16.msra.mxu0 %v2588
    %3591 = vmatprep.subr.bf16.mxu0 %v2595
    %3592 = vmatpush1.bf16.msra.mxu0 %v2594
    %3593 = vmatprep.subr.bf16.mxu0 %v2601
    %3594 = vmatpush1.bf16.msra.mxu0 %v2600
    %3595 = vmatprep.subr.bf16.mxu0 %v2607
    %3596 = vmatpush1.bf16.msra.mxu0 %v2606
    %3597 = vmatprep.subr.bf16.mxu0 %v2613
    %3598 = vmatpush1.bf16.msra.mxu0 %v2612
    %3599 = vmatprep.subr.bf16.mxu0 %v2619
    %3600 = vmatpush1.bf16.msra.mxu0 %v2618
    %3601 = vmatprep.subr.bf16.mxu0 %v2625
    %3602 = vmatpush1.bf16.msra.mxu0 %v2624
    %3603 = vmatprep.mubr.bf16.mxu0 %v861
    %3604 = vmatmul.mubr.bf16.gmra.mrb[0].mxu0 %v860
    %v3605 = vpop.f32.mrb[0].mxu0
    %v3606 = vadd.f32 %v3565, %v3605
    %v3607 = vpop.f32.mrb[0].mxu0
    %v3608 = vadd.f32 %v3567, %v3607
    %v3609 = vpop.f32.mrb[0].mxu0
    %v3610 = vpop.f32.mrb[0].mxu0
    %3611 = vdwg.mxu0
    %3612 = vmatprep.subr.bf16.mxu0 %v2631
    %3613 = vmatpush1.bf16.msra.mxu0 %v2630
    %3614 = vmatprep.subr.bf16.mxu0 %v2637
    %3615 = vmatpush1.bf16.msra.mxu0 %v2636
    %3616 = vmatprep.subr.bf16.mxu0 %v2643
    %3617 = vmatpush1.bf16.msra.mxu0 %v2642
    %3618 = vmatprep.subr.bf16.mxu0 %v2649
    %3619 = vmatpush1.bf16.msra.mxu0 %v2648
    %3620 = vmatprep.subr.bf16.mxu0 %v2655
    %3621 = vmatpush1.bf16.msra.mxu0 %v2654
    %3622 = vmatprep.subr.bf16.mxu0 %v2661
    %3623 = vmatpush1.bf16.msra.mxu0 %v2660
    %3624 = vmatprep.subr.bf16.mxu0 %v2667
    %3625 = vmatpush1.bf16.msra.mxu0 %v2666
    %3626 = vmatprep.subr.bf16.mxu0 %v2673
    %3627 = vmatpush1.bf16.msra.mxu0 %v2672
    %3628 = vmatprep.subr.bf16.mxu0 %v2679
    %3629 = vmatpush1.bf16.msra.mxu0 %v2678
    %3630 = vmatprep.subr.bf16.mxu0 %v2685
    %3631 = vmatpush1.bf16.msra.mxu0 %v2684
    %3632 = vmatprep.subr.bf16.mxu0 %v2691
    %3633 = vmatpush1.bf16.msra.mxu0 %v2690
    %3634 = vmatprep.subr.bf16.mxu0 %v2697
    %3635 = vmatpush1.bf16.msra.mxu0 %v2696
    %3636 = vmatprep.subr.bf16.mxu0 %v2703
    %3637 = vmatpush1.bf16.msra.mxu0 %v2702
    %3638 = vmatprep.subr.bf16.mxu0 %v2709
    %3639 = vmatpush1.bf16.msra.mxu0 %v2708
    %3640 = vmatprep.subr.bf16.mxu0 %v2715
    %3641 = vmatpush1.bf16.msra.mxu0 %v2714
    %3642 = vmatprep.subr.bf16.mxu0 %v2721
    %3643 = vmatpush1.bf16.msra.mxu0 %v2720
    %3644 = vmatprep.mubr.bf16.mxu0 %v863
    %3645 = vmatmul.mubr.bf16.gmra.mrb[0].mxu0 %v862
    %v3646 = vpop.f32.mrb[0].mxu0
    %v3647 = vadd.f32 %v3606, %v3646
    %v3648 = vpop.f32.mrb[0].mxu0
    %v3649 = vadd.f32 %v3608, %v3648
    %v3650 = vpop.f32.mrb[0].mxu0
    %v3651 = vpop.f32.mrb[0].mxu0
    %3652 = vdwg.mxu0
    %3653 = vmatprep.subr.bf16.mxu0 %v2727
    %3654 = vmatpush1.bf16.msra.mxu0 %v2726
    %3655 = vmatprep.subr.bf16.mxu0 %v2733
    %3656 = vmatpush1.bf16.msra.mxu0 %v2732
    %3657 = vmatprep.subr.bf16.mxu0 %v2739
    %3658 = vmatpush1.bf16.msra.mxu0 %v2738
    %3659 = vmatprep.subr.bf16.mxu0 %v2745
    %3660 = vmatpush1.bf16.msra.mxu0 %v2744
    %3661 = vmatprep.subr.bf16.mxu0 %v2751
    %3662 = vmatpush1.bf16.msra.mxu0 %v2750
    %3663 = vmatprep.subr.bf16.mxu0 %v2757
    %3664 = vmatpush1.bf16.msra.mxu0 %v2756
    %3665 = vmatprep.subr.bf16.mxu0 %v2763
    %3666 = vmatpush1.bf16.msra.mxu0 %v2762
    %3667 = vmatprep.subr.bf16.mxu0 %v2769
    %3668 = vmatpush1.bf16.msra.mxu0 %v2768
    %3669 = vmatprep.subr.bf16.mxu0 %v2775
    %3670 = vmatpush1.bf16.msra.mxu0 %v2774
    %3671 = vmatprep.subr.bf16.mxu0 %v2781
    %3672 = vmatpush1.bf16.msra.mxu0 %v2780
    %3673 = vmatprep.subr.bf16.mxu0 %v2787
    %3674 = vmatpush1.bf16.msra.mxu0 %v2786
    %3675 = vmatprep.subr.bf16.mxu0 %v2793
    %3676 = vmatpush1.bf16.msra.mxu0 %v2792
    %3677 = vmatprep.subr.bf16.mxu0 %v2799
    %3678 = vmatpush1.bf16.msra.mxu0 %v2798
    %3679 = vmatprep.subr.bf16.mxu0 %v2805
    %3680 = vmatpush1.bf16.msra.mxu0 %v2804
    %3681 = vmatprep.subr.bf16.mxu0 %v2811
    %3682 = vmatpush1.bf16.msra.mxu0 %v2810
    %3683 = vmatprep.subr.bf16.mxu0 %v2817
    %3684 = vmatpush1.bf16.msra.mxu0 %v2816
    %3685 = vmatprep.mubr.bf16.mxu0 %v865
    %3686 = vmatmul.mubr.bf16.gmra.mrb[0].mxu0 %v864
    %v3687 = vpop.f32.mrb[0].mxu0
    %v3688 = vadd.f32 %v3647, %v3687
    %v3689 = vpop.f32.mrb[0].mxu0
    %v3690 = vadd.f32 %v3649, %v3689
    %v3691 = vpop.f32.mrb[0].mxu0
    %v3692 = vpop.f32.mrb[0].mxu0
    %3693 = vdwg.mxu0
    %s3694 = sld [smem:[#allocation25 + $0x1]]
    %vm3695 = vcmp.ge.f32.partialorder %v3360, 0.0
    %vm3696 = vcmp.ge.f32.partialorder %v3362, 0.0
    %vm3697 = vcmp.ge.f32.partialorder %v3524, 0.0
    %vm3698 = vcmp.ge.f32.partialorder %v3526, 0.0
    %vm3699 = vcmp.ge.f32.partialorder %v3688, 0.0
    %vm3700 = vcmp.ge.f32.partialorder %v3690, 0.0
    %v3701 = vstv %s3694
    %v3702 = vmul.f32 %v3701, %v3360
    %v3703 = vmul.f32 %v3701, %v3362
    %v3704 = vmul.f32 %v3701, %v3524
    %v3705 = vmul.f32 %v3701, %v3526
    %v3706 = vmul.f32 %v3701, %v3688
    %v3707 = vmul.f32 %v3701, %v3690
    %v3708 = vsel %vm3695, %v3360, %v3702
    %v3709 = vsel %vm3696, %v3362, %v3703
    %v3710 = vsel %vm3697, %v3524, %v3704
    %v3711 = vsel %vm3698, %v3526, %v3705
    %v3712 = vsel %vm3699, %v3688, %v3706
    %v3713 = vsel %vm3700, %v3690, %v3707
    %v3714 = vpack.c.bf16 %v3708, %v3708
    %v3715 = vpack.c.bf16 %v3709, %v3709
    %v3716 = vpack.c.bf16 %v3710, %v3710
    %v3717 = vpack.c.bf16 %v3711, %v3711
    %v3718 = vpack.c.bf16 %v3712, %v3712
    %v3719 = vpack.c.bf16 %v3713, %v3713
    %v3720 = vld [vmem:[#allocation10] sm:$0xff]
    %v3721 = vld [vmem:[#allocation10 + $0x8] sm:$0xff]
    %v3722 = vld [vmem:[#allocation10 + $0x10] sm:$0xff]
    %v3723 = vld [vmem:[#allocation10 + $0x18] sm:$0xff]
    %v3724 = vld [vmem:[#allocation10 + $0x20] sm:$0xff]
    %v3725 = vld [vmem:[#allocation10 + $0x28] sm:$0xff]
    %v3726 = vld [vmem:[#allocation10 + $0x30] sm:$0xff]
    %v3727 = vld [vmem:[#allocation10 + $0x38] sm:$0xff]
    %v3728 = vld [vmem:[#allocation10 + $0x40] sm:$0xff]
    %v3729 = vld [vmem:[#allocation10 + $0x48] sm:$0xff]
    %v3730 = vld [vmem:[#allocation10 + $0x50] sm:$0xff]
    %v3731 = vld [vmem:[#allocation10 + $0x58] sm:$0xff]
    %v3732 = vld [vmem:[#allocation10 + $0x60] sm:$0xff]
    %v3733 = vld [vmem:[#allocation10 + $0x68] sm:$0xff]
    %v3734 = vld [vmem:[#allocation10 + $0x70] sm:$0xff]
    %v3735 = vld [vmem:[#allocation10 + $0x78] sm:$0xff]
    %v3736 = vld [vmem:[#allocation10 + $0x80] sm:$0xff]
    %v3737 = vld [vmem:[#allocation10 + $0x88] sm:$0xff]
    %v3738 = vld [vmem:[#allocation10 + $0x90] sm:$0xff]
    %v3739 = vld [vmem:[#allocation10 + $0x98] sm:$0xff]
    %v3740 = vld [vmem:[#allocation10 + $0xa0] sm:$0xff]
    %v3741 = vld [vmem:[#allocation10 + $0xa8] sm:$0xff]
    %v3742 = vld [vmem:[#allocation10 + $0xb0] sm:$0xff]
    %v3743 = vld [vmem:[#allocation10 + $0xb8] sm:$0xff]
    %v3744 = vld [vmem:[#allocation10 + $0xc0] sm:$0xff]
    %v3745 = vld [vmem:[#allocation10 + $0xc8] sm:$0xff]
    %v3746 = vld [vmem:[#allocation10 + $0xd0] sm:$0xff]
    %v3747 = vld [vmem:[#allocation10 + $0xd8] sm:$0xff]
    %v3748 = vld [vmem:[#allocation10 + $0xe0] sm:$0xff]
    %v3749 = vld [vmem:[#allocation10 + $0xe8] sm:$0xff]
    %v3750 = vld [vmem:[#allocation10 + $0xf0] sm:$0xff]
    %v3751 = vld [vmem:[#allocation10 + $0xf8] sm:$0xff]
    %v3752 = vld [vmem:[#allocation10 + $0x100] sm:$0xff]
    %v3753 = vld [vmem:[#allocation10 + $0x108] sm:$0xff]
    %v3754 = vld [vmem:[#allocation10 + $0x110] sm:$0xff]
    %v3755 = vld [vmem:[#allocation10 + $0x118] sm:$0xff]
    %v3756 = vld [vmem:[#allocation10 + $0x120] sm:$0xff]
    %v3757 = vld [vmem:[#allocation10 + $0x128] sm:$0xff]
    %v3758 = vld [vmem:[#allocation10 + $0x130] sm:$0xff]
    %v3759 = vld [vmem:[#allocation10 + $0x138] sm:$0xff]
    %v3760 = vld [vmem:[#allocation10 + $0x140] sm:$0xff]
    %v3761 = vld [vmem:[#allocation10 + $0x148] sm:$0xff]
    %v3762 = vld [vmem:[#allocation10 + $0x150] sm:$0xff]
    %v3763 = vld [vmem:[#allocation10 + $0x158] sm:$0xff]
    %v3764 = vld [vmem:[#allocation10 + $0x160] sm:$0xff]
    %v3765 = vld [vmem:[#allocation10 + $0x168] sm:$0xff]
    %v3766 = vld [vmem:[#allocation10 + $0x170] sm:$0xff]
    %v3767 = vld [vmem:[#allocation10 + $0x178] sm:$0xff]
    %v3768 = vld [vmem:[#allocation10 + $0x180] sm:$0xff]
    %v3769 = vld [vmem:[#allocation10 + $0x188] sm:$0xff]
    %v3770 = vld [vmem:[#allocation10 + $0x190] sm:$0xff]
    %v3771 = vld [vmem:[#allocation10 + $0x198] sm:$0xff]
    %v3772 = vld [vmem:[#allocation10 + $0x1a0] sm:$0xff]
    %v3773 = vld [vmem:[#allocation10 + $0x1a8] sm:$0xff]
    %v3774 = vld [vmem:[#allocation10 + $0x1b0] sm:$0xff]
    %v3775 = vld [vmem:[#allocation10 + $0x1b8] sm:$0xff]
    %v3776 = vld [vmem:[#allocation10 + $0x1c0] sm:$0xff]
    %v3777 = vld [vmem:[#allocation10 + $0x1c8] sm:$0xff]
    %v3778 = vld [vmem:[#allocation10 + $0x1d0] sm:$0xff]
    %v3779 = vld [vmem:[#allocation10 + $0x1d8] sm:$0xff]
    %v3780 = vld [vmem:[#allocation10 + $0x1e0] sm:$0xff]
    %v3781 = vld [vmem:[#allocation10 + $0x1e8] sm:$0xff]
    %v3782 = vld [vmem:[#allocation10 + $0x1f0] sm:$0xff]
    %v3783 = vld [vmem:[#allocation10 + $0x1f8] sm:$0xff]
    %v3784 = vld [vmem:[#allocation10 + $0x200] sm:$0xff]
    %v3785 = vld [vmem:[#allocation10 + $0x208] sm:$0xff]
    %v3786 = vld [vmem:[#allocation10 + $0x210] sm:$0xff]
    %v3787 = vld [vmem:[#allocation10 + $0x218] sm:$0xff]
    %v3788 = vld [vmem:[#allocation10 + $0x220] sm:$0xff]
    %v3789 = vld [vmem:[#allocation10 + $0x228] sm:$0xff]
    %v3790 = vld [vmem:[#allocation10 + $0x230] sm:$0xff]
    %v3791 = vld [vmem:[#allocation10 + $0x238] sm:$0xff]
    %v3792 = vld [vmem:[#allocation10 + $0x240] sm:$0xff]
    %v3793 = vld [vmem:[#allocation10 + $0x248] sm:$0xff]
    %v3794 = vld [vmem:[#allocation10 + $0x250] sm:$0xff]
    %v3795 = vld [vmem:[#allocation10 + $0x258] sm:$0xff]
    %v3796 = vld [vmem:[#allocation10 + $0x260] sm:$0xff]
    %v3797 = vld [vmem:[#allocation10 + $0x268] sm:$0xff]
    %v3798 = vld [vmem:[#allocation10 + $0x270] sm:$0xff]
    %v3799 = vld [vmem:[#allocation10 + $0x278] sm:$0xff]
    %v3800 = vld [vmem:[#allocation10 + $0x280] sm:$0xff]
    %v3801 = vld [vmem:[#allocation10 + $0x288] sm:$0xff]
    %v3802 = vld [vmem:[#allocation10 + $0x290] sm:$0xff]
    %v3803 = vld [vmem:[#allocation10 + $0x298] sm:$0xff]
    %v3804 = vld [vmem:[#allocation10 + $0x2a0] sm:$0xff]
    %v3805 = vld [vmem:[#allocation10 + $0x2a8] sm:$0xff]
    %v3806 = vld [vmem:[#allocation10 + $0x2b0] sm:$0xff]
    %v3807 = vld [vmem:[#allocation10 + $0x2b8] sm:$0xff]
    %v3808 = vld [vmem:[#allocation10 + $0x2c0] sm:$0xff]
    %v3809 = vld [vmem:[#allocation10 + $0x2c8] sm:$0xff]
    %v3810 = vld [vmem:[#allocation10 + $0x2d0] sm:$0xff]
    %v3811 = vld [vmem:[#allocation10 + $0x2d8] sm:$0xff]
    %v3812 = vld [vmem:[#allocation10 + $0x2e0] sm:$0xff]
    %v3813 = vld [vmem:[#allocation10 + $0x2e8] sm:$0xff]
    %v3814 = vld [vmem:[#allocation10 + $0x2f0] sm:$0xff]
    %v3815 = vld [vmem:[#allocation10 + $0x2f8] sm:$0xff]
    %v3816 = vld [vmem:[#allocation10 + $0x300] sm:$0xff]
    %v3817 = vld [vmem:[#allocation10 + $0x308] sm:$0xff]
    %v3818 = vld [vmem:[#allocation10 + $0x310] sm:$0xff]
    %v3819 = vld [vmem:[#allocation10 + $0x318] sm:$0xff]
    %v3820 = vld [vmem:[#allocation10 + $0x320] sm:$0xff]
    %v3821 = vld [vmem:[#allocation10 + $0x328] sm:$0xff]
    %v3822 = vld [vmem:[#allocation10 + $0x330] sm:$0xff]
    %v3823 = vld [vmem:[#allocation10 + $0x338] sm:$0xff]
    %v3824 = vld [vmem:[#allocation10 + $0x340] sm:$0xff]
    %v3825 = vld [vmem:[#allocation10 + $0x348] sm:$0xff]
    %v3826 = vld [vmem:[#allocation10 + $0x350] sm:$0xff]
    %v3827 = vld [vmem:[#allocation10 + $0x358] sm:$0xff]
    %v3828 = vld [vmem:[#allocation10 + $0x360] sm:$0xff]
    %v3829 = vld [vmem:[#allocation10 + $0x368] sm:$0xff]
    %v3830 = vld [vmem:[#allocation10 + $0x370] sm:$0xff]
    %v3831 = vld [vmem:[#allocation10 + $0x378] sm:$0xff]
    %v3832 = vld [vmem:[#allocation10 + $0x380] sm:$0xff]
    %v3833 = vld [vmem:[#allocation10 + $0x388] sm:$0xff]
    %v3834 = vld [vmem:[#allocation10 + $0x390] sm:$0xff]
    %v3835 = vld [vmem:[#allocation10 + $0x398] sm:$0xff]
    %v3836 = vld [vmem:[#allocation10 + $0x3a0] sm:$0xff]
    %v3837 = vld [vmem:[#allocation10 + $0x3a8] sm:$0xff]
    %v3838 = vld [vmem:[#allocation10 + $0x3b0] sm:$0xff]
    %v3839 = vld [vmem:[#allocation10 + $0x3b8] sm:$0xff]
    %v3840 = vld [vmem:[#allocation10 + $0x3c0] sm:$0xff]
    %v3841 = vld [vmem:[#allocation10 + $0x3c8] sm:$0xff]
    %v3842 = vld [vmem:[#allocation10 + $0x3d0] sm:$0xff]
    %v3843 = vld [vmem:[#allocation10 + $0x3d8] sm:$0xff]
    %v3844 = vld [vmem:[#allocation10 + $0x3e0] sm:$0xff]
    %v3845 = vld [vmem:[#allocation10 + $0x3e8] sm:$0xff]
    %v3846 = vld [vmem:[#allocation10 + $0x3f0] sm:$0xff]
    %v3847 = vld [vmem:[#allocation10 + $0x3f8] sm:$0xff]
    %v3848 = vld [vmem:[#allocation10 + $0x400] sm:$0xff]
    %v3849 = vld [vmem:[#allocation10 + $0x408] sm:$0xff]
    %v3850 = vld [vmem:[#allocation10 + $0x410] sm:$0xff]
    %v3851 = vld [vmem:[#allocation10 + $0x418] sm:$0xff]
    %v3852 = vld [vmem:[#allocation10 + $0x420] sm:$0xff]
    %v3853 = vld [vmem:[#allocation10 + $0x428] sm:$0xff]
    %v3854 = vld [vmem:[#allocation10 + $0x430] sm:$0xff]
    %v3855 = vld [vmem:[#allocation10 + $0x438] sm:$0xff]
    %v3856 = vld [vmem:[#allocation10 + $0x440] sm:$0xff]
    %v3857 = vld [vmem:[#allocation10 + $0x448] sm:$0xff]
    %v3858 = vld [vmem:[#allocation10 + $0x450] sm:$0xff]
    %v3859 = vld [vmem:[#allocation10 + $0x458] sm:$0xff]
    %v3860 = vld [vmem:[#allocation10 + $0x460] sm:$0xff]
    %v3861 = vld [vmem:[#allocation10 + $0x468] sm:$0xff]
    %v3862 = vld [vmem:[#allocation10 + $0x470] sm:$0xff]
    %v3863 = vld [vmem:[#allocation10 + $0x478] sm:$0xff]
    %v3864 = vld [vmem:[#allocation10 + $0x480] sm:$0xff]
    %v3865 = vld [vmem:[#allocation10 + $0x488] sm:$0xff]
    %v3866 = vld [vmem:[#allocation10 + $0x490] sm:$0xff]
    %v3867 = vld [vmem:[#allocation10 + $0x498] sm:$0xff]
    %v3868 = vld [vmem:[#allocation10 + $0x4a0] sm:$0xff]
    %v3869 = vld [vmem:[#allocation10 + $0x4a8] sm:$0xff]
    %v3870 = vld [vmem:[#allocation10 + $0x4b0] sm:$0xff]
    %v3871 = vld [vmem:[#allocation10 + $0x4b8] sm:$0xff]
    %v3872 = vld [vmem:[#allocation10 + $0x4c0] sm:$0xff]
    %v3873 = vld [vmem:[#allocation10 + $0x4c8] sm:$0xff]
    %v3874 = vld [vmem:[#allocation10 + $0x4d0] sm:$0xff]
    %v3875 = vld [vmem:[#allocation10 + $0x4d8] sm:$0xff]
    %v3876 = vld [vmem:[#allocation10 + $0x4e0] sm:$0xff]
    %v3877 = vld [vmem:[#allocation10 + $0x4e8] sm:$0xff]
    %v3878 = vld [vmem:[#allocation10 + $0x4f0] sm:$0xff]
    %v3879 = vld [vmem:[#allocation10 + $0x4f8] sm:$0xff]
    %v3880 = vld [vmem:[#allocation10 + $0x500] sm:$0xff]
    %v3881 = vld [vmem:[#allocation10 + $0x508] sm:$0xff]
    %v3882 = vld [vmem:[#allocation10 + $0x510] sm:$0xff]
    %v3883 = vld [vmem:[#allocation10 + $0x518] sm:$0xff]
    %v3884 = vld [vmem:[#allocation10 + $0x520] sm:$0xff]
    %v3885 = vld [vmem:[#allocation10 + $0x528] sm:$0xff]
    %v3886 = vld [vmem:[#allocation10 + $0x530] sm:$0xff]
    %v3887 = vld [vmem:[#allocation10 + $0x538] sm:$0xff]
    %v3888 = vld [vmem:[#allocation10 + $0x540] sm:$0xff]
    %v3889 = vld [vmem:[#allocation10 + $0x548] sm:$0xff]
    %v3890 = vld [vmem:[#allocation10 + $0x550] sm:$0xff]
    %v3891 = vld [vmem:[#allocation10 + $0x558] sm:$0xff]
    %v3892 = vld [vmem:[#allocation10 + $0x560] sm:$0xff]
    %v3893 = vld [vmem:[#allocation10 + $0x568] sm:$0xff]
    %v3894 = vld [vmem:[#allocation10 + $0x570] sm:$0xff]
    %v3895 = vld [vmem:[#allocation10 + $0x578] sm:$0xff]
    %v3896 = vld [vmem:[#allocation10 + $0x580] sm:$0xff]
    %v3897 = vld [vmem:[#allocation10 + $0x588] sm:$0xff]
    %v3898 = vld [vmem:[#allocation10 + $0x590] sm:$0xff]
    %v3899 = vld [vmem:[#allocation10 + $0x598] sm:$0xff]
    %v3900 = vld [vmem:[#allocation10 + $0x5a0] sm:$0xff]
    %v3901 = vld [vmem:[#allocation10 + $0x5a8] sm:$0xff]
    %v3902 = vld [vmem:[#allocation10 + $0x5b0] sm:$0xff]
    %v3903 = vld [vmem:[#allocation10 + $0x5b8] sm:$0xff]
    %v3904 = vld [vmem:[#allocation10 + $0x5c0] sm:$0xff]
    %v3905 = vld [vmem:[#allocation10 + $0x5c8] sm:$0xff]
    %v3906 = vld [vmem:[#allocation10 + $0x5d0] sm:$0xff]
    %v3907 = vld [vmem:[#allocation10 + $0x5d8] sm:$0xff]
    %v3908 = vld [vmem:[#allocation10 + $0x5e0] sm:$0xff]
    %v3909 = vld [vmem:[#allocation10 + $0x5e8] sm:$0xff]
    %v3910 = vld [vmem:[#allocation10 + $0x5f0] sm:$0xff]
    %v3911 = vld [vmem:[#allocation10 + $0x5f8] sm:$0xff]
    %v3912 = vld [vmem:[#allocation11] sm:$0xf]
    %v3914 = vlaneseq
    %v3915 = vshrl.u32 %v3914, 7
    %v3916 = vsub.s32 0, %v3915
    %v3917 = vrot.slane %v3912, %v3916
    %v3918 = vlaneseq
    %v3919 = vshrl.u32 %v3918, 7
    %v3920 = vsub.s32 1, %v3919
    %v3921 = vrot.slane %v3912, %v3920
    %v3922 = vlaneseq
    %v3923 = vshrl.u32 %v3922, 7
    %v3924 = vsub.s32 2, %v3923
    %v3925 = vrot.slane %v3912, %v3924
    %v3926 = vlaneseq
    %v3927 = vshrl.u32 %v3926, 7
    %v3928 = vsub.s32 3, %v3927
    %v3929 = vrot.slane %v3912, %v3928
    %v4126 = vunpack.c.l.b16 %v3720
    %v4127 = vunpack.c.h.b16 %v3720
    %v4128 = vunpack.c.l.b16 %v3721
    %v4129 = vunpack.c.h.b16 %v3721
    %v4130 = vunpack.c.l.b16 %v3722
    %v4131 = vunpack.c.h.b16 %v3722
    %v4132 = vunpack.c.l.b16 %v3723
    %v4133 = vunpack.c.h.b16 %v3723
    %v4134 = vunpack.c.l.b16 %v3724
    %v4135 = vunpack.c.h.b16 %v3724
    %v4136 = vunpack.c.l.b16 %v3725
    %v4137 = vunpack.c.h.b16 %v3725
    %v4138 = vunpack.c.l.b16 %v3726
    %v4139 = vunpack.c.h.b16 %v3726
    %v4140 = vunpack.c.l.b16 %v3727
    %v4141 = vunpack.c.h.b16 %v3727
    %v4142 = vunpack.c.l.b16 %v3728
    %v4143 = vunpack.c.h.b16 %v3728
    %v4144 = vunpack.c.l.b16 %v3729
    %v4145 = vunpack.c.h.b16 %v3729
    %v4146 = vunpack.c.l.b16 %v3730
    %v4147 = vunpack.c.h.b16 %v3730
    %v4148 = vunpack.c.l.b16 %v3731
    %v4149 = vunpack.c.h.b16 %v3731
    %v4150 = vunpack.c.l.b16 %v3732
    %v4151 = vunpack.c.h.b16 %v3732
    %v4152 = vunpack.c.l.b16 %v3733
    %v4153 = vunpack.c.h.b16 %v3733
    %v4154 = vunpack.c.l.b16 %v3734
    %v4155 = vunpack.c.h.b16 %v3734
    %v4156 = vunpack.c.l.b16 %v3735
    %v4157 = vunpack.c.h.b16 %v3735
    %v4158 = vunpack.c.l.b16 %v3736
    %v4159 = vunpack.c.h.b16 %v3736
    %v4160 = vunpack.c.l.b16 %v3737
    %v4161 = vunpack.c.h.b16 %v3737
    %v4162 = vunpack.c.l.b16 %v3738
    %v4163 = vunpack.c.h.b16 %v3738
    %v4164 = vunpack.c.l.b16 %v3739
    %v4165 = vunpack.c.h.b16 %v3739
    %v4166 = vunpack.c.l.b16 %v3740
    %v4167 = vunpack.c.h.b16 %v3740
    %v4168 = vunpack.c.l.b16 %v3741
    %v4169 = vunpack.c.h.b16 %v3741
    %v4170 = vunpack.c.l.b16 %v3742
    %v4171 = vunpack.c.h.b16 %v3742
    %v4172 = vunpack.c.l.b16 %v3743
    %v4173 = vunpack.c.h.b16 %v3743
    %v4174 = vunpack.c.l.b16 %v3744
    %v4175 = vunpack.c.h.b16 %v3744
    %v4176 = vunpack.c.l.b16 %v3745
    %v4177 = vunpack.c.h.b16 %v3745
    %v4178 = vunpack.c.l.b16 %v3746
    %v4179 = vunpack.c.h.b16 %v3746
    %v4180 = vunpack.c.l.b16 %v3747
    %v4181 = vunpack.c.h.b16 %v3747
    %v4182 = vunpack.c.l.b16 %v3748
    %v4183 = vunpack.c.h.b16 %v3748
    %v4184 = vunpack.c.l.b16 %v3749
    %v4185 = vunpack.c.h.b16 %v3749
    %v4186 = vunpack.c.l.b16 %v3750
    %v4187 = vunpack.c.h.b16 %v3750
    %v4188 = vunpack.c.l.b16 %v3751
    %v4189 = vunpack.c.h.b16 %v3751
    %v4190 = vunpack.c.l.b16 %v3752
    %v4191 = vunpack.c.h.b16 %v3752
    %v4192 = vunpack.c.l.b16 %v3753
    %v4193 = vunpack.c.h.b16 %v3753
    %v4194 = vunpack.c.l.b16 %v3754
    %v4195 = vunpack.c.h.b16 %v3754
    %v4196 = vunpack.c.l.b16 %v3755
    %v4197 = vunpack.c.h.b16 %v3755
    %v4198 = vunpack.c.l.b16 %v3756
    %v4199 = vunpack.c.h.b16 %v3756
    %v4200 = vunpack.c.l.b16 %v3757
    %v4201 = vunpack.c.h.b16 %v3757
    %v4202 = vunpack.c.l.b16 %v3758
    %v4203 = vunpack.c.h.b16 %v3758
    %v4204 = vunpack.c.l.b16 %v3759
    %v4205 = vunpack.c.h.b16 %v3759
    %v4206 = vunpack.c.l.b16 %v3760
    %v4207 = vunpack.c.h.b16 %v3760
    %v4208 = vunpack.c.l.b16 %v3761
    %v4209 = vunpack.c.h.b16 %v3761
    %v4210 = vunpack.c.l.b16 %v3762
    %v4211 = vunpack.c.h.b16 %v3762
    %v4212 = vunpack.c.l.b16 %v3763
    %v4213 = vunpack.c.h.b16 %v3763
    %v4214 = vunpack.c.l.b16 %v3764
    %v4215 = vunpack.c.h.b16 %v3764
    %v4216 = vunpack.c.l.b16 %v3765
    %v4217 = vunpack.c.h.b16 %v3765
    %v4218 = vunpack.c.l.b16 %v3766
    %v4219 = vunpack.c.h.b16 %v3766
    %v4220 = vunpack.c.l.b16 %v3767
    %v4221 = vunpack.c.h.b16 %v3767
    %v4222 = vunpack.c.l.b16 %v3768
    %v4223 = vunpack.c.h.b16 %v3768
    %v4224 = vunpack.c.l.b16 %v3769
    %v4225 = vunpack.c.h.b16 %v3769
    %v4226 = vunpack.c.l.b16 %v3770
    %v4227 = vunpack.c.h.b16 %v3770
    %v4228 = vunpack.c.l.b16 %v3771
    %v4229 = vunpack.c.h.b16 %v3771
    %v4230 = vunpack.c.l.b16 %v3772
    %v4231 = vunpack.c.h.b16 %v3772
    %v4232 = vunpack.c.l.b16 %v3773
    %v4233 = vunpack.c.h.b16 %v3773
    %v4234 = vunpack.c.l.b16 %v3774
    %v4235 = vunpack.c.h.b16 %v3774
    %v4236 = vunpack.c.l.b16 %v3775
    %v4237 = vunpack.c.h.b16 %v3775
    %v4238 = vunpack.c.l.b16 %v3776
    %v4239 = vunpack.c.h.b16 %v3776
    %v4240 = vunpack.c.l.b16 %v3777
    %v4241 = vunpack.c.h.b16 %v3777
    %v4242 = vunpack.c.l.b16 %v3778
    %v4243 = vunpack.c.h.b16 %v3778
    %v4244 = vunpack.c.l.b16 %v3779
    %v4245 = vunpack.c.h.b16 %v3779
    %v4246 = vunpack.c.l.b16 %v3780
    %v4247 = vunpack.c.h.b16 %v3780
    %v4248 = vunpack.c.l.b16 %v3781
    %v4249 = vunpack.c.h.b16 %v3781
    %v4250 = vunpack.c.l.b16 %v3782
    %v4251 = vunpack.c.h.b16 %v3782
    %v4252 = vunpack.c.l.b16 %v3783
    %v4253 = vunpack.c.h.b16 %v3783
    %v4254 = vunpack.c.l.b16 %v3784
    %v4255 = vunpack.c.h.b16 %v3784
    %v4256 = vunpack.c.l.b16 %v3785
    %v4257 = vunpack.c.h.b16 %v3785
    %v4258 = vunpack.c.l.b16 %v3786
    %v4259 = vunpack.c.h.b16 %v3786
    %v4260 = vunpack.c.l.b16 %v3787
    %v4261 = vunpack.c.h.b16 %v3787
    %v4262 = vunpack.c.l.b16 %v3788
    %v4263 = vunpack.c.h.b16 %v3788
    %v4264 = vunpack.c.l.b16 %v3789
    %v4265 = vunpack.c.h.b16 %v3789
    %v4266 = vunpack.c.l.b16 %v3790
    %v4267 = vunpack.c.h.b16 %v3790
    %v4268 = vunpack.c.l.b16 %v3791
    %v4269 = vunpack.c.h.b16 %v3791
    %v4270 = vunpack.c.l.b16 %v3792
    %v4271 = vunpack.c.h.b16 %v3792
    %v4272 = vunpack.c.l.b16 %v3793
    %v4273 = vunpack.c.h.b16 %v3793
    %v4274 = vunpack.c.l.b16 %v3794
    %v4275 = vunpack.c.h.b16 %v3794
    %v4276 = vunpack.c.l.b16 %v3795
    %v4277 = vunpack.c.h.b16 %v3795
    %v4278 = vunpack.c.l.b16 %v3796
    %v4279 = vunpack.c.h.b16 %v3796
    %v4280 = vunpack.c.l.b16 %v3797
    %v4281 = vunpack.c.h.b16 %v3797
    %v4282 = vunpack.c.l.b16 %v3798
    %v4283 = vunpack.c.h.b16 %v3798
    %v4284 = vunpack.c.l.b16 %v3799
    %v4285 = vunpack.c.h.b16 %v3799
    %v4286 = vunpack.c.l.b16 %v3800
    %v4287 = vunpack.c.h.b16 %v3800
    %v4288 = vunpack.c.l.b16 %v3801
    %v4289 = vunpack.c.h.b16 %v3801
    %v4290 = vunpack.c.l.b16 %v3802
    %v4291 = vunpack.c.h.b16 %v3802
    %v4292 = vunpack.c.l.b16 %v3803
    %v4293 = vunpack.c.h.b16 %v3803
    %v4294 = vunpack.c.l.b16 %v3804
    %v4295 = vunpack.c.h.b16 %v3804
    %v4296 = vunpack.c.l.b16 %v3805
    %v4297 = vunpack.c.h.b16 %v3805
    %v4298 = vunpack.c.l.b16 %v3806
    %v4299 = vunpack.c.h.b16 %v3806
    %v4300 = vunpack.c.l.b16 %v3807
    %v4301 = vunpack.c.h.b16 %v3807
    %v4302 = vunpack.c.l.b16 %v3808
    %v4303 = vunpack.c.h.b16 %v3808
    %v4304 = vunpack.c.l.b16 %v3809
    %v4305 = vunpack.c.h.b16 %v3809
    %v4306 = vunpack.c.l.b16 %v3810
    %v4307 = vunpack.c.h.b16 %v3810
    %v4308 = vunpack.c.l.b16 %v3811
    %v4309 = vunpack.c.h.b16 %v3811
    %v4310 = vunpack.c.l.b16 %v3812
    %v4311 = vunpack.c.h.b16 %v3812
    %v4312 = vunpack.c.l.b16 %v3813
    %v4313 = vunpack.c.h.b16 %v3813
    %v4314 = vunpack.c.l.b16 %v3814
    %v4315 = vunpack.c.h.b16 %v3814
    %v4316 = vunpack.c.l.b16 %v3815
    %v4317 = vunpack.c.h.b16 %v3815
    %v4318 = vunpack.c.l.b16 %v3816
    %v4319 = vunpack.c.h.b16 %v3816
    %v4320 = vunpack.c.l.b16 %v3817
    %v4321 = vunpack.c.h.b16 %v3817
    %v4322 = vunpack.c.l.b16 %v3818
    %v4323 = vunpack.c.h.b16 %v3818
    %v4324 = vunpack.c.l.b16 %v3819
    %v4325 = vunpack.c.h.b16 %v3819
    %v4326 = vunpack.c.l.b16 %v3820
    %v4327 = vunpack.c.h.b16 %v3820
    %v4328 = vunpack.c.l.b16 %v3821
    %v4329 = vunpack.c.h.b16 %v3821
    %v4330 = vunpack.c.l.b16 %v3822
    %v4331 = vunpack.c.h.b16 %v3822
    %v4332 = vunpack.c.l.b16 %v3823
    %v4333 = vunpack.c.h.b16 %v3823
    %v4334 = vunpack.c.l.b16 %v3824
    %v4335 = vunpack.c.h.b16 %v3824
    %v4336 = vunpack.c.l.b16 %v3825
    %v4337 = vunpack.c.h.b16 %v3825
    %v4338 = vunpack.c.l.b16 %v3826
    %v4339 = vunpack.c.h.b16 %v3826
    %v4340 = vunpack.c.l.b16 %v3827
    %v4341 = vunpack.c.h.b16 %v3827
    %v4342 = vunpack.c.l.b16 %v3828
    %v4343 = vunpack.c.h.b16 %v3828
    %v4344 = vunpack.c.l.b16 %v3829
    %v4345 = vunpack.c.h.b16 %v3829
    %v4346 = vunpack.c.l.b16 %v3830
    %v4347 = vunpack.c.h.b16 %v3830
    %v4348 = vunpack.c.l.b16 %v3831
    %v4349 = vunpack.c.h.b16 %v3831
    %v4350 = vunpack.c.l.b16 %v3832
    %v4351 = vunpack.c.h.b16 %v3832
    %v4352 = vunpack.c.l.b16 %v3833
    %v4353 = vunpack.c.h.b16 %v3833
    %v4354 = vunpack.c.l.b16 %v3834
    %v4355 = vunpack.c.h.b16 %v3834
    %v4356 = vunpack.c.l.b16 %v3835
    %v4357 = vunpack.c.h.b16 %v3835
    %v4358 = vunpack.c.l.b16 %v3836
    %v4359 = vunpack.c.h.b16 %v3836
    %v4360 = vunpack.c.l.b16 %v3837
    %v4361 = vunpack.c.h.b16 %v3837
    %v4362 = vunpack.c.l.b16 %v3838
    %v4363 = vunpack.c.h.b16 %v3838
    %v4364 = vunpack.c.l.b16 %v3839
    %v4365 = vunpack.c.h.b16 %v3839
    %v4366 = vunpack.c.l.b16 %v3840
    %v4367 = vunpack.c.h.b16 %v3840
    %v4368 = vunpack.c.l.b16 %v3841
    %v4369 = vunpack.c.h.b16 %v3841
    %v4370 = vunpack.c.l.b16 %v3842
    %v4371 = vunpack.c.h.b16 %v3842
    %v4372 = vunpack.c.l.b16 %v3843
    %v4373 = vunpack.c.h.b16 %v3843
    %v4374 = vunpack.c.l.b16 %v3844
    %v4375 = vunpack.c.h.b16 %v3844
    %v4376 = vunpack.c.l.b16 %v3845
    %v4377 = vunpack.c.h.b16 %v3845
    %v4378 = vunpack.c.l.b16 %v3846
    %v4379 = vunpack.c.h.b16 %v3846
    %v4380 = vunpack.c.l.b16 %v3847
    %v4381 = vunpack.c.h.b16 %v3847
    %v4382 = vunpack.c.l.b16 %v3848
    %v4383 = vunpack.c.h.b16 %v3848
    %v4384 = vunpack.c.l.b16 %v3849
    %v4385 = vunpack.c.h.b16 %v3849
    %v4386 = vunpack.c.l.b16 %v3850
    %v4387 = vunpack.c.h.b16 %v3850
    %v4388 = vunpack.c.l.b16 %v3851
    %v4389 = vunpack.c.h.b16 %v3851
    %v4390 = vunpack.c.l.b16 %v3852
    %v4391 = vunpack.c.h.b16 %v3852
    %v4392 = vunpack.c.l.b16 %v3853
    %v4393 = vunpack.c.h.b16 %v3853
    %v4394 = vunpack.c.l.b16 %v3854
    %v4395 = vunpack.c.h.b16 %v3854
    %v4396 = vunpack.c.l.b16 %v3855
    %v4397 = vunpack.c.h.b16 %v3855
    %v4398 = vunpack.c.l.b16 %v3856
    %v4399 = vunpack.c.h.b16 %v3856
    %v4400 = vunpack.c.l.b16 %v3857
    %v4401 = vunpack.c.h.b16 %v3857
    %v4402 = vunpack.c.l.b16 %v3858
    %v4403 = vunpack.c.h.b16 %v3858
    %v4404 = vunpack.c.l.b16 %v3859
    %v4405 = vunpack.c.h.b16 %v3859
    %v4406 = vunpack.c.l.b16 %v3860
    %v4407 = vunpack.c.h.b16 %v3860
    %v4408 = vunpack.c.l.b16 %v3861
    %v4409 = vunpack.c.h.b16 %v3861
    %v4410 = vunpack.c.l.b16 %v3862
    %v4411 = vunpack.c.h.b16 %v3862
    %v4412 = vunpack.c.l.b16 %v3863
    %v4413 = vunpack.c.h.b16 %v3863
    %v4414 = vunpack.c.l.b16 %v3864
    %v4415 = vunpack.c.h.b16 %v3864
    %v4416 = vunpack.c.l.b16 %v3865
    %v4417 = vunpack.c.h.b16 %v3865
    %v4418 = vunpack.c.l.b16 %v3866
    %v4419 = vunpack.c.h.b16 %v3866
    %v4420 = vunpack.c.l.b16 %v3867
    %v4421 = vunpack.c.h.b16 %v3867
    %v4422 = vunpack.c.l.b16 %v3868
    %v4423 = vunpack.c.h.b16 %v3868
    %v4424 = vunpack.c.l.b16 %v3869
    %v4425 = vunpack.c.h.b16 %v3869
    %v4426 = vunpack.c.l.b16 %v3870
    %v4427 = vunpack.c.h.b16 %v3870
    %v4428 = vunpack.c.l.b16 %v3871
    %v4429 = vunpack.c.h.b16 %v3871
    %v4430 = vunpack.c.l.b16 %v3872
    %v4431 = vunpack.c.h.b16 %v3872
    %v4432 = vunpack.c.l.b16 %v3873
    %v4433 = vunpack.c.h.b16 %v3873
    %v4434 = vunpack.c.l.b16 %v3874
    %v4435 = vunpack.c.h.b16 %v3874
    %v4436 = vunpack.c.l.b16 %v3875
    %v4437 = vunpack.c.h.b16 %v3875
    %v4438 = vunpack.c.l.b16 %v3876
    %v4439 = vunpack.c.h.b16 %v3876
    %v4440 = vunpack.c.l.b16 %v3877
    %v4441 = vunpack.c.h.b16 %v3877
    %v4442 = vunpack.c.l.b16 %v3878
    %v4443 = vunpack.c.h.b16 %v3878
    %v4444 = vunpack.c.l.b16 %v3879
    %v4445 = vunpack.c.h.b16 %v3879
    %v4446 = vunpack.c.l.b16 %v3880
    %v4447 = vunpack.c.h.b16 %v3880
    %v4448 = vunpack.c.l.b16 %v3881
    %v4449 = vunpack.c.h.b16 %v3881
    %v4450 = vunpack.c.l.b16 %v3882
    %v4451 = vunpack.c.h.b16 %v3882
    %v4452 = vunpack.c.l.b16 %v3883
    %v4453 = vunpack.c.h.b16 %v3883
    %v4454 = vunpack.c.l.b16 %v3884
    %v4455 = vunpack.c.h.b16 %v3884
    %v4456 = vunpack.c.l.b16 %v3885
    %v4457 = vunpack.c.h.b16 %v3885
    %v4458 = vunpack.c.l.b16 %v3886
    %v4459 = vunpack.c.h.b16 %v3886
    %v4460 = vunpack.c.l.b16 %v3887
    %v4461 = vunpack.c.h.b16 %v3887
    %v4462 = vunpack.c.l.b16 %v3888
    %v4463 = vunpack.c.h.b16 %v3888
    %v4464 = vunpack.c.l.b16 %v3889
    %v4465 = vunpack.c.h.b16 %v3889
    %v4466 = vunpack.c.l.b16 %v3890
    %v4467 = vunpack.c.h.b16 %v3890
    %v4468 = vunpack.c.l.b16 %v3891
    %v4469 = vunpack.c.h.b16 %v3891
    %v4470 = vunpack.c.l.b16 %v3892
    %v4471 = vunpack.c.h.b16 %v3892
    %v4472 = vunpack.c.l.b16 %v3893
    %v4473 = vunpack.c.h.b16 %v3893
    %v4474 = vunpack.c.l.b16 %v3894
    %v4475 = vunpack.c.h.b16 %v3894
    %v4476 = vunpack.c.l.b16 %v3895
    %v4477 = vunpack.c.h.b16 %v3895
    %v4478 = vunpack.c.l.b16 %v3896
    %v4479 = vunpack.c.h.b16 %v3896
    %v4480 = vunpack.c.l.b16 %v3897
    %v4481 = vunpack.c.h.b16 %v3897
    %v4482 = vunpack.c.l.b16 %v3898
    %v4483 = vunpack.c.h.b16 %v3898
    %v4484 = vunpack.c.l.b16 %v3899
    %v4485 = vunpack.c.h.b16 %v3899
    %v4486 = vunpack.c.l.b16 %v3900
    %v4487 = vunpack.c.h.b16 %v3900
    %v4488 = vunpack.c.l.b16 %v3901
    %v4489 = vunpack.c.h.b16 %v3901
    %v4490 = vunpack.c.l.b16 %v3902
    %v4491 = vunpack.c.h.b16 %v3902
    %v4492 = vunpack.c.l.b16 %v3903
    %v4493 = vunpack.c.h.b16 %v3903
    %v4494 = vunpack.c.l.b16 %v3904
    %v4495 = vunpack.c.h.b16 %v3904
    %v4496 = vunpack.c.l.b16 %v3905
    %v4497 = vunpack.c.h.b16 %v3905
    %v4498 = vunpack.c.l.b16 %v3906
    %v4499 = vunpack.c.h.b16 %v3906
    %v4500 = vunpack.c.l.b16 %v3907
    %v4501 = vunpack.c.h.b16 %v3907
    %v4502 = vunpack.c.l.b16 %v3908
    %v4503 = vunpack.c.h.b16 %v3908
    %v4504 = vunpack.c.l.b16 %v3909
    %v4505 = vunpack.c.h.b16 %v3909
    %v4506 = vunpack.c.l.b16 %v3910
    %v4507 = vunpack.c.h.b16 %v3910
    %v4508 = vunpack.c.l.b16 %v3911
    %v4509 = vunpack.c.h.b16 %v3911
    %v4510 = vpack.c.b16 %v4130, %v4126
    %v4511 = vpack.c.b16 %v4131, %v4127
    %v4512 = vpack.c.b16 %v4132, %v4128
    %v4513 = vpack.c.b16 %v4133, %v4129
    %v4514 = vpack.c.b16 %v4138, %v4134
    %v4515 = vpack.c.b16 %v4139, %v4135
    %v4516 = vpack.c.b16 %v4140, %v4136
    %v4517 = vpack.c.b16 %v4141, %v4137
    %v4518 = vpack.c.b16 %v4146, %v4142
    %v4519 = vpack.c.b16 %v4147, %v4143
    %v4520 = vpack.c.b16 %v4148, %v4144
    %v4521 = vpack.c.b16 %v4149, %v4145
    %v4522 = vpack.c.b16 %v4154, %v4150
    %v4523 = vpack.c.b16 %v4155, %v4151
    %v4524 = vpack.c.b16 %v4156, %v4152
    %v4525 = vpack.c.b16 %v4157, %v4153
    %v4526 = vpack.c.b16 %v4162, %v4158
    %v4527 = vpack.c.b16 %v4163, %v4159
    %v4528 = vpack.c.b16 %v4164, %v4160
    %v4529 = vpack.c.b16 %v4165, %v4161
    %v4530 = vpack.c.b16 %v4170, %v4166
    %v4531 = vpack.c.b16 %v4171, %v4167
    %v4532 = vpack.c.b16 %v4172, %v4168
    %v4533 = vpack.c.b16 %v4173, %v4169
    %v4534 = vpack.c.b16 %v4178, %v4174
    %v4535 = vpack.c.b16 %v4179, %v4175
    %v4536 = vpack.c.b16 %v4180, %v4176
    %v4537 = vpack.c.b16 %v4181, %v4177
    %v4538 = vpack.c.b16 %v4186, %v4182
    %v4539 = vpack.c.b16 %v4187, %v4183
    %v4540 = vpack.c.b16 %v4188, %v4184
    %v4541 = vpack.c.b16 %v4189, %v4185
    %v4542 = vpack.c.b16 %v4194, %v4190
    %v4543 = vpack.c.b16 %v4195, %v4191
    %v4544 = vpack.c.b16 %v4196, %v4192
    %v4545 = vpack.c.b16 %v4197, %v4193
    %v4546 = vpack.c.b16 %v4202, %v4198
    %v4547 = vpack.c.b16 %v4203, %v4199
    %v4548 = vpack.c.b16 %v4204, %v4200
    %v4549 = vpack.c.b16 %v4205, %v4201
    %v4550 = vpack.c.b16 %v4210, %v4206
    %v4551 = vpack.c.b16 %v4211, %v4207
    %v4552 = vpack.c.b16 %v4212, %v4208
    %v4553 = vpack.c.b16 %v4213, %v4209
    %v4554 = vpack.c.b16 %v4218, %v4214
    %v4555 = vpack.c.b16 %v4219, %v4215
    %v4556 = vpack.c.b16 %v4220, %v4216
    %v4557 = vpack.c.b16 %v4221, %v4217
    %v4558 = vpack.c.b16 %v4226, %v4222
    %v4559 = vpack.c.b16 %v4227, %v4223
    %v4560 = vpack.c.b16 %v4228, %v4224
    %v4561 = vpack.c.b16 %v4229, %v4225
    %v4562 = vpack.c.b16 %v4234, %v4230
    %v4563 = vpack.c.b16 %v4235, %v4231
    %v4564 = vpack.c.b16 %v4236, %v4232
    %v4565 = vpack.c.b16 %v4237, %v4233
    %v4566 = vpack.c.b16 %v4242, %v4238
    %v4567 = vpack.c.b16 %v4243, %v4239
    %v4568 = vpack.c.b16 %v4244, %v4240
    %v4569 = vpack.c.b16 %v4245, %v4241
    %v4570 = vpack.c.b16 %v4250, %v4246
    %v4571 = vpack.c.b16 %v4251, %v4247
    %v4572 = vpack.c.b16 %v4252, %v4248
    %v4573 = vpack.c.b16 %v4253, %v4249
    %v4574 = vpack.c.b16 %v4258, %v4254
    %v4575 = vpack.c.b16 %v4259, %v4255
    %v4576 = vpack.c.b16 %v4260, %v4256
    %v4577 = vpack.c.b16 %v4261, %v4257
    %v4578 = vpack.c.b16 %v4266, %v4262
    %v4579 = vpack.c.b16 %v4267, %v4263
    %v4580 = vpack.c.b16 %v4268, %v4264
    %v4581 = vpack.c.b16 %v4269, %v4265
    %v4582 = vpack.c.b16 %v4274, %v4270
    %v4583 = vpack.c.b16 %v4275, %v4271
    %v4584 = vpack.c.b16 %v4276, %v4272
    %v4585 = vpack.c.b16 %v4277, %v4273
    %v4586 = vpack.c.b16 %v4282, %v4278
    %v4587 = vpack.c.b16 %v4283, %v4279
    %v4588 = vpack.c.b16 %v4284, %v4280
    %v4589 = vpack.c.b16 %v4285, %v4281
    %v4590 = vpack.c.b16 %v4290, %v4286
    %v4591 = vpack.c.b16 %v4291, %v4287
    %v4592 = vpack.c.b16 %v4292, %v4288
    %v4593 = vpack.c.b16 %v4293, %v4289
    %v4594 = vpack.c.b16 %v4298, %v4294
    %v4595 = vpack.c.b16 %v4299, %v4295
    %v4596 = vpack.c.b16 %v4300, %v4296
    %v4597 = vpack.c.b16 %v4301, %v4297
    %v4598 = vpack.c.b16 %v4306, %v4302
    %v4599 = vpack.c.b16 %v4307, %v4303
    %v4600 = vpack.c.b16 %v4308, %v4304
    %v4601 = vpack.c.b16 %v4309, %v4305
    %v4602 = vpack.c.b16 %v4314, %v4310
    %v4603 = vpack.c.b16 %v4315, %v4311
    %v4604 = vpack.c.b16 %v4316, %v4312
    %v4605 = vpack.c.b16 %v4317, %v4313
    %v4606 = vpack.c.b16 %v4322, %v4318
    %v4607 = vpack.c.b16 %v4323, %v4319
    %v4608 = vpack.c.b16 %v4324, %v4320
    %v4609 = vpack.c.b16 %v4325, %v4321
    %v4610 = vpack.c.b16 %v4330, %v4326
    %v4611 = vpack.c.b16 %v4331, %v4327
    %v4612 = vpack.c.b16 %v4332, %v4328
    %v4613 = vpack.c.b16 %v4333, %v4329
    %v4614 = vpack.c.b16 %v4338, %v4334
    %v4615 = vpack.c.b16 %v4339, %v4335
    %v4616 = vpack.c.b16 %v4340, %v4336
    %v4617 = vpack.c.b16 %v4341, %v4337
    %v4618 = vpack.c.b16 %v4346, %v4342
    %v4619 = vpack.c.b16 %v4347, %v4343
    %v4620 = vpack.c.b16 %v4348, %v4344
    %v4621 = vpack.c.b16 %v4349, %v4345
    %v4622 = vpack.c.b16 %v4354, %v4350
    %v4623 = vpack.c.b16 %v4355, %v4351
    %v4624 = vpack.c.b16 %v4356, %v4352
    %v4625 = vpack.c.b16 %v4357, %v4353
    %v4626 = vpack.c.b16 %v4362, %v4358
    %v4627 = vpack.c.b16 %v4363, %v4359
    %v4628 = vpack.c.b16 %v4364, %v4360
    %v4629 = vpack.c.b16 %v4365, %v4361
    %v4630 = vpack.c.b16 %v4370, %v4366
    %v4631 = vpack.c.b16 %v4371, %v4367
    %v4632 = vpack.c.b16 %v4372, %v4368
    %v4633 = vpack.c.b16 %v4373, %v4369
    %v4634 = vpack.c.b16 %v4378, %v4374
    %v4635 = vpack.c.b16 %v4379, %v4375
    %v4636 = vpack.c.b16 %v4380, %v4376
    %v4637 = vpack.c.b16 %v4381, %v4377
    %v4638 = vpack.c.b16 %v4386, %v4382
    %v4639 = vpack.c.b16 %v4387, %v4383
    %v4640 = vpack.c.b16 %v4388, %v4384
    %v4641 = vpack.c.b16 %v4389, %v4385
    %v4642 = vpack.c.b16 %v4394, %v4390
    %v4643 = vpack.c.b16 %v4395, %v4391
    %v4644 = vpack.c.b16 %v4396, %v4392
    %v4645 = vpack.c.b16 %v4397, %v4393
    %v4646 = vpack.c.b16 %v4402, %v4398
    %v4647 = vpack.c.b16 %v4403, %v4399
    %v4648 = vpack.c.b16 %v4404, %v4400
    %v4649 = vpack.c.b16 %v4405, %v4401
    %v4650 = vpack.c.b16 %v4410, %v4406
    %v4651 = vpack.c.b16 %v4411, %v4407
    %v4652 = vpack.c.b16 %v4412, %v4408
    %v4653 = vpack.c.b16 %v4413, %v4409
    %v4654 = vpack.c.b16 %v4418, %v4414
    %v4655 = vpack.c.b16 %v4419, %v4415
    %v4656 = vpack.c.b16 %v4420, %v4416
    %v4657 = vpack.c.b16 %v4421, %v4417
    %v4658 = vpack.c.b16 %v4426, %v4422
    %v4659 = vpack.c.b16 %v4427, %v4423
    %v4660 = vpack.c.b16 %v4428, %v4424
    %v4661 = vpack.c.b16 %v4429, %v4425
    %v4662 = vpack.c.b16 %v4434, %v4430
    %v4663 = vpack.c.b16 %v4435, %v4431
    %v4664 = vpack.c.b16 %v4436, %v4432
    %v4665 = vpack.c.b16 %v4437, %v4433
    %v4666 = vpack.c.b16 %v4442, %v4438
    %v4667 = vpack.c.b16 %v4443, %v4439
    %v4668 = vpack.c.b16 %v4444, %v4440
    %v4669 = vpack.c.b16 %v4445, %v4441
    %v4670 = vpack.c.b16 %v4450, %v4446
    %v4671 = vpack.c.b16 %v4451, %v4447
    %v4672 = vpack.c.b16 %v4452, %v4448
    %v4673 = vpack.c.b16 %v4453, %v4449
    %v4674 = vpack.c.b16 %v4458, %v4454
    %v4675 = vpack.c.b16 %v4459, %v4455
    %v4676 = vpack.c.b16 %v4460, %v4456
    %v4677 = vpack.c.b16 %v4461, %v4457
    %v4678 = vpack.c.b16 %v4466, %v4462
    %v4679 = vpack.c.b16 %v4467, %v4463
    %v4680 = vpack.c.b16 %v4468, %v4464
    %v4681 = vpack.c.b16 %v4469, %v4465
    %v4682 = vpack.c.b16 %v4474, %v4470
    %v4683 = vpack.c.b16 %v4475, %v4471
    %v4684 = vpack.c.b16 %v4476, %v4472
    %v4685 = vpack.c.b16 %v4477, %v4473
    %v4686 = vpack.c.b16 %v4482, %v4478
    %v4687 = vpack.c.b16 %v4483, %v4479
    %v4688 = vpack.c.b16 %v4484, %v4480
    %v4689 = vpack.c.b16 %v4485, %v4481
    %v4690 = vpack.c.b16 %v4490, %v4486
    %v4691 = vpack.c.b16 %v4491, %v4487
    %v4692 = vpack.c.b16 %v4492, %v4488
    %v4693 = vpack.c.b16 %v4493, %v4489
    %v4694 = vpack.c.b16 %v4498, %v4494
    %v4695 = vpack.c.b16 %v4499, %v4495
    %v4696 = vpack.c.b16 %v4500, %v4496
    %v4697 = vpack.c.b16 %v4501, %v4497
    %v4698 = vpack.c.b16 %v4506, %v4502
    %v4699 = vpack.c.b16 %v4507, %v4503
    %v4700 = vpack.c.b16 %v4508, %v4504
    %v4701 = vpack.c.b16 %v4509, %v4505
    %4894 = vmatprep.subr.bf16.mxu0 %v4511
    %4895 = vmatpush1.bf16.msra.mxu0 %v4510
    %4896 = vmatprep.subr.bf16.mxu0 %v4515
    %4897 = vmatpush1.bf16.msra.mxu0 %v4514
    %4898 = vmatprep.subr.bf16.mxu0 %v4519
    %4899 = vmatpush1.bf16.msra.mxu0 %v4518
    %4900 = vmatprep.subr.bf16.mxu0 %v4523
    %4901 = vmatpush1.bf16.msra.mxu0 %v4522
    %4902 = vmatprep.subr.bf16.mxu0 %v4527
    %4903 = vmatpush1.bf16.msra.mxu0 %v4526
    %4904 = vmatprep.subr.bf16.mxu0 %v4531
    %4905 = vmatpush1.bf16.msra.mxu0 %v4530
    %4906 = vmatprep.subr.bf16.mxu0 %v4535
    %4907 = vmatpush1.bf16.msra.mxu0 %v4534
    %4908 = vmatprep.subr.bf16.mxu0 %v4539
    %4909 = vmatpush1.bf16.msra.mxu0 %v4538
    %4910 = vmatprep.subr.bf16.mxu0 %v4543
    %4911 = vmatpush1.bf16.msra.mxu0 %v4542
    %4912 = vmatprep.subr.bf16.mxu0 %v4547
    %4913 = vmatpush1.bf16.msra.mxu0 %v4546
    %4914 = vmatprep.subr.bf16.mxu0 %v4551
    %4915 = vmatpush1.bf16.msra.mxu0 %v4550
    %4916 = vmatprep.subr.bf16.mxu0 %v4555
    %4917 = vmatpush1.bf16.msra.mxu0 %v4554
    %4918 = vmatprep.subr.bf16.mxu0 %v4559
    %4919 = vmatpush1.bf16.msra.mxu0 %v4558
    %4920 = vmatprep.subr.bf16.mxu0 %v4563
    %4921 = vmatpush1.bf16.msra.mxu0 %v4562
    %4922 = vmatprep.subr.bf16.mxu0 %v4567
    %4923 = vmatpush1.bf16.msra.mxu0 %v4566
    %4924 = vmatprep.subr.bf16.mxu0 %v4571
    %4925 = vmatpush1.bf16.msra.mxu0 %v4570
    %4926 = vmatprep.mubr.bf16.mxu0 %v3715
    %4927 = vmatmul.mubr.bf16.gmra.mrb[0].mxu0 %v3714
    %v4928 = vpop.f32.mrb[0].mxu0
    %v4929 = vadd.f32 %v3917, %v4928
    %v4930 = vpop.f32.mrb[0].mxu0
    %v4931 = vadd.f32 %v3921, %v4930
    %v4932 = vpop.f32.mrb[0].mxu0
    %v4933 = vpop.f32.mrb[0].mxu0
    %4934 = vdwg.mxu0
    %4935 = vmatprep.subr.bf16.mxu0 %v4575
    %4936 = vmatpush1.bf16.msra.mxu0 %v4574
    %4937 = vmatprep.subr.bf16.mxu0 %v4579
    %4938 = vmatpush1.bf16.msra.mxu0 %v4578
    %4939 = vmatprep.subr.bf16.mxu0 %v4583
    %4940 = vmatpush1.bf16.msra.mxu0 %v4582
    %4941 = vmatprep.subr.bf16.mxu0 %v4587
    %4942 = vmatpush1.bf16.msra.mxu0 %v4586
    %4943 = vmatprep.subr.bf16.mxu0 %v4591
    %4944 = vmatpush1.bf16.msra.mxu0 %v4590
    %4945 = vmatprep.subr.bf16.mxu0 %v4595
    %4946 = vmatpush1.bf16.msra.mxu0 %v4594
    %4947 = vmatprep.subr.bf16.mxu0 %v4599
    %4948 = vmatpush1.bf16.msra.mxu0 %v4598
    %4949 = vmatprep.subr.bf16.mxu0 %v4603
    %4950 = vmatpush1.bf16.msra.mxu0 %v4602
    %4951 = vmatprep.subr.bf16.mxu0 %v4607
    %4952 = vmatpush1.bf16.msra.mxu0 %v4606
    %4953 = vmatprep.subr.bf16.mxu0 %v4611
    %4954 = vmatpush1.bf16.msra.mxu0 %v4610
    %4955 = vmatprep.subr.bf16.mxu0 %v4615
    %4956 = vmatpush1.bf16.msra.mxu0 %v4614
    %4957 = vmatprep.subr.bf16.mxu0 %v4619
    %4958 = vmatpush1.bf16.msra.mxu0 %v4618
    %4959 = vmatprep.subr.bf16.mxu0 %v4623
    %4960 = vmatpush1.bf16.msra.mxu0 %v4622
    %4961 = vmatprep.subr.bf16.mxu0 %v4627
    %4962 = vmatpush1.bf16.msra.mxu0 %v4626
    %4963 = vmatprep.subr.bf16.mxu0 %v4631
    %4964 = vmatpush1.bf16.msra.mxu0 %v4630
    %4965 = vmatprep.subr.bf16.mxu0 %v4635
    %4966 = vmatpush1.bf16.msra.mxu0 %v4634
    %4967 = vmatprep.mubr.bf16.mxu0 %v3717
    %4968 = vmatmul.mubr.bf16.gmra.mrb[0].mxu0 %v3716
    %v4969 = vpop.f32.mrb[0].mxu0
    %v4970 = vadd.f32 %v4929, %v4969
    %v4971 = vpop.f32.mrb[0].mxu0
    %v4972 = vadd.f32 %v4931, %v4971
    %v4973 = vpop.f32.mrb[0].mxu0
    %v4974 = vpop.f32.mrb[0].mxu0
    %4975 = vdwg.mxu0
    %4976 = vmatprep.subr.bf16.mxu0 %v4639
    %4977 = vmatpush1.bf16.msra.mxu0 %v4638
    %4978 = vmatprep.subr.bf16.mxu0 %v4643
    %4979 = vmatpush1.bf16.msra.mxu0 %v4642
    %4980 = vmatprep.subr.bf16.mxu0 %v4647
    %4981 = vmatpush1.bf16.msra.mxu0 %v4646
    %4982 = vmatprep.subr.bf16.mxu0 %v4651
    %4983 = vmatpush1.bf16.msra.mxu0 %v4650
    %4984 = vmatprep.subr.bf16.mxu0 %v4655
    %4985 = vmatpush1.bf16.msra.mxu0 %v4654
    %4986 = vmatprep.subr.bf16.mxu0 %v4659
    %4987 = vmatpush1.bf16.msra.mxu0 %v4658
    %4988 = vmatprep.subr.bf16.mxu0 %v4663
    %4989 = vmatpush1.bf16.msra.mxu0 %v4662
    %4990 = vmatprep.subr.bf16.mxu0 %v4667
    %4991 = vmatpush1.bf16.msra.mxu0 %v4666
    %4992 = vmatprep.subr.bf16.mxu0 %v4671
    %4993 = vmatpush1.bf16.msra.mxu0 %v4670
    %4994 = vmatprep.subr.bf16.mxu0 %v4675
    %4995 = vmatpush1.bf16.msra.mxu0 %v4674
    %4996 = vmatprep.subr.bf16.mxu0 %v4679
    %4997 = vmatpush1.bf16.msra.mxu0 %v4678
    %4998 = vmatprep.subr.bf16.mxu0 %v4683
    %4999 = vmatpush1.bf16.msra.mxu0 %v4682
    %5000 = vmatprep.subr.bf16.mxu0 %v4687
    %5001 = vmatpush1.bf16.msra.mxu0 %v4686
    %5002 = vmatprep.subr.bf16.mxu0 %v4691
    %5003 = vmatpush1.bf16.msra.mxu0 %v4690
    %5004 = vmatprep.subr.bf16.mxu0 %v4695
    %5005 = vmatpush1.bf16.msra.mxu0 %v4694
    %5006 = vmatprep.subr.bf16.mxu0 %v4699
    %5007 = vmatpush1.bf16.msra.mxu0 %v4698
    %5008 = vmatprep.mubr.bf16.mxu0 %v3719
    %5009 = vmatmul.mubr.bf16.gmra.mrb[0].mxu0 %v3718
    %v5010 = vpop.f32.mrb[0].mxu0
    %v5011 = vadd.f32 %v4970, %v5010
    %v5012 = vpop.f32.mrb[0].mxu0
    %v5013 = vadd.f32 %v4972, %v5012
    %v5014 = vpop.f32.mrb[0].mxu0
    %v5015 = vpop.f32.mrb[0].mxu0
    %5016 = vdwg.mxu0
    %5017 = vmatprep.subr.bf16.mxu0 %v4513
    %5018 = vmatpush1.bf16.msra.mxu0 %v4512
    %5019 = vmatprep.subr.bf16.mxu0 %v4517
    %5020 = vmatpush1.bf16.msra.mxu0 %v4516
    %5021 = vmatprep.subr.bf16.mxu0 %v4521
    %5022 = vmatpush1.bf16.msra.mxu0 %v4520
    %5023 = vmatprep.subr.bf16.mxu0 %v4525
    %5024 = vmatpush1.bf16.msra.mxu0 %v4524
    %5025 = vmatprep.subr.bf16.mxu0 %v4529
    %5026 = vmatpush1.bf16.msra.mxu0 %v4528
    %5027 = vmatprep.subr.bf16.mxu0 %v4533
    %5028 = vmatpush1.bf16.msra.mxu0 %v4532
    %5029 = vmatprep.subr.bf16.mxu0 %v4537
    %5030 = vmatpush1.bf16.msra.mxu0 %v4536
    %5031 = vmatprep.subr.bf16.mxu0 %v4541
    %5032 = vmatpush1.bf16.msra.mxu0 %v4540
    %5033 = vmatprep.subr.bf16.mxu0 %v4545
    %5034 = vmatpush1.bf16.msra.mxu0 %v4544
    %5035 = vmatprep.subr.bf16.mxu0 %v4549
    %5036 = vmatpush1.bf16.msra.mxu0 %v4548
    %5037 = vmatprep.subr.bf16.mxu0 %v4553
    %5038 = vmatpush1.bf16.msra.mxu0 %v4552
    %5039 = vmatprep.subr.bf16.mxu0 %v4557
    %5040 = vmatpush1.bf16.msra.mxu0 %v4556
    %5041 = vmatprep.subr.bf16.mxu0 %v4561
    %5042 = vmatpush1.bf16.msra.mxu0 %v4560
    %5043 = vmatprep.subr.bf16.mxu0 %v4565
    %5044 = vmatpush1.bf16.msra.mxu0 %v4564
    %5045 = vmatprep.subr.bf16.mxu0 %v4569
    %5046 = vmatpush1.bf16.msra.mxu0 %v4568
    %5047 = vmatprep.subr.bf16.mxu0 %v4573
    %5048 = vmatpush1.bf16.msra.mxu0 %v4572
    %5049 = vmatprep.mubr.bf16.mxu0 %v3715
    %5050 = vmatmul.mubr.bf16.gmra.mrb[0].mxu0 %v3714
    %v5051 = vpop.f32.mrb[0].mxu0
    %v5052 = vadd.f32 %v3925, %v5051
    %v5053 = vpop.f32.mrb[0].mxu0
    %v5054 = vadd.f32 %v3929, %v5053
    %v5055 = vpop.f32.mrb[0].mxu0
    %v5056 = vpop.f32.mrb[0].mxu0
    %5057 = vdwg.mxu0
    %5058 = vmatprep.subr.bf16.mxu0 %v4577
    %5059 = vmatpush1.bf16.msra.mxu0 %v4576
    %5060 = vmatprep.subr.bf16.mxu0 %v4581
    %5061 = vmatpush1.bf16.msra.mxu0 %v4580
    %5062 = vmatprep.subr.bf16.mxu0 %v4585
    %5063 = vmatpush1.bf16.msra.mxu0 %v4584
    %5064 = vmatprep.subr.bf16.mxu0 %v4589
    %5065 = vmatpush1.bf16.msra.mxu0 %v4588
    %5066 = vmatprep.subr.bf16.mxu0 %v4593
    %5067 = vmatpush1.bf16.msra.mxu0 %v4592
    %5068 = vmatprep.subr.bf16.mxu0 %v4597
    %5069 = vmatpush1.bf16.msra.mxu0 %v4596
    %5070 = vmatprep.subr.bf16.mxu0 %v4601
    %5071 = vmatpush1.bf16.msra.mxu0 %v4600
    %5072 = vmatprep.subr.bf16.mxu0 %v4605
    %5073 = vmatpush1.bf16.msra.mxu0 %v4604
    %5074 = vmatprep.subr.bf16.mxu0 %v4609
    %5075 = vmatpush1.bf16.msra.mxu0 %v4608
    %5076 = vmatprep.subr.bf16.mxu0 %v4613
    %5077 = vmatpush1.bf16.msra.mxu0 %v4612
    %5078 = vmatprep.subr.bf16.mxu0 %v4617
    %5079 = vmatpush1.bf16.msra.mxu0 %v4616
    %5080 = vmatprep.subr.bf16.mxu0 %v4621
    %5081 = vmatpush1.bf16.msra.mxu0 %v4620
    %5082 = vmatprep.subr.bf16.mxu0 %v4625
    %5083 = vmatpush1.bf16.msra.mxu0 %v4624
    %5084 = vmatprep.subr.bf16.mxu0 %v4629
    %5085 = vmatpush1.bf16.msra.mxu0 %v4628
    %5086 = vmatprep.subr.bf16.mxu0 %v4633
    %5087 = vmatpush1.bf16.msra.mxu0 %v4632
    %5088 = vmatprep.subr.bf16.mxu0 %v4637
    %5089 = vmatpush1.bf16.msra.mxu0 %v4636
    %5090 = vmatprep.mubr.bf16.mxu0 %v3717
    %5091 = vmatmul.mubr.bf16.gmra.mrb[0].mxu0 %v3716
    %v5092 = vpop.f32.mrb[0].mxu0
    %v5093 = vadd.f32 %v5052, %v5092
    %v5094 = vpop.f32.mrb[0].mxu0
    %v5095 = vadd.f32 %v5054, %v5094
    %v5096 = vpop.f32.mrb[0].mxu0
    %v5097 = vpop.f32.mrb[0].mxu0
    %5098 = vdwg.mxu0
    %5099 = vmatprep.subr.bf16.mxu0 %v4641
    %5100 = vmatpush1.bf16.msra.mxu0 %v4640
    %5101 = vmatprep.subr.bf16.mxu0 %v4645
    %5102 = vmatpush1.bf16.msra.mxu0 %v4644
    %5103 = vmatprep.subr.bf16.mxu0 %v4649
    %5104 = vmatpush1.bf16.msra.mxu0 %v4648
    %5105 = vmatprep.subr.bf16.mxu0 %v4653
    %5106 = vmatpush1.bf16.msra.mxu0 %v4652
    %5107 = vmatprep.subr.bf16.mxu0 %v4657
    %5108 = vmatpush1.bf16.msra.mxu0 %v4656
    %5109 = vmatprep.subr.bf16.mxu0 %v4661
    %5110 = vmatpush1.bf16.msra.mxu0 %v4660
    %5111 = vmatprep.subr.bf16.mxu0 %v4665
    %5112 = vmatpush1.bf16.msra.mxu0 %v4664
    %5113 = vmatprep.subr.bf16.mxu0 %v4669
    %5114 = vmatpush1.bf16.msra.mxu0 %v4668
    %5115 = vmatprep.subr.bf16.mxu0 %v4673
    %5116 = vmatpush1.bf16.msra.mxu0 %v4672
    %5117 = vmatprep.subr.bf16.mxu0 %v4677
    %5118 = vmatpush1.bf16.msra.mxu0 %v4676
    %5119 = vmatprep.subr.bf16.mxu0 %v4681
    %5120 = vmatpush1.bf16.msra.mxu0 %v4680
    %5121 = vmatprep.subr.bf16.mxu0 %v4685
    %5122 = vmatpush1.bf16.msra.mxu0 %v4684
    %5123 = vmatprep.subr.bf16.mxu0 %v4689
    %5124 = vmatpush1.bf16.msra.mxu0 %v4688
    %5125 = vmatprep.subr.bf16.mxu0 %v4693
    %5126 = vmatpush1.bf16.msra.mxu0 %v4692
    %5127 = vmatprep.subr.bf16.mxu0 %v4697
    %5128 = vmatpush1.bf16.msra.mxu0 %v4696
    %5129 = vmatprep.subr.bf16.mxu0 %v4701
    %5130 = vmatpush1.bf16.msra.mxu0 %v4700
    %5131 = vmatprep.mubr.bf16.mxu0 %v3719
    %5132 = vmatmul.mubr.bf16.gmra.mrb[0].mxu0 %v3718
    %v5133 = vpop.f32.mrb[0].mxu0
    %v5134 = vadd.f32 %v5093, %v5133
    %v5135 = vpop.f32.mrb[0].mxu0
    %v5136 = vadd.f32 %v5095, %v5135
    %v5137 = vpop.f32.mrb[0].mxu0
    %v5138 = vpop.f32.mrb[0].mxu0
    %5139 = vdwg.mxu0
    %s5140 = sld [smem:[#allocation25 + $0x2]]
    %vm5141 = vcmp.ge.f32.partialorder %v5011, 0.0
    %vm5142 = vcmp.ge.f32.partialorder %v5013, 0.0
    %vm5143 = vcmp.ge.f32.partialorder %v5134, 0.0
    %vm5144 = vcmp.ge.f32.partialorder %v5136, 0.0
    %v5145 = vstv %s5140
    %v5146 = vmul.f32 %v5145, %v5011
    %v5147 = vmul.f32 %v5145, %v5013
    %v5148 = vmul.f32 %v5145, %v5134
    %v5149 = vmul.f32 %v5145, %v5136
    %v5150 = vsel %vm5141, %v5011, %v5146
    %v5151 = vsel %vm5142, %v5013, %v5147
    %v5152 = vsel %vm5143, %v5134, %v5148
    %v5153 = vsel %vm5144, %v5136, %v5149
    %v5154 = vpack.c.bf16 %v5150, %v5150
    %v5155 = vpack.c.bf16 %v5151, %v5151
    %v5156 = vpack.c.bf16 %v5152, %v5152
    %v5157 = vpack.c.bf16 %v5153, %v5153
    %v5158 = vld [vmem:[#allocation13] sm:$0xff]
    %v5159 = vld [vmem:[#allocation13 + $0x8] sm:$0xff]
    %v5160 = vld [vmem:[#allocation13 + $0x10] sm:$0xff]
    %v5161 = vld [vmem:[#allocation13 + $0x18] sm:$0xff]
    %v5162 = vld [vmem:[#allocation13 + $0x20] sm:$0xff]
    %v5163 = vld [vmem:[#allocation13 + $0x28] sm:$0xff]
    %v5164 = vld [vmem:[#allocation13 + $0x30] sm:$0xff]
    %v5165 = vld [vmem:[#allocation13 + $0x38] sm:$0xff]
    %v5166 = vld [vmem:[#allocation13 + $0x40] sm:$0xff]
    %v5167 = vld [vmem:[#allocation13 + $0x48] sm:$0xff]
    %v5168 = vld [vmem:[#allocation13 + $0x50] sm:$0xff]
    %v5169 = vld [vmem:[#allocation13 + $0x58] sm:$0xff]
    %v5170 = vld [vmem:[#allocation13 + $0x60] sm:$0xff]
    %v5171 = vld [vmem:[#allocation13 + $0x68] sm:$0xff]
    %v5172 = vld [vmem:[#allocation13 + $0x70] sm:$0xff]
    %v5173 = vld [vmem:[#allocation13 + $0x78] sm:$0xff]
    %v5174 = vld [vmem:[#allocation13 + $0x80] sm:$0xff]
    %v5175 = vld [vmem:[#allocation13 + $0x88] sm:$0xff]
    %v5176 = vld [vmem:[#allocation13 + $0x90] sm:$0xff]
    %v5177 = vld [vmem:[#allocation13 + $0x98] sm:$0xff]
    %v5178 = vld [vmem:[#allocation13 + $0xa0] sm:$0xff]
    %v5179 = vld [vmem:[#allocation13 + $0xa8] sm:$0xff]
    %v5180 = vld [vmem:[#allocation13 + $0xb0] sm:$0xff]
    %v5181 = vld [vmem:[#allocation13 + $0xb8] sm:$0xff]
    %v5182 = vld [vmem:[#allocation13 + $0xc0] sm:$0xff]
    %v5183 = vld [vmem:[#allocation13 + $0xc8] sm:$0xff]
    %v5184 = vld [vmem:[#allocation13 + $0xd0] sm:$0xff]
    %v5185 = vld [vmem:[#allocation13 + $0xd8] sm:$0xff]
    %v5186 = vld [vmem:[#allocation13 + $0xe0] sm:$0xff]
    %v5187 = vld [vmem:[#allocation13 + $0xe8] sm:$0xff]
    %v5188 = vld [vmem:[#allocation13 + $0xf0] sm:$0xff]
    %v5189 = vld [vmem:[#allocation13 + $0xf8] sm:$0xff]
    %v5190 = vld [vmem:[#allocation13 + $0x100] sm:$0xff]
    %v5191 = vld [vmem:[#allocation13 + $0x108] sm:$0xff]
    %v5192 = vld [vmem:[#allocation13 + $0x110] sm:$0xff]
    %v5193 = vld [vmem:[#allocation13 + $0x118] sm:$0xff]
    %v5194 = vld [vmem:[#allocation13 + $0x120] sm:$0xff]
    %v5195 = vld [vmem:[#allocation13 + $0x128] sm:$0xff]
    %v5196 = vld [vmem:[#allocation13 + $0x130] sm:$0xff]
    %v5197 = vld [vmem:[#allocation13 + $0x138] sm:$0xff]
    %v5198 = vld [vmem:[#allocation13 + $0x140] sm:$0xff]
    %v5199 = vld [vmem:[#allocation13 + $0x148] sm:$0xff]
    %v5200 = vld [vmem:[#allocation13 + $0x150] sm:$0xff]
    %v5201 = vld [vmem:[#allocation13 + $0x158] sm:$0xff]
    %v5202 = vld [vmem:[#allocation13 + $0x160] sm:$0xff]
    %v5203 = vld [vmem:[#allocation13 + $0x168] sm:$0xff]
    %v5204 = vld [vmem:[#allocation13 + $0x170] sm:$0xff]
    %v5205 = vld [vmem:[#allocation13 + $0x178] sm:$0xff]
    %v5206 = vld [vmem:[#allocation13 + $0x180] sm:$0xff]
    %v5207 = vld [vmem:[#allocation13 + $0x188] sm:$0xff]
    %v5208 = vld [vmem:[#allocation13 + $0x190] sm:$0xff]
    %v5209 = vld [vmem:[#allocation13 + $0x198] sm:$0xff]
    %v5210 = vld [vmem:[#allocation13 + $0x1a0] sm:$0xff]
    %v5211 = vld [vmem:[#allocation13 + $0x1a8] sm:$0xff]
    %v5212 = vld [vmem:[#allocation13 + $0x1b0] sm:$0xff]
    %v5213 = vld [vmem:[#allocation13 + $0x1b8] sm:$0xff]
    %v5214 = vld [vmem:[#allocation13 + $0x1c0] sm:$0xff]
    %v5215 = vld [vmem:[#allocation13 + $0x1c8] sm:$0xff]
    %v5216 = vld [vmem:[#allocation13 + $0x1d0] sm:$0xff]
    %v5217 = vld [vmem:[#allocation13 + $0x1d8] sm:$0xff]
    %v5218 = vld [vmem:[#allocation13 + $0x1e0] sm:$0xff]
    %v5219 = vld [vmem:[#allocation13 + $0x1e8] sm:$0xff]
    %v5220 = vld [vmem:[#allocation13 + $0x1f0] sm:$0xff]
    %v5221 = vld [vmem:[#allocation13 + $0x1f8] sm:$0xff]
    %v5222 = vld [vmem:[#allocation13 + $0x200] sm:$0xff]
    %v5223 = vld [vmem:[#allocation13 + $0x208] sm:$0xff]
    %v5224 = vld [vmem:[#allocation13 + $0x210] sm:$0xff]
    %v5225 = vld [vmem:[#allocation13 + $0x218] sm:$0xff]
    %v5226 = vld [vmem:[#allocation13 + $0x220] sm:$0xff]
    %v5227 = vld [vmem:[#allocation13 + $0x228] sm:$0xff]
    %v5228 = vld [vmem:[#allocation13 + $0x230] sm:$0xff]
    %v5229 = vld [vmem:[#allocation13 + $0x238] sm:$0xff]
    %v5230 = vld [vmem:[#allocation13 + $0x240] sm:$0xff]
    %v5231 = vld [vmem:[#allocation13 + $0x248] sm:$0xff]
    %v5232 = vld [vmem:[#allocation13 + $0x250] sm:$0xff]
    %v5233 = vld [vmem:[#allocation13 + $0x258] sm:$0xff]
    %v5234 = vld [vmem:[#allocation13 + $0x260] sm:$0xff]
    %v5235 = vld [vmem:[#allocation13 + $0x268] sm:$0xff]
    %v5236 = vld [vmem:[#allocation13 + $0x270] sm:$0xff]
    %v5237 = vld [vmem:[#allocation13 + $0x278] sm:$0xff]
    %v5238 = vld [vmem:[#allocation13 + $0x280] sm:$0xff]
    %v5239 = vld [vmem:[#allocation13 + $0x288] sm:$0xff]
    %v5240 = vld [vmem:[#allocation13 + $0x290] sm:$0xff]
    %v5241 = vld [vmem:[#allocation13 + $0x298] sm:$0xff]
    %v5242 = vld [vmem:[#allocation13 + $0x2a0] sm:$0xff]
    %v5243 = vld [vmem:[#allocation13 + $0x2a8] sm:$0xff]
    %v5244 = vld [vmem:[#allocation13 + $0x2b0] sm:$0xff]
    %v5245 = vld [vmem:[#allocation13 + $0x2b8] sm:$0xff]
    %v5246 = vld [vmem:[#allocation13 + $0x2c0] sm:$0xff]
    %v5247 = vld [vmem:[#allocation13 + $0x2c8] sm:$0xff]
    %v5248 = vld [vmem:[#allocation13 + $0x2d0] sm:$0xff]
    %v5249 = vld [vmem:[#allocation13 + $0x2d8] sm:$0xff]
    %v5250 = vld [vmem:[#allocation13 + $0x2e0] sm:$0xff]
    %v5251 = vld [vmem:[#allocation13 + $0x2e8] sm:$0xff]
    %v5252 = vld [vmem:[#allocation13 + $0x2f0] sm:$0xff]
    %v5253 = vld [vmem:[#allocation13 + $0x2f8] sm:$0xff]
    %v5254 = vld [vmem:[#allocation13 + $0x300] sm:$0xff]
    %v5255 = vld [vmem:[#allocation13 + $0x308] sm:$0xff]
    %v5256 = vld [vmem:[#allocation13 + $0x310] sm:$0xff]
    %v5257 = vld [vmem:[#allocation13 + $0x318] sm:$0xff]
    %v5258 = vld [vmem:[#allocation13 + $0x320] sm:$0xff]
    %v5259 = vld [vmem:[#allocation13 + $0x328] sm:$0xff]
    %v5260 = vld [vmem:[#allocation13 + $0x330] sm:$0xff]
    %v5261 = vld [vmem:[#allocation13 + $0x338] sm:$0xff]
    %v5262 = vld [vmem:[#allocation13 + $0x340] sm:$0xff]
    %v5263 = vld [vmem:[#allocation13 + $0x348] sm:$0xff]
    %v5264 = vld [vmem:[#allocation13 + $0x350] sm:$0xff]
    %v5265 = vld [vmem:[#allocation13 + $0x358] sm:$0xff]
    %v5266 = vld [vmem:[#allocation13 + $0x360] sm:$0xff]
    %v5267 = vld [vmem:[#allocation13 + $0x368] sm:$0xff]
    %v5268 = vld [vmem:[#allocation13 + $0x370] sm:$0xff]
    %v5269 = vld [vmem:[#allocation13 + $0x378] sm:$0xff]
    %v5270 = vld [vmem:[#allocation13 + $0x380] sm:$0xff]
    %v5271 = vld [vmem:[#allocation13 + $0x388] sm:$0xff]
    %v5272 = vld [vmem:[#allocation13 + $0x390] sm:$0xff]
    %v5273 = vld [vmem:[#allocation13 + $0x398] sm:$0xff]
    %v5274 = vld [vmem:[#allocation13 + $0x3a0] sm:$0xff]
    %v5275 = vld [vmem:[#allocation13 + $0x3a8] sm:$0xff]
    %v5276 = vld [vmem:[#allocation13 + $0x3b0] sm:$0xff]
    %v5277 = vld [vmem:[#allocation13 + $0x3b8] sm:$0xff]
    %v5278 = vld [vmem:[#allocation13 + $0x3c0] sm:$0xff]
    %v5279 = vld [vmem:[#allocation13 + $0x3c8] sm:$0xff]
    %v5280 = vld [vmem:[#allocation13 + $0x3d0] sm:$0xff]
    %v5281 = vld [vmem:[#allocation13 + $0x3d8] sm:$0xff]
    %v5282 = vld [vmem:[#allocation13 + $0x3e0] sm:$0xff]
    %v5283 = vld [vmem:[#allocation13 + $0x3e8] sm:$0xff]
    %v5284 = vld [vmem:[#allocation13 + $0x3f0] sm:$0xff]
    %v5285 = vld [vmem:[#allocation13 + $0x3f8] sm:$0xff]
    %v5286 = vld [vmem:[#allocation14] sm:$0xf]
    %v5288 = vlaneseq
    %v5289 = vshrl.u32 %v5288, 7
    %v5290 = vsub.s32 0, %v5289
    %v5291 = vrot.slane %v5286, %v5290
    %v5292 = vlaneseq
    %v5293 = vshrl.u32 %v5292, 7
    %v5294 = vsub.s32 1, %v5293
    %v5295 = vrot.slane %v5286, %v5294
    %v5296 = vlaneseq
    %v5297 = vshrl.u32 %v5296, 7
    %v5298 = vsub.s32 2, %v5297
    %v5299 = vrot.slane %v5286, %v5298
    %v5300 = vlaneseq
    %v5301 = vshrl.u32 %v5300, 7
    %v5302 = vsub.s32 3, %v5301
    %v5303 = vrot.slane %v5286, %v5302
    %v5436 = vunpack.c.l.b16 %v5158
    %v5437 = vunpack.c.h.b16 %v5158
    %v5438 = vunpack.c.l.b16 %v5159
    %v5439 = vunpack.c.h.b16 %v5159
    %v5440 = vunpack.c.l.b16 %v5160
    %v5441 = vunpack.c.h.b16 %v5160
    %v5442 = vunpack.c.l.b16 %v5161
    %v5443 = vunpack.c.h.b16 %v5161
    %v5444 = vunpack.c.l.b16 %v5162
    %v5445 = vunpack.c.h.b16 %v5162
    %v5446 = vunpack.c.l.b16 %v5163
    %v5447 = vunpack.c.h.b16 %v5163
    %v5448 = vunpack.c.l.b16 %v5164
    %v5449 = vunpack.c.h.b16 %v5164
    %v5450 = vunpack.c.l.b16 %v5165
    %v5451 = vunpack.c.h.b16 %v5165
    %v5452 = vunpack.c.l.b16 %v5166
    %v5453 = vunpack.c.h.b16 %v5166
    %v5454 = vunpack.c.l.b16 %v5167
    %v5455 = vunpack.c.h.b16 %v5167
    %v5456 = vunpack.c.l.b16 %v5168
    %v5457 = vunpack.c.h.b16 %v5168
    %v5458 = vunpack.c.l.b16 %v5169
    %v5459 = vunpack.c.h.b16 %v5169
    %v5460 = vunpack.c.l.b16 %v5170
    %v5461 = vunpack.c.h.b16 %v5170
    %v5462 = vunpack.c.l.b16 %v5171
    %v5463 = vunpack.c.h.b16 %v5171
    %v5464 = vunpack.c.l.b16 %v5172
    %v5465 = vunpack.c.h.b16 %v5172
    %v5466 = vunpack.c.l.b16 %v5173
    %v5467 = vunpack.c.h.b16 %v5173
    %v5468 = vunpack.c.l.b16 %v5174
    %v5469 = vunpack.c.h.b16 %v5174
    %v5470 = vunpack.c.l.b16 %v5175
    %v5471 = vunpack.c.h.b16 %v5175
    %v5472 = vunpack.c.l.b16 %v5176
    %v5473 = vunpack.c.h.b16 %v5176
    %v5474 = vunpack.c.l.b16 %v5177
    %v5475 = vunpack.c.h.b16 %v5177
    %v5476 = vunpack.c.l.b16 %v5178
    %v5477 = vunpack.c.h.b16 %v5178
    %v5478 = vunpack.c.l.b16 %v5179
    %v5479 = vunpack.c.h.b16 %v5179
    %v5480 = vunpack.c.l.b16 %v5180
    %v5481 = vunpack.c.h.b16 %v5180
    %v5482 = vunpack.c.l.b16 %v5181
    %v5483 = vunpack.c.h.b16 %v5181
    %v5484 = vunpack.c.l.b16 %v5182
    %v5485 = vunpack.c.h.b16 %v5182
    %v5486 = vunpack.c.l.b16 %v5183
    %v5487 = vunpack.c.h.b16 %v5183
    %v5488 = vunpack.c.l.b16 %v5184
    %v5489 = vunpack.c.h.b16 %v5184
    %v5490 = vunpack.c.l.b16 %v5185
    %v5491 = vunpack.c.h.b16 %v5185
    %v5492 = vunpack.c.l.b16 %v5186
    %v5493 = vunpack.c.h.b16 %v5186
    %v5494 = vunpack.c.l.b16 %v5187
    %v5495 = vunpack.c.h.b16 %v5187
    %v5496 = vunpack.c.l.b16 %v5188
    %v5497 = vunpack.c.h.b16 %v5188
    %v5498 = vunpack.c.l.b16 %v5189
    %v5499 = vunpack.c.h.b16 %v5189
    %v5500 = vunpack.c.l.b16 %v5190
    %v5501 = vunpack.c.h.b16 %v5190
    %v5502 = vunpack.c.l.b16 %v5191
    %v5503 = vunpack.c.h.b16 %v5191
    %v5504 = vunpack.c.l.b16 %v5192
    %v5505 = vunpack.c.h.b16 %v5192
    %v5506 = vunpack.c.l.b16 %v5193
    %v5507 = vunpack.c.h.b16 %v5193
    %v5508 = vunpack.c.l.b16 %v5194
    %v5509 = vunpack.c.h.b16 %v5194
    %v5510 = vunpack.c.l.b16 %v5195
    %v5511 = vunpack.c.h.b16 %v5195
    %v5512 = vunpack.c.l.b16 %v5196
    %v5513 = vunpack.c.h.b16 %v5196
    %v5514 = vunpack.c.l.b16 %v5197
    %v5515 = vunpack.c.h.b16 %v5197
    %v5516 = vunpack.c.l.b16 %v5198
    %v5517 = vunpack.c.h.b16 %v5198
    %v5518 = vunpack.c.l.b16 %v5199
    %v5519 = vunpack.c.h.b16 %v5199
    %v5520 = vunpack.c.l.b16 %v5200
    %v5521 = vunpack.c.h.b16 %v5200
    %v5522 = vunpack.c.l.b16 %v5201
    %v5523 = vunpack.c.h.b16 %v5201
    %v5524 = vunpack.c.l.b16 %v5202
    %v5525 = vunpack.c.h.b16 %v5202
    %v5526 = vunpack.c.l.b16 %v5203
    %v5527 = vunpack.c.h.b16 %v5203
    %v5528 = vunpack.c.l.b16 %v5204
    %v5529 = vunpack.c.h.b16 %v5204
    %v5530 = vunpack.c.l.b16 %v5205
    %v5531 = vunpack.c.h.b16 %v5205
    %v5532 = vunpack.c.l.b16 %v5206
    %v5533 = vunpack.c.h.b16 %v5206
    %v5534 = vunpack.c.l.b16 %v5207
    %v5535 = vunpack.c.h.b16 %v5207
    %v5536 = vunpack.c.l.b16 %v5208
    %v5537 = vunpack.c.h.b16 %v5208
    %v5538 = vunpack.c.l.b16 %v5209
    %v5539 = vunpack.c.h.b16 %v5209
    %v5540 = vunpack.c.l.b16 %v5210
    %v5541 = vunpack.c.h.b16 %v5210
    %v5542 = vunpack.c.l.b16 %v5211
    %v5543 = vunpack.c.h.b16 %v5211
    %v5544 = vunpack.c.l.b16 %v5212
    %v5545 = vunpack.c.h.b16 %v5212
    %v5546 = vunpack.c.l.b16 %v5213
    %v5547 = vunpack.c.h.b16 %v5213
    %v5548 = vunpack.c.l.b16 %v5214
    %v5549 = vunpack.c.h.b16 %v5214
    %v5550 = vunpack.c.l.b16 %v5215
    %v5551 = vunpack.c.h.b16 %v5215
    %v5552 = vunpack.c.l.b16 %v5216
    %v5553 = vunpack.c.h.b16 %v5216
    %v5554 = vunpack.c.l.b16 %v5217
    %v5555 = vunpack.c.h.b16 %v5217
    %v5556 = vunpack.c.l.b16 %v5218
    %v5557 = vunpack.c.h.b16 %v5218
    %v5558 = vunpack.c.l.b16 %v5219
    %v5559 = vunpack.c.h.b16 %v5219
    %v5560 = vunpack.c.l.b16 %v5220
    %v5561 = vunpack.c.h.b16 %v5220
    %v5562 = vunpack.c.l.b16 %v5221
    %v5563 = vunpack.c.h.b16 %v5221
    %v5564 = vunpack.c.l.b16 %v5222
    %v5565 = vunpack.c.h.b16 %v5222
    %v5566 = vunpack.c.l.b16 %v5223
    %v5567 = vunpack.c.h.b16 %v5223
    %v5568 = vunpack.c.l.b16 %v5224
    %v5569 = vunpack.c.h.b16 %v5224
    %v5570 = vunpack.c.l.b16 %v5225
    %v5571 = vunpack.c.h.b16 %v5225
    %v5572 = vunpack.c.l.b16 %v5226
    %v5573 = vunpack.c.h.b16 %v5226
    %v5574 = vunpack.c.l.b16 %v5227
    %v5575 = vunpack.c.h.b16 %v5227
    %v5576 = vunpack.c.l.b16 %v5228
    %v5577 = vunpack.c.h.b16 %v5228
    %v5578 = vunpack.c.l.b16 %v5229
    %v5579 = vunpack.c.h.b16 %v5229
    %v5580 = vunpack.c.l.b16 %v5230
    %v5581 = vunpack.c.h.b16 %v5230
    %v5582 = vunpack.c.l.b16 %v5231
    %v5583 = vunpack.c.h.b16 %v5231
    %v5584 = vunpack.c.l.b16 %v5232
    %v5585 = vunpack.c.h.b16 %v5232
    %v5586 = vunpack.c.l.b16 %v5233
    %v5587 = vunpack.c.h.b16 %v5233
    %v5588 = vunpack.c.l.b16 %v5234
    %v5589 = vunpack.c.h.b16 %v5234
    %v5590 = vunpack.c.l.b16 %v5235
    %v5591 = vunpack.c.h.b16 %v5235
    %v5592 = vunpack.c.l.b16 %v5236
    %v5593 = vunpack.c.h.b16 %v5236
    %v5594 = vunpack.c.l.b16 %v5237
    %v5595 = vunpack.c.h.b16 %v5237
    %v5596 = vunpack.c.l.b16 %v5238
    %v5597 = vunpack.c.h.b16 %v5238
    %v5598 = vunpack.c.l.b16 %v5239
    %v5599 = vunpack.c.h.b16 %v5239
    %v5600 = vunpack.c.l.b16 %v5240
    %v5601 = vunpack.c.h.b16 %v5240
    %v5602 = vunpack.c.l.b16 %v5241
    %v5603 = vunpack.c.h.b16 %v5241
    %v5604 = vunpack.c.l.b16 %v5242
    %v5605 = vunpack.c.h.b16 %v5242
    %v5606 = vunpack.c.l.b16 %v5243
    %v5607 = vunpack.c.h.b16 %v5243
    %v5608 = vunpack.c.l.b16 %v5244
    %v5609 = vunpack.c.h.b16 %v5244
    %v5610 = vunpack.c.l.b16 %v5245
    %v5611 = vunpack.c.h.b16 %v5245
    %v5612 = vunpack.c.l.b16 %v5246
    %v5613 = vunpack.c.h.b16 %v5246
    %v5614 = vunpack.c.l.b16 %v5247
    %v5615 = vunpack.c.h.b16 %v5247
    %v5616 = vunpack.c.l.b16 %v5248
    %v5617 = vunpack.c.h.b16 %v5248
    %v5618 = vunpack.c.l.b16 %v5249
    %v5619 = vunpack.c.h.b16 %v5249
    %v5620 = vunpack.c.l.b16 %v5250
    %v5621 = vunpack.c.h.b16 %v5250
    %v5622 = vunpack.c.l.b16 %v5251
    %v5623 = vunpack.c.h.b16 %v5251
    %v5624 = vunpack.c.l.b16 %v5252
    %v5625 = vunpack.c.h.b16 %v5252
    %v5626 = vunpack.c.l.b16 %v5253
    %v5627 = vunpack.c.h.b16 %v5253
    %v5628 = vunpack.c.l.b16 %v5254
    %v5629 = vunpack.c.h.b16 %v5254
    %v5630 = vunpack.c.l.b16 %v5255
    %v5631 = vunpack.c.h.b16 %v5255
    %v5632 = vunpack.c.l.b16 %v5256
    %v5633 = vunpack.c.h.b16 %v5256
    %v5634 = vunpack.c.l.b16 %v5257
    %v5635 = vunpack.c.h.b16 %v5257
    %v5636 = vunpack.c.l.b16 %v5258
    %v5637 = vunpack.c.h.b16 %v5258
    %v5638 = vunpack.c.l.b16 %v5259
    %v5639 = vunpack.c.h.b16 %v5259
    %v5640 = vunpack.c.l.b16 %v5260
    %v5641 = vunpack.c.h.b16 %v5260
    %v5642 = vunpack.c.l.b16 %v5261
    %v5643 = vunpack.c.h.b16 %v5261
    %v5644 = vunpack.c.l.b16 %v5262
    %v5645 = vunpack.c.h.b16 %v5262
    %v5646 = vunpack.c.l.b16 %v5263
    %v5647 = vunpack.c.h.b16 %v5263
    %v5648 = vunpack.c.l.b16 %v5264
    %v5649 = vunpack.c.h.b16 %v5264
    %v5650 = vunpack.c.l.b16 %v5265
    %v5651 = vunpack.c.h.b16 %v5265
    %v5652 = vunpack.c.l.b16 %v5266
    %v5653 = vunpack.c.h.b16 %v5266
    %v5654 = vunpack.c.l.b16 %v5267
    %v5655 = vunpack.c.h.b16 %v5267
    %v5656 = vunpack.c.l.b16 %v5268
    %v5657 = vunpack.c.h.b16 %v5268
    %v5658 = vunpack.c.l.b16 %v5269
    %v5659 = vunpack.c.h.b16 %v5269
    %v5660 = vunpack.c.l.b16 %v5270
    %v5661 = vunpack.c.h.b16 %v5270
    %v5662 = vunpack.c.l.b16 %v5271
    %v5663 = vunpack.c.h.b16 %v5271
    %v5664 = vunpack.c.l.b16 %v5272
    %v5665 = vunpack.c.h.b16 %v5272
    %v5666 = vunpack.c.l.b16 %v5273
    %v5667 = vunpack.c.h.b16 %v5273
    %v5668 = vunpack.c.l.b16 %v5274
    %v5669 = vunpack.c.h.b16 %v5274
    %v5670 = vunpack.c.l.b16 %v5275
    %v5671 = vunpack.c.h.b16 %v5275
    %v5672 = vunpack.c.l.b16 %v5276
    %v5673 = vunpack.c.h.b16 %v5276
    %v5674 = vunpack.c.l.b16 %v5277
    %v5675 = vunpack.c.h.b16 %v5277
    %v5676 = vunpack.c.l.b16 %v5278
    %v5677 = vunpack.c.h.b16 %v5278
    %v5678 = vunpack.c.l.b16 %v5279
    %v5679 = vunpack.c.h.b16 %v5279
    %v5680 = vunpack.c.l.b16 %v5280
    %v5681 = vunpack.c.h.b16 %v5280
    %v5682 = vunpack.c.l.b16 %v5281
    %v5683 = vunpack.c.h.b16 %v5281
    %v5684 = vunpack.c.l.b16 %v5282
    %v5685 = vunpack.c.h.b16 %v5282
    %v5686 = vunpack.c.l.b16 %v5283
    %v5687 = vunpack.c.h.b16 %v5283
    %v5688 = vunpack.c.l.b16 %v5284
    %v5689 = vunpack.c.h.b16 %v5284
    %v5690 = vunpack.c.l.b16 %v5285
    %v5691 = vunpack.c.h.b16 %v5285
    %v5692 = vpack.c.b16 %v5440, %v5436
    %v5693 = vpack.c.b16 %v5441, %v5437
    %v5694 = vpack.c.b16 %v5442, %v5438
    %v5695 = vpack.c.b16 %v5443, %v5439
    %v5696 = vpack.c.b16 %v5448, %v5444
    %v5697 = vpack.c.b16 %v5449, %v5445
    %v5698 = vpack.c.b16 %v5450, %v5446
    %v5699 = vpack.c.b16 %v5451, %v5447
    %v5700 = vpack.c.b16 %v5456, %v5452
    %v5701 = vpack.c.b16 %v5457, %v5453
    %v5702 = vpack.c.b16 %v5458, %v5454
    %v5703 = vpack.c.b16 %v5459, %v5455
    %v5704 = vpack.c.b16 %v5464, %v5460
    %v5705 = vpack.c.b16 %v5465, %v5461
    %v5706 = vpack.c.b16 %v5466, %v5462
    %v5707 = vpack.c.b16 %v5467, %v5463
    %v5708 = vpack.c.b16 %v5472, %v5468
    %v5709 = vpack.c.b16 %v5473, %v5469
    %v5710 = vpack.c.b16 %v5474, %v5470
    %v5711 = vpack.c.b16 %v5475, %v5471
    %v5712 = vpack.c.b16 %v5480, %v5476
    %v5713 = vpack.c.b16 %v5481, %v5477
    %v5714 = vpack.c.b16 %v5482, %v5478
    %v5715 = vpack.c.b16 %v5483, %v5479
    %v5716 = vpack.c.b16 %v5488, %v5484
    %v5717 = vpack.c.b16 %v5489, %v5485
    %v5718 = vpack.c.b16 %v5490, %v5486
    %v5719 = vpack.c.b16 %v5491, %v5487
    %v5720 = vpack.c.b16 %v5496, %v5492
    %v5721 = vpack.c.b16 %v5497, %v5493
    %v5722 = vpack.c.b16 %v5498, %v5494
    %v5723 = vpack.c.b16 %v5499, %v5495
    %v5724 = vpack.c.b16 %v5504, %v5500
    %v5725 = vpack.c.b16 %v5505, %v5501
    %v5726 = vpack.c.b16 %v5506, %v5502
    %v5727 = vpack.c.b16 %v5507, %v5503
    %v5728 = vpack.c.b16 %v5512, %v5508
    %v5729 = vpack.c.b16 %v5513, %v5509
    %v5730 = vpack.c.b16 %v5514, %v5510
    %v5731 = vpack.c.b16 %v5515, %v5511
    %v5732 = vpack.c.b16 %v5520, %v5516
    %v5733 = vpack.c.b16 %v5521, %v5517
    %v5734 = vpack.c.b16 %v5522, %v5518
    %v5735 = vpack.c.b16 %v5523, %v5519
    %v5736 = vpack.c.b16 %v5528, %v5524
    %v5737 = vpack.c.b16 %v5529, %v5525
    %v5738 = vpack.c.b16 %v5530, %v5526
    %v5739 = vpack.c.b16 %v5531, %v5527
    %v5740 = vpack.c.b16 %v5536, %v5532
    %v5741 = vpack.c.b16 %v5537, %v5533
    %v5742 = vpack.c.b16 %v5538, %v5534
    %v5743 = vpack.c.b16 %v5539, %v5535
    %v5744 = vpack.c.b16 %v5544, %v5540
    %v5745 = vpack.c.b16 %v5545, %v5541
    %v5746 = vpack.c.b16 %v5546, %v5542
    %v5747 = vpack.c.b16 %v5547, %v5543
    %v5748 = vpack.c.b16 %v5552, %v5548
    %v5749 = vpack.c.b16 %v5553, %v5549
    %v5750 = vpack.c.b16 %v5554, %v5550
    %v5751 = vpack.c.b16 %v5555, %v5551
    %v5752 = vpack.c.b16 %v5560, %v5556
    %v5753 = vpack.c.b16 %v5561, %v5557
    %v5754 = vpack.c.b16 %v5562, %v5558
    %v5755 = vpack.c.b16 %v5563, %v5559
    %v5756 = vpack.c.b16 %v5568, %v5564
    %v5757 = vpack.c.b16 %v5569, %v5565
    %v5758 = vpack.c.b16 %v5570, %v5566
    %v5759 = vpack.c.b16 %v5571, %v5567
    %v5760 = vpack.c.b16 %v5576, %v5572
    %v5761 = vpack.c.b16 %v5577, %v5573
    %v5762 = vpack.c.b16 %v5578, %v5574
    %v5763 = vpack.c.b16 %v5579, %v5575
    %v5764 = vpack.c.b16 %v5584, %v5580
    %v5765 = vpack.c.b16 %v5585, %v5581
    %v5766 = vpack.c.b16 %v5586, %v5582
    %v5767 = vpack.c.b16 %v5587, %v5583
    %v5768 = vpack.c.b16 %v5592, %v5588
    %v5769 = vpack.c.b16 %v5593, %v5589
    %v5770 = vpack.c.b16 %v5594, %v5590
    %v5771 = vpack.c.b16 %v5595, %v5591
    %v5772 = vpack.c.b16 %v5600, %v5596
    %v5773 = vpack.c.b16 %v5601, %v5597
    %v5774 = vpack.c.b16 %v5602, %v5598
    %v5775 = vpack.c.b16 %v5603, %v5599
    %v5776 = vpack.c.b16 %v5608, %v5604
    %v5777 = vpack.c.b16 %v5609, %v5605
    %v5778 = vpack.c.b16 %v5610, %v5606
    %v5779 = vpack.c.b16 %v5611, %v5607
    %v5780 = vpack.c.b16 %v5616, %v5612
    %v5781 = vpack.c.b16 %v5617, %v5613
    %v5782 = vpack.c.b16 %v5618, %v5614
    %v5783 = vpack.c.b16 %v5619, %v5615
    %v5784 = vpack.c.b16 %v5624, %v5620
    %v5785 = vpack.c.b16 %v5625, %v5621
    %v5786 = vpack.c.b16 %v5626, %v5622
    %v5787 = vpack.c.b16 %v5627, %v5623
    %v5788 = vpack.c.b16 %v5632, %v5628
    %v5789 = vpack.c.b16 %v5633, %v5629
    %v5790 = vpack.c.b16 %v5634, %v5630
    %v5791 = vpack.c.b16 %v5635, %v5631
    %v5792 = vpack.c.b16 %v5640, %v5636
    %v5793 = vpack.c.b16 %v5641, %v5637
    %v5794 = vpack.c.b16 %v5642, %v5638
    %v5795 = vpack.c.b16 %v5643, %v5639
    %v5796 = vpack.c.b16 %v5648, %v5644
    %v5797 = vpack.c.b16 %v5649, %v5645
    %v5798 = vpack.c.b16 %v5650, %v5646
    %v5799 = vpack.c.b16 %v5651, %v5647
    %v5800 = vpack.c.b16 %v5656, %v5652
    %v5801 = vpack.c.b16 %v5657, %v5653
    %v5802 = vpack.c.b16 %v5658, %v5654
    %v5803 = vpack.c.b16 %v5659, %v5655
    %v5804 = vpack.c.b16 %v5664, %v5660
    %v5805 = vpack.c.b16 %v5665, %v5661
    %v5806 = vpack.c.b16 %v5666, %v5662
    %v5807 = vpack.c.b16 %v5667, %v5663
    %v5808 = vpack.c.b16 %v5672, %v5668
    %v5809 = vpack.c.b16 %v5673, %v5669
    %v5810 = vpack.c.b16 %v5674, %v5670
    %v5811 = vpack.c.b16 %v5675, %v5671
    %v5812 = vpack.c.b16 %v5680, %v5676
    %v5813 = vpack.c.b16 %v5681, %v5677
    %v5814 = vpack.c.b16 %v5682, %v5678
    %v5815 = vpack.c.b16 %v5683, %v5679
    %v5816 = vpack.c.b16 %v5688, %v5684
    %v5817 = vpack.c.b16 %v5689, %v5685
    %v5818 = vpack.c.b16 %v5690, %v5686
    %v5819 = vpack.c.b16 %v5691, %v5687
    %5948 = vmatprep.subr.bf16.mxu0 %v5693
    %5949 = vmatpush1.bf16.msra.mxu0 %v5692
    %5950 = vmatprep.subr.bf16.mxu0 %v5697
    %5951 = vmatpush1.bf16.msra.mxu0 %v5696
    %5952 = vmatprep.subr.bf16.mxu0 %v5701
    %5953 = vmatpush1.bf16.msra.mxu0 %v5700
    %5954 = vmatprep.subr.bf16.mxu0 %v5705
    %5955 = vmatpush1.bf16.msra.mxu0 %v5704
    %5956 = vmatprep.subr.bf16.mxu0 %v5709
    %5957 = vmatpush1.bf16.msra.mxu0 %v5708
    %5958 = vmatprep.subr.bf16.mxu0 %v5713
    %5959 = vmatpush1.bf16.msra.mxu0 %v5712
    %5960 = vmatprep.subr.bf16.mxu0 %v5717
    %5961 = vmatpush1.bf16.msra.mxu0 %v5716
    %5962 = vmatprep.subr.bf16.mxu0 %v5721
    %5963 = vmatpush1.bf16.msra.mxu0 %v5720
    %5964 = vmatprep.subr.bf16.mxu0 %v5725
    %5965 = vmatpush1.bf16.msra.mxu0 %v5724
    %5966 = vmatprep.subr.bf16.mxu0 %v5729
    %5967 = vmatpush1.bf16.msra.mxu0 %v5728
    %5968 = vmatprep.subr.bf16.mxu0 %v5733
    %5969 = vmatpush1.bf16.msra.mxu0 %v5732
    %5970 = vmatprep.subr.bf16.mxu0 %v5737
    %5971 = vmatpush1.bf16.msra.mxu0 %v5736
    %5972 = vmatprep.subr.bf16.mxu0 %v5741
    %5973 = vmatpush1.bf16.msra.mxu0 %v5740
    %5974 = vmatprep.subr.bf16.mxu0 %v5745
    %5975 = vmatpush1.bf16.msra.mxu0 %v5744
    %5976 = vmatprep.subr.bf16.mxu0 %v5749
    %5977 = vmatpush1.bf16.msra.mxu0 %v5748
    %5978 = vmatprep.subr.bf16.mxu0 %v5753
    %5979 = vmatpush1.bf16.msra.mxu0 %v5752
    %5980 = vmatprep.mubr.bf16.mxu0 %v5155
    %5981 = vmatmul.mubr.bf16.gmra.mrb[0].mxu0 %v5154
    %v5982 = vpop.f32.mrb[0].mxu0
    %v5983 = vadd.f32 %v5291, %v5982
    %v5984 = vpop.f32.mrb[0].mxu0
    %v5985 = vadd.f32 %v5295, %v5984
    %v5986 = vpop.f32.mrb[0].mxu0
    %v5987 = vpop.f32.mrb[0].mxu0
    %5988 = vdwg.mxu0
    %5989 = vmatprep.subr.bf16.mxu0 %v5757
    %5990 = vmatpush1.bf16.msra.mxu0 %v5756
    %5991 = vmatprep.subr.bf16.mxu0 %v5761
    %5992 = vmatpush1.bf16.msra.mxu0 %v5760
    %5993 = vmatprep.subr.bf16.mxu0 %v5765
    %5994 = vmatpush1.bf16.msra.mxu0 %v5764
    %5995 = vmatprep.subr.bf16.mxu0 %v5769
    %5996 = vmatpush1.bf16.msra.mxu0 %v5768
    %5997 = vmatprep.subr.bf16.mxu0 %v5773
    %5998 = vmatpush1.bf16.msra.mxu0 %v5772
    %5999 = vmatprep.subr.bf16.mxu0 %v5777
    %6000 = vmatpush1.bf16.msra.mxu0 %v5776
    %6001 = vmatprep.subr.bf16.mxu0 %v5781
    %6002 = vmatpush1.bf16.msra.mxu0 %v5780
    %6003 = vmatprep.subr.bf16.mxu0 %v5785
    %6004 = vmatpush1.bf16.msra.mxu0 %v5784
    %6005 = vmatprep.subr.bf16.mxu0 %v5789
    %6006 = vmatpush1.bf16.msra.mxu0 %v5788
    %6007 = vmatprep.subr.bf16.mxu0 %v5793
    %6008 = vmatpush1.bf16.msra.mxu0 %v5792
    %6009 = vmatprep.subr.bf16.mxu0 %v5797
    %6010 = vmatpush1.bf16.msra.mxu0 %v5796
    %6011 = vmatprep.subr.bf16.mxu0 %v5801
    %6012 = vmatpush1.bf16.msra.mxu0 %v5800
    %6013 = vmatprep.subr.bf16.mxu0 %v5805
    %6014 = vmatpush1.bf16.msra.mxu0 %v5804
    %6015 = vmatprep.subr.bf16.mxu0 %v5809
    %6016 = vmatpush1.bf16.msra.mxu0 %v5808
    %6017 = vmatprep.subr.bf16.mxu0 %v5813
    %6018 = vmatpush1.bf16.msra.mxu0 %v5812
    %6019 = vmatprep.subr.bf16.mxu0 %v5817
    %6020 = vmatpush1.bf16.msra.mxu0 %v5816
    %6021 = vmatprep.mubr.bf16.mxu0 %v5157
    %6022 = vmatmul.mubr.bf16.gmra.mrb[0].mxu0 %v5156
    %v6023 = vpop.f32.mrb[0].mxu0
    %v6024 = vadd.f32 %v5983, %v6023
    %v6025 = vpop.f32.mrb[0].mxu0
    %v6026 = vadd.f32 %v5985, %v6025
    %v6027 = vpop.f32.mrb[0].mxu0
    %v6028 = vpop.f32.mrb[0].mxu0
    %6029 = vdwg.mxu0
    %6030 = vmatprep.subr.bf16.mxu0 %v5695
    %6031 = vmatpush1.bf16.msra.mxu0 %v5694
    %6032 = vmatprep.subr.bf16.mxu0 %v5699
    %6033 = vmatpush1.bf16.msra.mxu0 %v5698
    %6034 = vmatprep.subr.bf16.mxu0 %v5703
    %6035 = vmatpush1.bf16.msra.mxu0 %v5702
    %6036 = vmatprep.subr.bf16.mxu0 %v5707
    %6037 = vmatpush1.bf16.msra.mxu0 %v5706
    %6038 = vmatprep.subr.bf16.mxu0 %v5711
    %6039 = vmatpush1.bf16.msra.mxu0 %v5710
    %6040 = vmatprep.subr.bf16.mxu0 %v5715
    %6041 = vmatpush1.bf16.msra.mxu0 %v5714
    %6042 = vmatprep.subr.bf16.mxu0 %v5719
    %6043 = vmatpush1.bf16.msra.mxu0 %v5718
    %6044 = vmatprep.subr.bf16.mxu0 %v5723
    %6045 = vmatpush1.bf16.msra.mxu0 %v5722
    %6046 = vmatprep.subr.bf16.mxu0 %v5727
    %6047 = vmatpush1.bf16.msra.mxu0 %v5726
    %6048 = vmatprep.subr.bf16.mxu0 %v5731
    %6049 = vmatpush1.bf16.msra.mxu0 %v5730
    %6050 = vmatprep.subr.bf16.mxu0 %v5735
    %6051 = vmatpush1.bf16.msra.mxu0 %v5734
    %6052 = vmatprep.subr.bf16.mxu0 %v5739
    %6053 = vmatpush1.bf16.msra.mxu0 %v5738
    %6054 = vmatprep.subr.bf16.mxu0 %v5743
    %6055 = vmatpush1.bf16.msra.mxu0 %v5742
    %6056 = vmatprep.subr.bf16.mxu0 %v5747
    %6057 = vmatpush1.bf16.msra.mxu0 %v5746
    %6058 = vmatprep.subr.bf16.mxu0 %v5751
    %6059 = vmatpush1.bf16.msra.mxu0 %v5750
    %6060 = vmatprep.subr.bf16.mxu0 %v5755
    %6061 = vmatpush1.bf16.msra.mxu0 %v5754
    %6062 = vmatprep.mubr.bf16.mxu0 %v5155
    %6063 = vmatmul.mubr.bf16.gmra.mrb[0].mxu0 %v5154
    %v6064 = vpop.f32.mrb[0].mxu0
    %v6065 = vadd.f32 %v5299, %v6064
    %v6066 = vpop.f32.mrb[0].mxu0
    %v6067 = vadd.f32 %v5303, %v6066
    %v6068 = vpop.f32.mrb[0].mxu0
    %v6069 = vpop.f32.mrb[0].mxu0
    %6070 = vdwg.mxu0
    %6071 = vmatprep.subr.bf16.mxu0 %v5759
    %6072 = vmatpush1.bf16.msra.mxu0 %v5758
    %6073 = vmatprep.subr.bf16.mxu0 %v5763
    %6074 = vmatpush1.bf16.msra.mxu0 %v5762
    %6075 = vmatprep.subr.bf16.mxu0 %v5767
    %6076 = vmatpush1.bf16.msra.mxu0 %v5766
    %6077 = vmatprep.subr.bf16.mxu0 %v5771
    %6078 = vmatpush1.bf16.msra.mxu0 %v5770
    %6079 = vmatprep.subr.bf16.mxu0 %v5775
    %6080 = vmatpush1.bf16.msra.mxu0 %v5774
    %6081 = vmatprep.subr.bf16.mxu0 %v5779
    %6082 = vmatpush1.bf16.msra.mxu0 %v5778
    %6083 = vmatprep.subr.bf16.mxu0 %v5783
    %6084 = vmatpush1.bf16.msra.mxu0 %v5782
    %6085 = vmatprep.subr.bf16.mxu0 %v5787
    %6086 = vmatpush1.bf16.msra.mxu0 %v5786
    %6087 = vmatprep.subr.bf16.mxu0 %v5791
    %6088 = vmatpush1.bf16.msra.mxu0 %v5790
    %6089 = vmatprep.subr.bf16.mxu0 %v5795
    %6090 = vmatpush1.bf16.msra.mxu0 %v5794
    %6091 = vmatprep.subr.bf16.mxu0 %v5799
    %6092 = vmatpush1.bf16.msra.mxu0 %v5798
    %6093 = vmatprep.subr.bf16.mxu0 %v5803
    %6094 = vmatpush1.bf16.msra.mxu0 %v5802
    %6095 = vmatprep.subr.bf16.mxu0 %v5807
    %6096 = vmatpush1.bf16.msra.mxu0 %v5806
    %6097 = vmatprep.subr.bf16.mxu0 %v5811
    %6098 = vmatpush1.bf16.msra.mxu0 %v5810
    %6099 = vmatprep.subr.bf16.mxu0 %v5815
    %6100 = vmatpush1.bf16.msra.mxu0 %v5814
    %6101 = vmatprep.subr.bf16.mxu0 %v5819
    %6102 = vmatpush1.bf16.msra.mxu0 %v5818
    %6103 = vmatprep.mubr.bf16.mxu0 %v5157
    %6104 = vmatmul.mubr.bf16.gmra.mrb[0].mxu0 %v5156
    %v6105 = vpop.f32.mrb[0].mxu0
    %v6106 = vadd.f32 %v6065, %v6105
    %v6107 = vpop.f32.mrb[0].mxu0
    %v6108 = vadd.f32 %v6067, %v6107
    %v6109 = vpop.f32.mrb[0].mxu0
    %v6110 = vpop.f32.mrb[0].mxu0
    %6111 = vdwg.mxu0
    %s6112 = sld [smem:[#allocation25 + $0x3]]
    %vm6113 = vcmp.ge.f32.partialorder %v6024, 0.0
    %vm6114 = vcmp.ge.f32.partialorder %v6026, 0.0
    %vm6115 = vcmp.ge.f32.partialorder %v6106, 0.0
    %vm6116 = vcmp.ge.f32.partialorder %v6108, 0.0
    %v6117 = vstv %s6112
    %v6118 = vmul.f32 %v6117, %v6024
    %v6119 = vmul.f32 %v6117, %v6026
    %v6120 = vmul.f32 %v6117, %v6106
    %v6121 = vmul.f32 %v6117, %v6108
    %v6122 = vsel %vm6113, %v6024, %v6118
    %v6123 = vsel %vm6114, %v6026, %v6119
    %v6124 = vsel %vm6115, %v6106, %v6120
    %v6125 = vsel %vm6116, %v6108, %v6121
    %v6126 = vpack.c.bf16 %v6122, %v6122
    %v6127 = vpack.c.bf16 %v6123, %v6123
    %v6128 = vpack.c.bf16 %v6124, %v6124
    %v6129 = vpack.c.bf16 %v6125, %v6125
    %v6130 = vld [vmem:[#allocation16] sm:$0xf]
    %v6131 = vld [vmem:[#allocation16 + $0x4] sm:$0xf]
    %v6132 = vld [vmem:[#allocation16 + $0x8] sm:$0xf]
    %v6133 = vld [vmem:[#allocation16 + $0xc] sm:$0xf]
    %v6134 = vld [vmem:[#allocation16 + $0x10] sm:$0xf]
    %v6135 = vld [vmem:[#allocation16 + $0x14] sm:$0xf]
    %v6136 = vld [vmem:[#allocation16 + $0x18] sm:$0xf]
    %v6137 = vld [vmem:[#allocation16 + $0x1c] sm:$0xf]
    %v6138 = vld [vmem:[#allocation16 + $0x20] sm:$0xf]
    %v6139 = vld [vmem:[#allocation16 + $0x24] sm:$0xf]
    %v6140 = vld [vmem:[#allocation16 + $0x28] sm:$0xf]
    %v6141 = vld [vmem:[#allocation16 + $0x2c] sm:$0xf]
    %v6142 = vld [vmem:[#allocation16 + $0x30] sm:$0xf]
    %v6143 = vld [vmem:[#allocation16 + $0x34] sm:$0xf]
    %v6144 = vld [vmem:[#allocation16 + $0x38] sm:$0xf]
    %v6145 = vld [vmem:[#allocation16 + $0x3c] sm:$0xf]
    %v6146 = vld [vmem:[#allocation16 + $0x40] sm:$0xf]
    %v6147 = vld [vmem:[#allocation16 + $0x44] sm:$0xf]
    %v6148 = vld [vmem:[#allocation16 + $0x48] sm:$0xf]
    %v6149 = vld [vmem:[#allocation16 + $0x4c] sm:$0xf]
    %v6150 = vld [vmem:[#allocation16 + $0x50] sm:$0xf]
    %v6151 = vld [vmem:[#allocation16 + $0x54] sm:$0xf]
    %v6152 = vld [vmem:[#allocation16 + $0x58] sm:$0xf]
    %v6153 = vld [vmem:[#allocation16 + $0x5c] sm:$0xf]
    %v6154 = vld [vmem:[#allocation16 + $0x60] sm:$0xf]
    %v6155 = vld [vmem:[#allocation16 + $0x64] sm:$0xf]
    %v6156 = vld [vmem:[#allocation16 + $0x68] sm:$0xf]
    %v6157 = vld [vmem:[#allocation16 + $0x6c] sm:$0xf]
    %v6158 = vld [vmem:[#allocation16 + $0x70] sm:$0xf]
    %v6159 = vld [vmem:[#allocation16 + $0x74] sm:$0xf]
    %v6160 = vld [vmem:[#allocation16 + $0x78] sm:$0xf]
    %v6161 = vld [vmem:[#allocation16 + $0x7c] sm:$0xf]
    %v6162 = vld [vmem:[#allocation16 + $0x80] sm:$0xf]
    %v6163 = vld [vmem:[#allocation16 + $0x84] sm:$0xf]
    %v6164 = vld [vmem:[#allocation16 + $0x88] sm:$0xf]
    %v6165 = vld [vmem:[#allocation16 + $0x8c] sm:$0xf]
    %v6166 = vld [vmem:[#allocation16 + $0x90] sm:$0xf]
    %v6167 = vld [vmem:[#allocation16 + $0x94] sm:$0xf]
    %v6168 = vld [vmem:[#allocation16 + $0x98] sm:$0xf]
    %v6169 = vld [vmem:[#allocation16 + $0x9c] sm:$0xf]
    %v6170 = vld [vmem:[#allocation16 + $0xa0] sm:$0xf]
    %v6171 = vld [vmem:[#allocation16 + $0xa4] sm:$0xf]
    %v6172 = vld [vmem:[#allocation16 + $0xa8] sm:$0xf]
    %v6173 = vld [vmem:[#allocation16 + $0xac] sm:$0xf]
    %v6174 = vld [vmem:[#allocation16 + $0xb0] sm:$0xf]
    %v6175 = vld [vmem:[#allocation16 + $0xb4] sm:$0xf]
    %v6176 = vld [vmem:[#allocation16 + $0xb8] sm:$0xf]
    %v6177 = vld [vmem:[#allocation16 + $0xbc] sm:$0xf]
    %v6178 = vld [vmem:[#allocation16 + $0xc0] sm:$0xf]
    %v6179 = vld [vmem:[#allocation16 + $0xc4] sm:$0xf]
    %v6180 = vld [vmem:[#allocation16 + $0xc8] sm:$0xf]
    %v6181 = vld [vmem:[#allocation16 + $0xcc] sm:$0xf]
    %v6182 = vld [vmem:[#allocation16 + $0xd0] sm:$0xf]
    %v6183 = vld [vmem:[#allocation16 + $0xd4] sm:$0xf]
    %v6184 = vld [vmem:[#allocation16 + $0xd8] sm:$0xf]
    %v6185 = vld [vmem:[#allocation16 + $0xdc] sm:$0xf]
    %v6186 = vld [vmem:[#allocation16 + $0xe0] sm:$0xf]
    %v6187 = vld [vmem:[#allocation16 + $0xe4] sm:$0xf]
    %v6188 = vld [vmem:[#allocation16 + $0xe8] sm:$0xf]
    %v6189 = vld [vmem:[#allocation16 + $0xec] sm:$0xf]
    %v6190 = vld [vmem:[#allocation16 + $0xf0] sm:$0xf]
    %v6191 = vld [vmem:[#allocation16 + $0xf4] sm:$0xf]
    %v6192 = vld [vmem:[#allocation16 + $0xf8] sm:$0xf]
    %v6193 = vld [vmem:[#allocation16 + $0xfc] sm:$0xf]
    %v6194 = vld [vmem:[#allocation17] sm:$0x1]
    %v6196 = vlaneseq
    %v6197 = vshrl.u32 %v6196, 7
    %v6198 = vsub.s32 0, %v6197
    %v6199 = vrot.slane %v6194, %v6198
    %v6265 = vunpack.c.l.b16 %v6130
    %v6266 = vunpack.c.l.b16 %v6131
    %v6267 = vunpack.c.l.b16 %v6132
    %v6268 = vunpack.c.l.b16 %v6133
    %v6269 = vunpack.c.l.b16 %v6134
    %v6270 = vunpack.c.l.b16 %v6135
    %v6271 = vunpack.c.l.b16 %v6136
    %v6272 = vunpack.c.l.b16 %v6137
    %v6273 = vunpack.c.l.b16 %v6138
    %v6274 = vunpack.c.l.b16 %v6139
    %v6275 = vunpack.c.l.b16 %v6140
    %v6276 = vunpack.c.l.b16 %v6141
    %v6277 = vunpack.c.l.b16 %v6142
    %v6278 = vunpack.c.l.b16 %v6143
    %v6279 = vunpack.c.l.b16 %v6144
    %v6280 = vunpack.c.l.b16 %v6145
    %v6281 = vunpack.c.l.b16 %v6146
    %v6282 = vunpack.c.l.b16 %v6147
    %v6283 = vunpack.c.l.b16 %v6148
    %v6284 = vunpack.c.l.b16 %v6149
    %v6285 = vunpack.c.l.b16 %v6150
    %v6286 = vunpack.c.l.b16 %v6151
    %v6287 = vunpack.c.l.b16 %v6152
    %v6288 = vunpack.c.l.b16 %v6153
    %v6289 = vunpack.c.l.b16 %v6154
    %v6290 = vunpack.c.l.b16 %v6155
    %v6291 = vunpack.c.l.b16 %v6156
    %v6292 = vunpack.c.l.b16 %v6157
    %v6293 = vunpack.c.l.b16 %v6158
    %v6294 = vunpack.c.l.b16 %v6159
    %v6295 = vunpack.c.l.b16 %v6160
    %v6296 = vunpack.c.l.b16 %v6161
    %v6297 = vunpack.c.l.b16 %v6162
    %v6298 = vunpack.c.l.b16 %v6163
    %v6299 = vunpack.c.l.b16 %v6164
    %v6300 = vunpack.c.l.b16 %v6165
    %v6301 = vunpack.c.l.b16 %v6166
    %v6302 = vunpack.c.l.b16 %v6167
    %v6303 = vunpack.c.l.b16 %v6168
    %v6304 = vunpack.c.l.b16 %v6169
    %v6305 = vunpack.c.l.b16 %v6170
    %v6306 = vunpack.c.l.b16 %v6171
    %v6307 = vunpack.c.l.b16 %v6172
    %v6308 = vunpack.c.l.b16 %v6173
    %v6309 = vunpack.c.l.b16 %v6174
    %v6310 = vunpack.c.l.b16 %v6175
    %v6311 = vunpack.c.l.b16 %v6176
    %v6312 = vunpack.c.l.b16 %v6177
    %v6313 = vunpack.c.l.b16 %v6178
    %v6314 = vunpack.c.l.b16 %v6179
    %v6315 = vunpack.c.l.b16 %v6180
    %v6316 = vunpack.c.l.b16 %v6181
    %v6317 = vunpack.c.l.b16 %v6182
    %v6318 = vunpack.c.l.b16 %v6183
    %v6319 = vunpack.c.l.b16 %v6184
    %v6320 = vunpack.c.l.b16 %v6185
    %v6321 = vunpack.c.l.b16 %v6186
    %v6322 = vunpack.c.l.b16 %v6187
    %v6323 = vunpack.c.l.b16 %v6188
    %v6324 = vunpack.c.l.b16 %v6189
    %v6325 = vunpack.c.l.b16 %v6190
    %v6326 = vunpack.c.l.b16 %v6191
    %v6327 = vunpack.c.l.b16 %v6192
    %v6328 = vunpack.c.l.b16 %v6193
    %v6329 = vpack.c.b16 %v6266, %v6265
    %v6330 = vpack.c.b16 %v6268, %v6267
    %v6331 = vpack.c.b16 %v6270, %v6269
    %v6332 = vpack.c.b16 %v6272, %v6271
    %v6333 = vpack.c.b16 %v6274, %v6273
    %v6334 = vpack.c.b16 %v6276, %v6275
    %v6335 = vpack.c.b16 %v6278, %v6277
    %v6336 = vpack.c.b16 %v6280, %v6279
    %v6337 = vpack.c.b16 %v6282, %v6281
    %v6338 = vpack.c.b16 %v6284, %v6283
    %v6339 = vpack.c.b16 %v6286, %v6285
    %v6340 = vpack.c.b16 %v6288, %v6287
    %v6341 = vpack.c.b16 %v6290, %v6289
    %v6342 = vpack.c.b16 %v6292, %v6291
    %v6343 = vpack.c.b16 %v6294, %v6293
    %v6344 = vpack.c.b16 %v6296, %v6295
    %v6345 = vpack.c.b16 %v6298, %v6297
    %v6346 = vpack.c.b16 %v6300, %v6299
    %v6347 = vpack.c.b16 %v6302, %v6301
    %v6348 = vpack.c.b16 %v6304, %v6303
    %v6349 = vpack.c.b16 %v6306, %v6305
    %v6350 = vpack.c.b16 %v6308, %v6307
    %v6351 = vpack.c.b16 %v6310, %v6309
    %v6352 = vpack.c.b16 %v6312, %v6311
    %v6353 = vpack.c.b16 %v6314, %v6313
    %v6354 = vpack.c.b16 %v6316, %v6315
    %v6355 = vpack.c.b16 %v6318, %v6317
    %v6356 = vpack.c.b16 %v6320, %v6319
    %v6357 = vpack.c.b16 %v6322, %v6321
    %v6358 = vpack.c.b16 %v6324, %v6323
    %v6359 = vpack.c.b16 %v6326, %v6325
    %v6360 = vpack.c.b16 %v6328, %v6327
    %6393 = vmatprep.subr.bf16.mxu0 0
    %6394 = vmatpush1.bf16.msra.mxu0 %v6329
    %6395 = vmatprep.subr.bf16.mxu0 0
    %6396 = vmatpush1.bf16.msra.mxu0 %v6330
    %6397 = vmatprep.subr.bf16.mxu0 0
    %6398 = vmatpush1.bf16.msra.mxu0 %v6331
    %6399 = vmatprep.subr.bf16.mxu0 0
    %6400 = vmatpush1.bf16.msra.mxu0 %v6332
    %6401 = vmatprep.subr.bf16.mxu0 0
    %6402 = vmatpush1.bf16.msra.mxu0 %v6333
    %6403 = vmatprep.subr.bf16.mxu0 0
    %6404 = vmatpush1.bf16.msra.mxu0 %v6334
    %6405 = vmatprep.subr.bf16.mxu0 0
    %6406 = vmatpush1.bf16.msra.mxu0 %v6335
    %6407 = vmatprep.subr.bf16.mxu0 0
    %6408 = vmatpush1.bf16.msra.mxu0 %v6336
    %6409 = vmatprep.subr.bf16.mxu0 0
    %6410 = vmatpush1.bf16.msra.mxu0 %v6337
    %6411 = vmatprep.subr.bf16.mxu0 0
    %6412 = vmatpush1.bf16.msra.mxu0 %v6338
    %6413 = vmatprep.subr.bf16.mxu0 0
    %6414 = vmatpush1.bf16.msra.mxu0 %v6339
    %6415 = vmatprep.subr.bf16.mxu0 0
    %6416 = vmatpush1.bf16.msra.mxu0 %v6340
    %6417 = vmatprep.subr.bf16.mxu0 0
    %6418 = vmatpush1.bf16.msra.mxu0 %v6341
    %6419 = vmatprep.subr.bf16.mxu0 0
    %6420 = vmatpush1.bf16.msra.mxu0 %v6342
    %6421 = vmatprep.subr.bf16.mxu0 0
    %6422 = vmatpush1.bf16.msra.mxu0 %v6343
    %6423 = vmatprep.subr.bf16.mxu0 0
    %6424 = vmatpush1.bf16.msra.mxu0 %v6344
    %6425 = vmatprep.mubr.bf16.mxu0 %v6127
    %6426 = vmatmul.mubr.bf16.gmra.mrb[0].mxu0 %v6126
    %v6427 = vpop.f32.mrb[0].mxu0
    %v6428 = vadd.f32 %v6199, %v6427
    %v6429 = vpop.f32.mrb[0].mxu0
    %v6430 = vpop.f32.mrb[0].mxu0
    %v6431 = vpop.f32.mrb[0].mxu0
    %6432 = vdwg.mxu0
    %6433 = vmatprep.subr.bf16.mxu0 0
    %6434 = vmatpush1.bf16.msra.mxu0 %v6345
    %6435 = vmatprep.subr.bf16.mxu0 0
    %6436 = vmatpush1.bf16.msra.mxu0 %v6346
    %6437 = vmatprep.subr.bf16.mxu0 0
    %6438 = vmatpush1.bf16.msra.mxu0 %v6347
    %6439 = vmatprep.subr.bf16.mxu0 0
    %6440 = vmatpush1.bf16.msra.mxu0 %v6348
    %6441 = vmatprep.subr.bf16.mxu0 0
    %6442 = vmatpush1.bf16.msra.mxu0 %v6349
    %6443 = vmatprep.subr.bf16.mxu0 0
    %6444 = vmatpush1.bf16.msra.mxu0 %v6350
    %6445 = vmatprep.subr.bf16.mxu0 0
    %6446 = vmatpush1.bf16.msra.mxu0 %v6351
    %6447 = vmatprep.subr.bf16.mxu0 0
    %6448 = vmatpush1.bf16.msra.mxu0 %v6352
    %6449 = vmatprep.subr.bf16.mxu0 0
    %6450 = vmatpush1.bf16.msra.mxu0 %v6353
    %6451 = vmatprep.subr.bf16.mxu0 0
    %6452 = vmatpush1.bf16.msra.mxu0 %v6354
    %6453 = vmatprep.subr.bf16.mxu0 0
    %6454 = vmatpush1.bf16.msra.mxu0 %v6355
    %6455 = vmatprep.subr.bf16.mxu0 0
    %6456 = vmatpush1.bf16.msra.mxu0 %v6356
    %6457 = vmatprep.subr.bf16.mxu0 0
    %6458 = vmatpush1.bf16.msra.mxu0 %v6357
    %6459 = vmatprep.subr.bf16.mxu0 0
    %6460 = vmatpush1.bf16.msra.mxu0 %v6358
    %6461 = vmatprep.subr.bf16.mxu0 0
    %6462 = vmatpush1.bf16.msra.mxu0 %v6359
    %6463 = vmatprep.subr.bf16.mxu0 0
    %6464 = vmatpush1.bf16.msra.mxu0 %v6360
    %6465 = vmatprep.mubr.bf16.mxu0 %v6129
    %6466 = vmatmul.mubr.bf16.gmra.mrb[0].mxu0 %v6128
    %v6467 = vpop.f32.mrb[0].mxu0
    %v6468 = vadd.f32 %v6428, %v6467
    %v6469 = vpop.f32.mrb[0].mxu0
    %v6470 = vpop.f32.mrb[0].mxu0
    %v6471 = vpop.f32.mrb[0].mxu0
    %6472 = vdwg.mxu0
    %s6473 = sld [smem:[#allocation25 + $0x4]]
    %vm6474 = vcmp.ge.f32.partialorder %v6468, 0.0
    %v6475 = vstv %s6473
    %v6476 = vmul.f32 %v6475, %v6468
    %v6477 = vsel %vm6474, %v6468, %v6476
    %v6478 = vpack.c.bf16 %v6477, %v6477
    %v6479 = vld [vmem:[#allocation19] sm:$0xf]
    %v6480 = vld [vmem:[#allocation19 + $0x4] sm:$0xf]
    %v6481 = vld [vmem:[#allocation19 + $0x8] sm:$0xf]
    %v6482 = vld [vmem:[#allocation19 + $0xc] sm:$0xf]
    %v6483 = vld [vmem:[#allocation19 + $0x10] sm:$0xf]
    %v6484 = vld [vmem:[#allocation19 + $0x14] sm:$0xf]
    %v6485 = vld [vmem:[#allocation19 + $0x18] sm:$0xf]
    %v6486 = vld [vmem:[#allocation19 + $0x1c] sm:$0xf]
    %v6487 = vld [vmem:[#allocation19 + $0x20] sm:$0xf]
    %v6488 = vld [vmem:[#allocation19 + $0x24] sm:$0xf]
    %v6489 = vld [vmem:[#allocation19 + $0x28] sm:$0xf]
    %v6490 = vld [vmem:[#allocation19 + $0x2c] sm:$0xf]
    %v6491 = vld [vmem:[#allocation19 + $0x30] sm:$0xf]
    %v6492 = vld [vmem:[#allocation19 + $0x34] sm:$0xf]
    %v6493 = vld [vmem:[#allocation19 + $0x38] sm:$0xf]
    %v6494 = vld [vmem:[#allocation19 + $0x3c] sm:$0xf]
    %v6495 = vld [vmem:[#allocation20] sm:$0x1]
    %v6497 = vlaneseq
    %v6498 = vshrl.u32 %v6497, 7
    %v6499 = vsub.s32 0, %v6498
    %v6500 = vrot.slane %v6495, %v6499
    %v6518 = vunpack.c.l.b16 %v6479
    %v6519 = vunpack.c.l.b16 %v6480
    %v6520 = vunpack.c.l.b16 %v6481
    %v6521 = vunpack.c.l.b16 %v6482
    %v6522 = vunpack.c.l.b16 %v6483
    %v6523 = vunpack.c.l.b16 %v6484
    %v6524 = vunpack.c.l.b16 %v6485
    %v6525 = vunpack.c.l.b16 %v6486
    %v6526 = vunpack.c.l.b16 %v6487
    %v6527 = vunpack.c.l.b16 %v6488
    %v6528 = vunpack.c.l.b16 %v6489
    %v6529 = vunpack.c.l.b16 %v6490
    %v6530 = vunpack.c.l.b16 %v6491
    %v6531 = vunpack.c.l.b16 %v6492
    %v6532 = vunpack.c.l.b16 %v6493
    %v6533 = vunpack.c.l.b16 %v6494
    %v6534 = vpack.c.b16 %v6519, %v6518
    %v6535 = vpack.c.b16 %v6521, %v6520
    %v6536 = vpack.c.b16 %v6523, %v6522
    %v6537 = vpack.c.b16 %v6525, %v6524
    %v6538 = vpack.c.b16 %v6527, %v6526
    %v6539 = vpack.c.b16 %v6529, %v6528
    %v6540 = vpack.c.b16 %v6531, %v6530
    %v6541 = vpack.c.b16 %v6533, %v6532
    %6550 = vmatprep.subr.bf16.mxu0 0
    %6551 = vmatpush1.bf16.msra.mxu0 %v6534
    %6552 = vmatprep.subr.bf16.mxu0 0
    %6553 = vmatpush1.bf16.msra.mxu0 %v6535
    %6554 = vmatprep.subr.bf16.mxu0 0
    %6555 = vmatpush1.bf16.msra.mxu0 %v6536
    %6556 = vmatprep.subr.bf16.mxu0 0
    %6557 = vmatpush1.bf16.msra.mxu0 %v6537
    %6558 = vmatprep.subr.bf16.mxu0 0
    %6559 = vmatpush1.bf16.msra.mxu0 %v6538
    %6560 = vmatprep.subr.bf16.mxu0 0
    %6561 = vmatpush1.bf16.msra.mxu0 %v6539
    %6562 = vmatprep.subr.bf16.mxu0 0
    %6563 = vmatpush1.bf16.msra.mxu0 %v6540
    %6564 = vmatprep.subr.bf16.mxu0 0
    %6565 = vmatpush1.bf16.msra.mxu0 %v6541
    %6566 = vmatprep.subr.bf16.mxu0 0
    %6567 = vmatpush1.bf16.msra.mxu0 0
    %6568 = vmatprep.subr.bf16.mxu0 0
    %6569 = vmatpush1.bf16.msra.mxu0 0
    %6570 = vmatprep.subr.bf16.mxu0 0
    %6571 = vmatpush1.bf16.msra.mxu0 0
    %6572 = vmatprep.subr.bf16.mxu0 0
    %6573 = vmatpush1.bf16.msra.mxu0 0
    %6574 = vmatprep.subr.bf16.mxu0 0
    %6575 = vmatpush1.bf16.msra.mxu0 0
    %6576 = vmatprep.subr.bf16.mxu0 0
    %6577 = vmatpush1.bf16.msra.mxu0 0
    %6578 = vmatprep.subr.bf16.mxu0 0
    %6579 = vmatpush1.bf16.msra.mxu0 0
    %6580 = vmatprep.subr.bf16.mxu0 0
    %6581 = vmatpush1.bf16.msra.mxu0 0
    %6582 = vmatprep.mubr.bf16.mxu0 0
    %6583 = vmatmul.mubr.bf16.gmra.mrb[0].mxu0 %v6478
    %v6584 = vpop.f32.mrb[0].mxu0
    %v6585 = vadd.f32 %v6500, %v6584
    %v6586 = vpop.f32.mrb[0].mxu0
    %v6587 = vpop.f32.mrb[0].mxu0
    %v6588 = vpop.f32.mrb[0].mxu0
    %6589 = vdwg.mxu0
    %s6590 = sld [smem:[#allocation25 + $0x5]]
    %vm6591 = vcmp.ge.f32.partialorder %v6585, 0.0
    %v6592 = vstv %s6590
    %v6593 = vmul.f32 %v6592, %v6585
    %v6594 = vsel %vm6591, %v6585, %v6593
    %v6595 = vpack.c.bf16 %v6594, %v6594
    %v6596 = vld [vmem:[#allocation22] sm:$0xf]
    %v6597 = vld [vmem:[#allocation22 + $0x4] sm:$0xf]
    %v6598 = vld [vmem:[#allocation22 + $0x8] sm:$0xf]
    %v6599 = vld [vmem:[#allocation22 + $0xc] sm:$0xf]
    %v6600 = vld [vmem:[#allocation22 + $0x10] sm:$0xf]
    %v6601 = vld [vmem:[#allocation22 + $0x14] sm:$0xf]
    %v6602 = vld [vmem:[#allocation22 + $0x18] sm:$0xf]
    %v6603 = vld [vmem:[#allocation22 + $0x1c] sm:$0xf]
    %v6604 = vld [vmem:[#allocation22 + $0x20] sm:$0xf]
    %v6605 = vld [vmem:[#allocation22 + $0x24] sm:$0xf]
    %v6606 = vld [vmem:[#allocation22 + $0x28] sm:$0xf]
    %v6607 = vld [vmem:[#allocation22 + $0x2c] sm:$0xf]
    %v6608 = vld [vmem:[#allocation22 + $0x30] sm:$0xf]
    %v6609 = vld [vmem:[#allocation22 + $0x34] sm:$0xf]
    %v6610 = vld [vmem:[#allocation22 + $0x38] sm:$0xf]
    %v6611 = vld [vmem:[#allocation22 + $0x3c] sm:$0xf]
    %v6612 = vld [vmem:[#allocation23] sm:$0x1]
    %v6614 = vlaneseq
    %v6615 = vshrl.u32 %v6614, 7
    %v6616 = vsub.s32 0, %v6615
    %v6617 = vrot.slane %v6612, %v6616
    %v6635 = vunpack.c.l.b16 %v6596
    %v6636 = vunpack.c.l.b16 %v6597
    %v6637 = vunpack.c.l.b16 %v6598
    %v6638 = vunpack.c.l.b16 %v6599
    %v6639 = vunpack.c.l.b16 %v6600
    %v6640 = vunpack.c.l.b16 %v6601
    %v6641 = vunpack.c.l.b16 %v6602
    %v6642 = vunpack.c.l.b16 %v6603
    %v6643 = vunpack.c.l.b16 %v6604
    %v6644 = vunpack.c.l.b16 %v6605
    %v6645 = vunpack.c.l.b16 %v6606
    %v6646 = vunpack.c.l.b16 %v6607
    %v6647 = vunpack.c.l.b16 %v6608
    %v6648 = vunpack.c.l.b16 %v6609
    %v6649 = vunpack.c.l.b16 %v6610
    %v6650 = vunpack.c.l.b16 %v6611
    %v6651 = vpack.c.b16 %v6636, %v6635
    %v6652 = vpack.c.b16 %v6638, %v6637
    %v6653 = vpack.c.b16 %v6640, %v6639
    %v6654 = vpack.c.b16 %v6642, %v6641
    %v6655 = vpack.c.b16 %v6644, %v6643
    %v6656 = vpack.c.b16 %v6646, %v6645
    %v6657 = vpack.c.b16 %v6648, %v6647
    %v6658 = vpack.c.b16 %v6650, %v6649
    %6667 = vmatprep.subr.bf16.mxu0 0
    %6668 = vmatpush1.bf16.msra.mxu0 %v6651
    %6669 = vmatprep.subr.bf16.mxu0 0
    %6670 = vmatpush1.bf16.msra.mxu0 %v6652
    %6671 = vmatprep.subr.bf16.mxu0 0
    %6672 = vmatpush1.bf16.msra.mxu0 %v6653
    %6673 = vmatprep.subr.bf16.mxu0 0
    %6674 = vmatpush1.bf16.msra.mxu0 %v6654
    %6675 = vmatprep.subr.bf16.mxu0 0
    %6676 = vmatpush1.bf16.msra.mxu0 %v6655
    %6677 = vmatprep.subr.bf16.mxu0 0
    %6678 = vmatpush1.bf16.msra.mxu0 %v6656
    %6679 = vmatprep.subr.bf16.mxu0 0
    %6680 = vmatpush1.bf16.msra.mxu0 %v6657
    %6681 = vmatprep.subr.bf16.mxu0 0
    %6682 = vmatpush1.bf16.msra.mxu0 %v6658
    %6683 = vmatprep.subr.bf16.mxu0 0
    %6684 = vmatpush1.bf16.msra.mxu0 0
    %6685 = vmatprep.subr.bf16.mxu0 0
    %6686 = vmatpush1.bf16.msra.mxu0 0
    %6687 = vmatprep.subr.bf16.mxu0 0
    %6688 = vmatpush1.bf16.msra.mxu0 0
    %6689 = vmatprep.subr.bf16.mxu0 0
    %6690 = vmatpush1.bf16.msra.mxu0 0
    %6691 = vmatprep.subr.bf16.mxu0 0
    %6692 = vmatpush1.bf16.msra.mxu0 0
    %6693 = vmatprep.subr.bf16.mxu0 0
    %6694 = vmatpush1.bf16.msra.mxu0 0
    %6695 = vmatprep.subr.bf16.mxu0 0
    %6696 = vmatpush1.bf16.msra.mxu0 0
    %6697 = vmatprep.subr.bf16.mxu0 0
    %6698 = vmatpush1.bf16.msra.mxu0 0
    %6699 = vmatprep.mubr.bf16.mxu0 0
    %6700 = vmatmul.mubr.bf16.gmra.mrb[0].mxu0 %v6595
    %v6701 = vpop.f32.mrb[0].mxu0
    %v6702 = vadd.f32 %v6617, %v6701
    %v6703 = vpop.f32.mrb[0].mxu0
    %v6704 = vpop.f32.mrb[0].mxu0
    %v6705 = vpop.f32.mrb[0].mxu0
    %6706 = vdwg.mxu0
    %6707 = vst [vmem:[%s16] sm:$0xff] %v6702
    // Predicated region
    $region126: #{mlp_forward.1} parent=1 // pred_check
      _
    $region127: #{mlp_forward.1} parent=1 // pred_check_branch
      %6709 = sbr.rel (0) target = $region129
    $region128: #{mlp_forward.1} parent=1 // pred_region
      _
    $region129: #{mlp_forward.1} parent=1 // pred_fallthru
      _
    // Predicated region
    $region130: #{mlp_forward.1} parent=1 // pred_check
      _
    $region131: #{mlp_forward.1} parent=1 // pred_check_branch
      %6711 = sbr.rel (0) target = $region133
    $region132: #{mlp_forward.1} parent=1 // pred_region
      _
    $region133: #{mlp_forward.1} parent=1 // pred_fallthru
      _
    %6712 = vsyncpa [#allocation3], 1
    %6713 = vsyncpa [#allocation6], 1
    %6714 = vsyncpa [#allocation9], 1
    %6715 = vsyncpa [#allocation12], 1
    %6716 = vsyncpa [#allocation15], 1
    %6717 = vsyncpa [#allocation18], 1
    %6718 = vsyncpa [#allocation21], 1
    %6719 = vsyncpa [#allocation24], 1
    %6720 = vsyncpa [#allocation4], 1

</llo_original>
